<compile_context>
chip_gen: v5e
topology: v5e:2x2
jax: 0.10.0
libtpu: 0.0.40
codegen_flags: <defaults>
</compile_context>

<pallas_src>
import functools

import jax
import jax.numpy as jnp
from jax import lax
from jax.experimental import pallas as pl
from jax.experimental.pallas import tpu as pltpu


# ------------------------------- Pallas kernel --------------------------------

def seq2seq_kernel(x_src_ref, emb0_ref, dec_emb_ref,
                   enc_wih_ref, enc_whh_ref, enc_bih_ref, enc_bhh_ref,
                   dec_wih_e_ref, dec_wih_c_ref, dec_whh_ref,
                   dec_bih_ref, dec_bhh_ref,
                   wout_e_ref, wout_h_ref, wout_c_ref, bout_ref,
                   out_ref, *, hid_dim, v_logical):
    """Fused GRU encoder -> GRU decoder with greedy argmax feedback.

    x_src_ref  : (src_len, B, E) precomputed encoder input embeddings.
    emb0_ref   : (B, E) precomputed embedding of trg[0].
    dec_emb_ref: (V_trg, E) decoder embedding table (fed-back token lookup).
    *_wih/_whh : (D, 3H) fused-gate GRU weights, gate order (r, z, n).
    wout_*     : output projection over [emb; hidden; context]; vocab dim is
                 padded to a 128-lane multiple (V_pad), pad columns are zero.
    out_ref    : (trg_len, B, V_pad) logits; row 0 is written as zeros.
    """
    h_dim = hid_dim
    src_len = x_src_ref.shape[0]
    trg_len = out_ref.shape[0]
    b = emb0_ref.shape[0]
    v_pad = out_ref.shape[2]
    v_trg = dec_emb_ref.shape[0]

    def gru(gi, h, whh, bhh):
        # gi: input-side gate pre-activations incl. input bias, shape (B, 3H).
        gh = jnp.dot(h, whh, preferred_element_type=jnp.float32) + bhh
        r = jax.nn.sigmoid(gi[:, 0:h_dim] + gh[:, 0:h_dim])
        z = jax.nn.sigmoid(gi[:, h_dim:2 * h_dim] + gh[:, h_dim:2 * h_dim])
        n = jnp.tanh(gi[:, 2 * h_dim:3 * h_dim] + r * gh[:, 2 * h_dim:3 * h_dim])
        return (1.0 - z) * n + z * h

    # ----------------------- encoder: context = GRU(src) ----------------------
    enc_wih = enc_wih_ref[...]
    enc_whh = enc_whh_ref[...]
    enc_bih = enc_bih_ref[...]
    enc_bhh = enc_bhh_ref[...]

    def enc_step(t, h):
        gi = jnp.dot(x_src_ref[t], enc_wih,
                     preferred_element_type=jnp.float32) + enc_bih
        return gru(gi, h, enc_whh, enc_bhh)

    ctx = lax.fori_loop(0, src_len, enc_step,
                        jnp.zeros((b, h_dim), jnp.float32), unroll=True)

    # ---------------------- decoder: greedy argmax loop -----------------------
    dec_wih_e = dec_wih_e_ref[...]
    dec_whh = dec_whh_ref[...]
    dec_bhh = dec_bhh_ref[...]
    wout_e = wout_e_ref[...]
    wout_h = wout_h_ref[...]
    dec_emb = dec_emb_ref[...]

    # Context-dependent terms are loop-invariant: compute them once.
    ctx_gi = (jnp.dot(ctx, dec_wih_c_ref[...],
                      preferred_element_type=jnp.float32) + dec_bih_ref[...])
    ctx_out = (jnp.dot(ctx, wout_c_ref[...],
                       preferred_element_type=jnp.float32) + bout_ref[...])

    lane = lax.broadcasted_iota(jnp.int32, (b, v_pad), 1)
    valid = lane < v_logical
    dec_iota = lax.broadcasted_iota(jnp.int32, (b, v_trg), 1)

    out_ref[0] = jnp.zeros((b, v_pad), jnp.float32)    # outputs[0] stays zero

    def dec_step(t, carry):
        h, emb = carry
        gi = jnp.dot(emb, dec_wih_e, preferred_element_type=jnp.float32) + ctx_gi
        h_new = gru(gi, h, dec_whh, dec_bhh)
        logits = (jnp.dot(emb, wout_e, preferred_element_type=jnp.float32)
                  + jnp.dot(h_new, wout_h, preferred_element_type=jnp.float32)
                  + ctx_out)                                   # (B, V_pad)
        out_ref[t] = logits
        # Greedy feedback: first max index over the real vocab, integer domain.
        masked = jnp.where(valid, logits, -jnp.inf)
        m = jnp.max(masked, axis=-1, keepdims=True)
        nxt = jnp.min(jnp.where(masked == m, lane, v_pad),
                      axis=-1, keepdims=True)                  # (B, 1) int32
        # Embedding lookup of the fed-back token as a tiny one-hot matmul.
        # TODO(synk): for large V_trg use an SMEM token + dynamic row gather.
        onehot = (dec_iota == nxt).astype(jnp.float32)         # (B, V_trg)
        emb_new = jnp.dot(onehot, dec_emb, preferred_element_type=jnp.float32)
        return h_new, emb_new

    lax.fori_loop(1, trg_len, dec_step, (ctx, emb0_ref[...]), unroll=True)


# ------------------------------ Pallas wrapper ---------------------------------

def run_seq2seq(x_src, emb0, dec_emb,
                enc_wih, enc_whh, enc_bih, enc_bhh,
                dec_wih_e, dec_wih_c, dec_whh, dec_bih, dec_bhh,
                wout_e, wout_h, wout_c, bout, *, trg_len, v_logical, hid_dim):
    b = emb0.shape[0]
    v_pad = wout_e.shape[1]
    operands = (x_src, emb0, dec_emb,
                enc_wih, enc_whh, enc_bih, enc_bhh,
                dec_wih_e, dec_wih_c, dec_whh, dec_bih, dec_bhh,
                wout_e, wout_h, wout_c, bout)
    in_bytes = sum(int(a.size) * a.dtype.itemsize for a in operands)
    out_bytes = trg_len * b * v_pad * 4
    vmem_limit = int(min(100 * 1024 * 1024,
                         max(16 * 1024 * 1024, 2 * (in_bytes + out_bytes))))
    kernel = functools.partial(seq2seq_kernel, hid_dim=hid_dim,
                               v_logical=v_logical)
    # Single invocation (no grid): whole arrays land in VMEM, weights/context
    # are DMA'd once and the full logits block is written back to HBM once.
    return pl.pallas_call(
        kernel,
        out_shape=jax.ShapeDtypeStruct((trg_len, b, v_pad), jnp.float32),
        compiler_params=pltpu.CompilerParams(vmem_limit_bytes=vmem_limit),
    )(*operands)


# ------------------------------ params & forward -------------------------------

def init_params(key, src_vocab, trg_vocab, emb_dim, hid_dim):
    ks = jax.random.split(key, 16)
    s = 0.1

    def rnd(i, shape):
        return s * jax.random.normal(ks[i], shape, jnp.float32)

    return {
        # encoder: single-layer GRU over source embeddings, h0 = 0.
        "enc_embed": rnd(0, (src_vocab, emb_dim)),
        "enc_wih":   rnd(1, (emb_dim, 3 * hid_dim)),
        "enc_whh":   rnd(2, (hid_dim, 3 * hid_dim)),
        "enc_bih":   rnd(3, (1, 3 * hid_dim)),
        "enc_bhh":   rnd(4, (1, 3 * hid_dim)),
        # decoder GRU input is concat(emb, context) -> split input weights.
        "dec_embed": rnd(5, (trg_vocab, emb_dim)),
        "dec_wih_e": rnd(6, (emb_dim, 3 * hid_dim)),
        "dec_wih_c": rnd(7, (hid_dim, 3 * hid_dim)),
        "dec_whh":   rnd(8, (hid_dim, 3 * hid_dim)),
        "dec_bih":   rnd(9, (1, 3 * hid_dim)),
        "dec_bhh":   rnd(10, (1, 3 * hid_dim)),
        # output projection over concat(emb, hidden, context) -> split weights.
        "out_w_e":   rnd(11, (emb_dim, trg_vocab)),
        "out_w_h":   rnd(12, (hid_dim, trg_vocab)),
        "out_w_c":   rnd(13, (hid_dim, trg_vocab)),
        "out_b":     rnd(14, (1, trg_vocab)),
    }


def _pad_last(w, n):
    return jnp.pad(w, ((0, 0), (0, n - w.shape[1])))


def naive_model_forward(params, src, trg):
    """Mirrors NaiveModel.forward for opt.nmt_model_type == 'rnn_naive_model'.

    src: (src_len, batch) int32, trg: (trg_len, batch) int32.
    Returns (trg_len, batch, trg_vocab) float32; outputs[0] is zeros and the
    decoder is always fed its own greedy argmax (as in the reference forward).
    """
    src_len, batch = src.shape
    trg_len = trg.shape[0]
    trg_vocab = params["out_w_e"].shape[1]
    hid_dim = params["enc_whh"].shape[0]

    b_pad = ((batch + 7) // 8) * 8              # full sublane groups
    v_pad = ((trg_vocab + 127) // 128) * 128    # lane-dense logits

    # Tokens are known ahead of time -> embed them outside the kernel.
    src_p = jnp.pad(src.astype(jnp.int32), ((0, 0), (0, b_pad - batch)))
    trg0_p = jnp.pad(trg[0].astype(jnp.int32), ((0, b_pad - batch),))
    x_src = jnp.take(params["enc_embed"], src_p, axis=0)      # (src_len, B, E)
    emb0 = jnp.take(params["dec_embed"], trg0_p, axis=0)      # (B, E)

    logits = run_seq2seq(
        x_src, emb0, params["dec_embed"],
        params["enc_wih"], params["enc_whh"], params["enc_bih"], params["enc_bhh"],
        params["dec_wih_e"], params["dec_wih_c"], params["dec_whh"],
        params["dec_bih"], params["dec_bhh"],
        _pad_last(params["out_w_e"], v_pad), _pad_last(params["out_w_h"], v_pad),
        _pad_last(params["out_w_c"], v_pad), _pad_last(params["out_b"], v_pad),
        trg_len=trg_len, v_logical=trg_vocab, hid_dim=hid_dim)

    # One slice strips the batch/vocab padding (no concatenate needed).
    return logits[:, :batch, :trg_vocab]


# ------------------------------ pure-JAX reference -----------------------------

def naive_model_forward_ref(params, src, trg):
    """Pure-JAX reference with identical semantics (no Pallas)."""
    src_len, batch = src.shape
    trg_len = trg.shape[0]
    h_dim = params["enc_whh"].shape[0]
    v = params["out_w_e"].shape[1]

    def gru(gi, h, whh, bhh):
        gh = h @ whh + bhh
        r = jax.nn.sigmoid(gi[:, :h_dim] + gh[:, :h_dim])
        z = jax.nn.sigmoid(gi[:, h_dim:2 * h_dim] + gh[:, h_dim:2 * h_dim])
        n = jnp.tanh(gi[:, 2 * h_dim:] + r * gh[:, 2 * h_dim:])
        return (1.0 - z) * n + z * h

    x_src = params["enc_embed"][src]
    h = jnp.zeros((batch, h_dim), jnp.float32)
    for t in range(src_len):
        h = gru(x_src[t] @ params["enc_wih"] + params["enc_bih"],
                h, params["enc_whh"], params["enc_bhh"])
    ctx = h

    outs = [jnp.zeros((batch, v), jnp.float32)]
    tok = trg[0]
    hid = ctx
    for _ in range(1, trg_len):
        emb = params["dec_embed"][tok]
        gi = (emb @ params["dec_wih_e"] + ctx @ params["dec_wih_c"]
              + params["dec_bih"])
        hid = gru(gi, hid, params["dec_whh"], params["dec_bhh"])
        logits = (emb @ params["out_w_e"] + hid @ params["out_w_h"]
                  + ctx @ params["out_w_c"] + params["out_b"])
        outs.append(logits)
        tok = jnp.argmax(logits, axis=-1)
    return jnp.stack(outs, axis=0)


# ----------------------------------- main --------------------------------------

if __name__ == "__main__":
    SRC_VOCAB = 32
    TRG_VOCAB = 32
    EMB = 16
    HID = 32
    SRC_LEN = 10
    TRG_LEN = 8
    BATCH = 2

    key = jax.random.PRNGKey(0)
    k_params, k_src, k_trg = jax.random.split(key, 3)

    params = init_params(k_params, SRC_VOCAB, TRG_VOCAB, EMB, HID)
    src = jax.random.randint(k_src, (SRC_LEN, BATCH), 0, SRC_VOCAB, dtype=jnp.int32)
    trg = jax.random.randint(k_trg, (TRG_LEN, BATCH), 0, TRG_VOCAB, dtype=jnp.int32)

    fwd = jax.jit(naive_model_forward)
    outputs = fwd(params, src, trg)
    jax.block_until_ready(outputs)

    assert outputs.shape == (TRG_LEN, BATCH, TRG_VOCAB)
    assert bool(jnp.all(outputs[0] == 0.0))
    assert bool(jnp.all(jnp.isfinite(outputs)))

    # Step-1 logits are independent of any in-kernel greedy feedback, so they
    # must match the pure-JAX reference to matmul tolerance.
    ref = naive_model_forward_ref(params, src, trg)
    assert bool(jnp.allclose(outputs[1], ref[1], rtol=1e-3, atol=1e-3))

    # TODO(synk): teacher_forcing_ratio uses Python `random` at train time; the
    # reference forward as written always feeds back argmax, which we mirror.
    print("KERNEL_OK")
</pallas_src>

<mosaic_0001>
module attributes {stable_mosaic.version = 11 : i64} {
  func.func @seq2seq_kernel(%arg0: memref<10x8x16xf32, #tpu.memory_space<vmem>>, %arg1: memref<8x16xf32, #tpu.memory_space<vmem>>, %arg2: memref<32x16xf32, #tpu.memory_space<vmem>>, %arg3: memref<16x96xf32, #tpu.memory_space<vmem>>, %arg4: memref<32x96xf32, #tpu.memory_space<vmem>>, %arg5: memref<1x96xf32, #tpu.memory_space<vmem>>, %arg6: memref<1x96xf32, #tpu.memory_space<vmem>>, %arg7: memref<16x96xf32, #tpu.memory_space<vmem>>, %arg8: memref<32x96xf32, #tpu.memory_space<vmem>>, %arg9: memref<32x96xf32, #tpu.memory_space<vmem>>, %arg10: memref<1x96xf32, #tpu.memory_space<vmem>>, %arg11: memref<1x96xf32, #tpu.memory_space<vmem>>, %arg12: memref<16x128xf32, #tpu.memory_space<vmem>>, %arg13: memref<32x128xf32, #tpu.memory_space<vmem>>, %arg14: memref<32x128xf32, #tpu.memory_space<vmem>>, %arg15: memref<1x128xf32, #tpu.memory_space<vmem>>, %arg16: memref<8x8x128xf32, #tpu.memory_space<vmem>>) attributes {dimension_semantics = [], scalar_prefetch = 0 : i64, scratch_operands = 0 : i64, tpu.core_type = #tpu.core_type<tc>} {
    %c0 = arith.constant 0 : index
    %c0_0 = arith.constant 0 : index
    %0 = vector.load %arg3[%c0, %c0_0] : memref<16x96xf32, #tpu.memory_space<vmem>>, vector<16x96xf32>
    %c0_1 = arith.constant 0 : index
    %c0_2 = arith.constant 0 : index
    %1 = vector.load %arg4[%c0_1, %c0_2] : memref<32x96xf32, #tpu.memory_space<vmem>>, vector<32x96xf32>
    %c0_3 = arith.constant 0 : index
    %c0_4 = arith.constant 0 : index
    %2 = vector.load %arg5[%c0_3, %c0_4] : memref<1x96xf32, #tpu.memory_space<vmem>>, vector<1x96xf32>
    %c0_5 = arith.constant 0 : index
    %c0_6 = arith.constant 0 : index
    %3 = vector.load %arg6[%c0_5, %c0_6] : memref<1x96xf32, #tpu.memory_space<vmem>>, vector<1x96xf32>
    %cst = arith.constant 0.000000e+00 : f32
    %4 = vector.broadcast %cst : f32 to vector<8x32xf32>
    %c0_i32 = arith.constant 0 : i32
    %5 = arith.index_cast %c0_i32 : i32 to index
    %c0_7 = arith.constant 0 : index
    %c0_8 = arith.constant 0 : index
    %6 = vector.load %arg0[%5, %c0_7, %c0_8] : memref<10x8x16xf32, #tpu.memory_space<vmem>>, vector<1x8x16xf32>
    %7 = vector.shape_cast %6 : vector<1x8x16xf32> to vector<8x16xf32>
    %cst_9 = arith.constant dense<0.000000e+00> : vector<8x96xf32>
    %8 = tpu.matmul %7, %0, %cst_9 {dimension_numbers = #tpu.dot_dimension_numbers<[1], [0], [0], [1], [0, 0, 1, 1], [], []>} : vector<8x16xf32>, vector<16x96xf32>, vector<8x96xf32> -> vector<8x96xf32>
    %9 = vector.broadcast %2 : vector<1x96xf32> to vector<8x96xf32>
    %10 = arith.addf %8, %9 : vector<8x96xf32>
    %cst_10 = arith.constant dense<0.000000e+00> : vector<8x96xf32>
    %11 = tpu.matmul %4, %1, %cst_10 {dimension_numbers = #tpu.dot_dimension_numbers<[1], [0], [0], [1], [0, 0, 1, 1], [], []>} : vector<8x32xf32>, vector<32x96xf32>, vector<8x96xf32> -> vector<8x96xf32>
    %12 = vector.broadcast %3 : vector<1x96xf32> to vector<8x96xf32>
    %13 = arith.addf %11, %12 : vector<8x96xf32>
    %14 = vector.extract_strided_slice %10 {offsets = [0, 0], sizes = [8, 32], strides = [1, 1]} : vector<8x96xf32> to vector<8x32xf32>
    %15 = vector.extract_strided_slice %13 {offsets = [0, 0], sizes = [8, 32], strides = [1, 1]} : vector<8x96xf32> to vector<8x32xf32>
    %16 = arith.addf %14, %15 : vector<8x32xf32>
    %17 = arith.negf %16 : vector<8x32xf32>
    %18 = math.exp %17 : vector<8x32xf32>
    %cst_11 = arith.constant 1.000000e+00 : f32
    %19 = vector.broadcast %cst_11 : f32 to vector<8x32xf32>
    %20 = arith.addf %19, %18 : vector<8x32xf32>
    %21 = arith.divf %19, %20 : vector<8x32xf32>
    %22 = vector.extract_strided_slice %10 {offsets = [0, 32], sizes = [8, 32], strides = [1, 1]} : vector<8x96xf32> to vector<8x32xf32>
    %23 = vector.extract_strided_slice %13 {offsets = [0, 32], sizes = [8, 32], strides = [1, 1]} : vector<8x96xf32> to vector<8x32xf32>
    %24 = arith.addf %22, %23 : vector<8x32xf32>
    %25 = arith.negf %24 : vector<8x32xf32>
    %26 = math.exp %25 : vector<8x32xf32>
    %cst_12 = arith.constant 1.000000e+00 : f32
    %27 = vector.broadcast %cst_12 : f32 to vector<8x32xf32>
    %28 = arith.addf %27, %26 : vector<8x32xf32>
    %29 = arith.divf %27, %28 : vector<8x32xf32>
    %30 = vector.extract_strided_slice %10 {offsets = [0, 64], sizes = [8, 32], strides = [1, 1]} : vector<8x96xf32> to vector<8x32xf32>
    %31 = vector.extract_strided_slice %13 {offsets = [0, 64], sizes = [8, 32], strides = [1, 1]} : vector<8x96xf32> to vector<8x32xf32>
    %32 = arith.mulf %21, %31 : vector<8x32xf32>
    %33 = arith.addf %30, %32 : vector<8x32xf32>
    %34 = math.tanh %33 : vector<8x32xf32>
    %cst_13 = arith.constant 1.000000e+00 : f32
    %35 = vector.broadcast %cst_13 : f32 to vector<8x32xf32>
    %36 = arith.subf %35, %29 : vector<8x32xf32>
    %37 = arith.mulf %36, %34 : vector<8x32xf32>
    %38 = arith.mulf %29, %4 : vector<8x32xf32>
    %39 = arith.addf %37, %38 : vector<8x32xf32>
    %c1_i32 = arith.constant 1 : i32
    %40 = arith.index_cast %c1_i32 : i32 to index
    %c0_14 = arith.constant 0 : index
    %c0_15 = arith.constant 0 : index
    %41 = vector.load %arg0[%40, %c0_14, %c0_15] : memref<10x8x16xf32, #tpu.memory_space<vmem>>, vector<1x8x16xf32>
    %42 = vector.shape_cast %41 : vector<1x8x16xf32> to vector<8x16xf32>
    %cst_16 = arith.constant dense<0.000000e+00> : vector<8x96xf32>
    %43 = tpu.matmul %42, %0, %cst_16 {dimension_numbers = #tpu.dot_dimension_numbers<[1], [0], [0], [1], [0, 0, 1, 1], [], []>} : vector<8x16xf32>, vector<16x96xf32>, vector<8x96xf32> -> vector<8x96xf32>
    %44 = vector.broadcast %2 : vector<1x96xf32> to vector<8x96xf32>
    %45 = arith.addf %43, %44 : vector<8x96xf32>
    %cst_17 = arith.constant dense<0.000000e+00> : vector<8x96xf32>
    %46 = tpu.matmul %39, %1, %cst_17 {dimension_numbers = #tpu.dot_dimension_numbers<[1], [0], [0], [1], [0, 0, 1, 1], [], []>} : vector<8x32xf32>, vector<32x96xf32>, vector<8x96xf32> -> vector<8x96xf32>
    %47 = vector.broadcast %3 : vector<1x96xf32> to vector<8x96xf32>
    %48 = arith.addf %46, %47 : vector<8x96xf32>
    %49 = vector.extract_strided_slice %45 {offsets = [0, 0], sizes = [8, 32], strides = [1, 1]} : vector<8x96xf32> to vector<8x32xf32>
    %50 = vector.extract_strided_slice %48 {offsets = [0, 0], sizes = [8, 32], strides = [1, 1]} : vector<8x96xf32> to vector<8x32xf32>
    %51 = arith.addf %49, %50 : vector<8x32xf32>
    %52 = arith.negf %51 : vector<8x32xf32>
    %53 = math.exp %52 : vector<8x32xf32>
    %cst_18 = arith.constant 1.000000e+00 : f32
    %54 = vector.broadcast %cst_18 : f32 to vector<8x32xf32>
    %55 = arith.addf %54, %53 : vector<8x32xf32>
    %56 = arith.divf %54, %55 : vector<8x32xf32>
    %57 = vector.extract_strided_slice %45 {offsets = [0, 32], sizes = [8, 32], strides = [1, 1]} : vector<8x96xf32> to vector<8x32xf32>
    %58 = vector.extract_strided_slice %48 {offsets = [0, 32], sizes = [8, 32], strides = [1, 1]} : vector<8x96xf32> to vector<8x32xf32>
    %59 = arith.addf %57, %58 : vector<8x32xf32>
    %60 = arith.negf %59 : vector<8x32xf32>
    %61 = math.exp %60 : vector<8x32xf32>
    %cst_19 = arith.constant 1.000000e+00 : f32
    %62 = vector.broadcast %cst_19 : f32 to vector<8x32xf32>
    %63 = arith.addf %62, %61 : vector<8x32xf32>
    %64 = arith.divf %62, %63 : vector<8x32xf32>
    %65 = vector.extract_strided_slice %45 {offsets = [0, 64], sizes = [8, 32], strides = [1, 1]} : vector<8x96xf32> to vector<8x32xf32>
    %66 = vector.extract_strided_slice %48 {offsets = [0, 64], sizes = [8, 32], strides = [1, 1]} : vector<8x96xf32> to vector<8x32xf32>
    %67 = arith.mulf %56, %66 : vector<8x32xf32>
    %68 = arith.addf %65, %67 : vector<8x32xf32>
    %69 = math.tanh %68 : vector<8x32xf32>
    %cst_20 = arith.constant 1.000000e+00 : f32
    %70 = vector.broadcast %cst_20 : f32 to vector<8x32xf32>
    %71 = arith.subf %70, %64 : vector<8x32xf32>
    %72 = arith.mulf %71, %69 : vector<8x32xf32>
    %73 = arith.mulf %64, %39 : vector<8x32xf32>
    %74 = arith.addf %72, %73 : vector<8x32xf32>
    %c2_i32 = arith.constant 2 : i32
    %75 = arith.index_cast %c2_i32 : i32 to index
    %c0_21 = arith.constant 0 : index
    %c0_22 = arith.constant 0 : index
    %76 = vector.load %arg0[%75, %c0_21, %c0_22] : memref<10x8x16xf32, #tpu.memory_space<vmem>>, vector<1x8x16xf32>
    %77 = vector.shape_cast %76 : vector<1x8x16xf32> to vector<8x16xf32>
    %cst_23 = arith.constant dense<0.000000e+00> : vector<8x96xf32>
    %78 = tpu.matmul %77, %0, %cst_23 {dimension_numbers = #tpu.dot_dimension_numbers<[1], [0], [0], [1], [0, 0, 1, 1], [], []>} : vector<8x16xf32>, vector<16x96xf32>, vector<8x96xf32> -> vector<8x96xf32>
    %79 = vector.broadcast %2 : vector<1x96xf32> to vector<8x96xf32>
    %80 = arith.addf %78, %79 : vector<8x96xf32>
    %cst_24 = arith.constant dense<0.000000e+00> : vector<8x96xf32>
    %81 = tpu.matmul %74, %1, %cst_24 {dimension_numbers = #tpu.dot_dimension_numbers<[1], [0], [0], [1], [0, 0, 1, 1], [], []>} : vector<8x32xf32>, vector<32x96xf32>, vector<8x96xf32> -> vector<8x96xf32>
    %82 = vector.broadcast %3 : vector<1x96xf32> to vector<8x96xf32>
    %83 = arith.addf %81, %82 : vector<8x96xf32>
    %84 = vector.extract_strided_slice %80 {offsets = [0, 0], sizes = [8, 32], strides = [1, 1]} : vector<8x96xf32> to vector<8x32xf32>
    %85 = vector.extract_strided_slice %83 {offsets = [0, 0], sizes = [8, 32], strides = [1, 1]} : vector<8x96xf32> to vector<8x32xf32>
    %86 = arith.addf %84, %85 : vector<8x32xf32>
    %87 = arith.negf %86 : vector<8x32xf32>
    %88 = math.exp %87 : vector<8x32xf32>
    %cst_25 = arith.constant 1.000000e+00 : f32
    %89 = vector.broadcast %cst_25 : f32 to vector<8x32xf32>
    %90 = arith.addf %89, %88 : vector<8x32xf32>
    %91 = arith.divf %89, %90 : vector<8x32xf32>
    %92 = vector.extract_strided_slice %80 {offsets = [0, 32], sizes = [8, 32], strides = [1, 1]} : vector<8x96xf32> to vector<8x32xf32>
    %93 = vector.extract_strided_slice %83 {offsets = [0, 32], sizes = [8, 32], strides = [1, 1]} : vector<8x96xf32> to vector<8x32xf32>
    %94 = arith.addf %92, %93 : vector<8x32xf32>
    %95 = arith.negf %94 : vector<8x32xf32>
    %96 = math.exp %95 : vector<8x32xf32>
    %cst_26 = arith.constant 1.000000e+00 : f32
    %97 = vector.broadcast %cst_26 : f32 to vector<8x32xf32>
    %98 = arith.addf %97, %96 : vector<8x32xf32>
    %99 = arith.divf %97, %98 : vector<8x32xf32>
    %100 = vector.extract_strided_slice %80 {offsets = [0, 64], sizes = [8, 32], strides = [1, 1]} : vector<8x96xf32> to vector<8x32xf32>
    %101 = vector.extract_strided_slice %83 {offsets = [0, 64], sizes = [8, 32], strides = [1, 1]} : vector<8x96xf32> to vector<8x32xf32>
    %102 = arith.mulf %91, %101 : vector<8x32xf32>
    %103 = arith.addf %100, %102 : vector<8x32xf32>
    %104 = math.tanh %103 : vector<8x32xf32>
    %cst_27 = arith.constant 1.000000e+00 : f32
    %105 = vector.broadcast %cst_27 : f32 to vector<8x32xf32>
    %106 = arith.subf %105, %99 : vector<8x32xf32>
    %107 = arith.mulf %106, %104 : vector<8x32xf32>
    %108 = arith.mulf %99, %74 : vector<8x32xf32>
    %109 = arith.addf %107, %108 : vector<8x32xf32>
    %c3_i32 = arith.constant 3 : i32
    %110 = arith.index_cast %c3_i32 : i32 to index
    %c0_28 = arith.constant 0 : index
    %c0_29 = arith.constant 0 : index
    %111 = vector.load %arg0[%110, %c0_28, %c0_29] : memref<10x8x16xf32, #tpu.memory_space<vmem>>, vector<1x8x16xf32>
    %112 = vector.shape_cast %111 : vector<1x8x16xf32> to vector<8x16xf32>
    %cst_30 = arith.constant dense<0.000000e+00> : vector<8x96xf32>
    %113 = tpu.matmul %112, %0, %cst_30 {dimension_numbers = #tpu.dot_dimension_numbers<[1], [0], [0], [1], [0, 0, 1, 1], [], []>} : vector<8x16xf32>, vector<16x96xf32>, vector<8x96xf32> -> vector<8x96xf32>
    %114 = vector.broadcast %2 : vector<1x96xf32> to vector<8x96xf32>
    %115 = arith.addf %113, %114 : vector<8x96xf32>
    %cst_31 = arith.constant dense<0.000000e+00> : vector<8x96xf32>
    %116 = tpu.matmul %109, %1, %cst_31 {dimension_numbers = #tpu.dot_dimension_numbers<[1], [0], [0], [1], [0, 0, 1, 1], [], []>} : vector<8x32xf32>, vector<32x96xf32>, vector<8x96xf32> -> vector<8x96xf32>
    %117 = vector.broadcast %3 : vector<1x96xf32> to vector<8x96xf32>
    %118 = arith.addf %116, %117 : vector<8x96xf32>
    %119 = vector.extract_strided_slice %115 {offsets = [0, 0], sizes = [8, 32], strides = [1, 1]} : vector<8x96xf32> to vector<8x32xf32>
    %120 = vector.extract_strided_slice %118 {offsets = [0, 0], sizes = [8, 32], strides = [1, 1]} : vector<8x96xf32> to vector<8x32xf32>
    %121 = arith.addf %119, %120 : vector<8x32xf32>
    %122 = arith.negf %121 : vector<8x32xf32>
    %123 = math.exp %122 : vector<8x32xf32>
    %cst_32 = arith.constant 1.000000e+00 : f32
    %124 = vector.broadcast %cst_32 : f32 to vector<8x32xf32>
    %125 = arith.addf %124, %123 : vector<8x32xf32>
    %126 = arith.divf %124, %125 : vector<8x32xf32>
    %127 = vector.extract_strided_slice %115 {offsets = [0, 32], sizes = [8, 32], strides = [1, 1]} : vector<8x96xf32> to vector<8x32xf32>
    %128 = vector.extract_strided_slice %118 {offsets = [0, 32], sizes = [8, 32], strides = [1, 1]} : vector<8x96xf32> to vector<8x32xf32>
    %129 = arith.addf %127, %128 : vector<8x32xf32>
    %130 = arith.negf %129 : vector<8x32xf32>
    %131 = math.exp %130 : vector<8x32xf32>
    %cst_33 = arith.constant 1.000000e+00 : f32
    %132 = vector.broadcast %cst_33 : f32 to vector<8x32xf32>
    %133 = arith.addf %132, %131 : vector<8x32xf32>
    %134 = arith.divf %132, %133 : vector<8x32xf32>
    %135 = vector.extract_strided_slice %115 {offsets = [0, 64], sizes = [8, 32], strides = [1, 1]} : vector<8x96xf32> to vector<8x32xf32>
    %136 = vector.extract_strided_slice %118 {offsets = [0, 64], sizes = [8, 32], strides = [1, 1]} : vector<8x96xf32> to vector<8x32xf32>
    %137 = arith.mulf %126, %136 : vector<8x32xf32>
    %138 = arith.addf %135, %137 : vector<8x32xf32>
    %139 = math.tanh %138 : vector<8x32xf32>
    %cst_34 = arith.constant 1.000000e+00 : f32
    %140 = vector.broadcast %cst_34 : f32 to vector<8x32xf32>
    %141 = arith.subf %140, %134 : vector<8x32xf32>
    %142 = arith.mulf %141, %139 : vector<8x32xf32>
    %143 = arith.mulf %134, %109 : vector<8x32xf32>
    %144 = arith.addf %142, %143 : vector<8x32xf32>
    %c4_i32 = arith.constant 4 : i32
    %145 = arith.index_cast %c4_i32 : i32 to index
    %c0_35 = arith.constant 0 : index
    %c0_36 = arith.constant 0 : index
    %146 = vector.load %arg0[%145, %c0_35, %c0_36] : memref<10x8x16xf32, #tpu.memory_space<vmem>>, vector<1x8x16xf32>
    %147 = vector.shape_cast %146 : vector<1x8x16xf32> to vector<8x16xf32>
    %cst_37 = arith.constant dense<0.000000e+00> : vector<8x96xf32>
    %148 = tpu.matmul %147, %0, %cst_37 {dimension_numbers = #tpu.dot_dimension_numbers<[1], [0], [0], [1], [0, 0, 1, 1], [], []>} : vector<8x16xf32>, vector<16x96xf32>, vector<8x96xf32> -> vector<8x96xf32>
    %149 = vector.broadcast %2 : vector<1x96xf32> to vector<8x96xf32>
    %150 = arith.addf %148, %149 : vector<8x96xf32>
    %cst_38 = arith.constant dense<0.000000e+00> : vector<8x96xf32>
    %151 = tpu.matmul %144, %1, %cst_38 {dimension_numbers = #tpu.dot_dimension_numbers<[1], [0], [0], [1], [0, 0, 1, 1], [], []>} : vector<8x32xf32>, vector<32x96xf32>, vector<8x96xf32> -> vector<8x96xf32>
    %152 = vector.broadcast %3 : vector<1x96xf32> to vector<8x96xf32>
    %153 = arith.addf %151, %152 : vector<8x96xf32>
    %154 = vector.extract_strided_slice %150 {offsets = [0, 0], sizes = [8, 32], strides = [1, 1]} : vector<8x96xf32> to vector<8x32xf32>
    %155 = vector.extract_strided_slice %153 {offsets = [0, 0], sizes = [8, 32], strides = [1, 1]} : vector<8x96xf32> to vector<8x32xf32>
    %156 = arith.addf %154, %155 : vector<8x32xf32>
    %157 = arith.negf %156 : vector<8x32xf32>
    %158 = math.exp %157 : vector<8x32xf32>
    %cst_39 = arith.constant 1.000000e+00 : f32
    %159 = vector.broadcast %cst_39 : f32 to vector<8x32xf32>
    %160 = arith.addf %159, %158 : vector<8x32xf32>
    %161 = arith.divf %159, %160 : vector<8x32xf32>
    %162 = vector.extract_strided_slice %150 {offsets = [0, 32], sizes = [8, 32], strides = [1, 1]} : vector<8x96xf32> to vector<8x32xf32>
    %163 = vector.extract_strided_slice %153 {offsets = [0, 32], sizes = [8, 32], strides = [1, 1]} : vector<8x96xf32> to vector<8x32xf32>
    %164 = arith.addf %162, %163 : vector<8x32xf32>
    %165 = arith.negf %164 : vector<8x32xf32>
    %166 = math.exp %165 : vector<8x32xf32>
    %cst_40 = arith.constant 1.000000e+00 : f32
    %167 = vector.broadcast %cst_40 : f32 to vector<8x32xf32>
    %168 = arith.addf %167, %166 : vector<8x32xf32>
    %169 = arith.divf %167, %168 : vector<8x32xf32>
    %170 = vector.extract_strided_slice %150 {offsets = [0, 64], sizes = [8, 32], strides = [1, 1]} : vector<8x96xf32> to vector<8x32xf32>
    %171 = vector.extract_strided_slice %153 {offsets = [0, 64], sizes = [8, 32], strides = [1, 1]} : vector<8x96xf32> to vector<8x32xf32>
    %172 = arith.mulf %161, %171 : vector<8x32xf32>
    %173 = arith.addf %170, %172 : vector<8x32xf32>
    %174 = math.tanh %173 : vector<8x32xf32>
    %cst_41 = arith.constant 1.000000e+00 : f32
    %175 = vector.broadcast %cst_41 : f32 to vector<8x32xf32>
    %176 = arith.subf %175, %169 : vector<8x32xf32>
    %177 = arith.mulf %176, %174 : vector<8x32xf32>
    %178 = arith.mulf %169, %144 : vector<8x32xf32>
    %179 = arith.addf %177, %178 : vector<8x32xf32>
    %c5_i32 = arith.constant 5 : i32
    %180 = arith.index_cast %c5_i32 : i32 to index
    %c0_42 = arith.constant 0 : index
    %c0_43 = arith.constant 0 : index
    %181 = vector.load %arg0[%180, %c0_42, %c0_43] : memref<10x8x16xf32, #tpu.memory_space<vmem>>, vector<1x8x16xf32>
    %182 = vector.shape_cast %181 : vector<1x8x16xf32> to vector<8x16xf32>
    %cst_44 = arith.constant dense<0.000000e+00> : vector<8x96xf32>
    %183 = tpu.matmul %182, %0, %cst_44 {dimension_numbers = #tpu.dot_dimension_numbers<[1], [0], [0], [1], [0, 0, 1, 1], [], []>} : vector<8x16xf32>, vector<16x96xf32>, vector<8x96xf32> -> vector<8x96xf32>
    %184 = vector.broadcast %2 : vector<1x96xf32> to vector<8x96xf32>
    %185 = arith.addf %183, %184 : vector<8x96xf32>
    %cst_45 = arith.constant dense<0.000000e+00> : vector<8x96xf32>
    %186 = tpu.matmul %179, %1, %cst_45 {dimension_numbers = #tpu.dot_dimension_numbers<[1], [0], [0], [1], [0, 0, 1, 1], [], []>} : vector<8x32xf32>, vector<32x96xf32>, vector<8x96xf32> -> vector<8x96xf32>
    %187 = vector.broadcast %3 : vector<1x96xf32> to vector<8x96xf32>
    %188 = arith.addf %186, %187 : vector<8x96xf32>
    %189 = vector.extract_strided_slice %185 {offsets = [0, 0], sizes = [8, 32], strides = [1, 1]} : vector<8x96xf32> to vector<8x32xf32>
    %190 = vector.extract_strided_slice %188 {offsets = [0, 0], sizes = [8, 32], strides = [1, 1]} : vector<8x96xf32> to vector<8x32xf32>
    %191 = arith.addf %189, %190 : vector<8x32xf32>
    %192 = arith.negf %191 : vector<8x32xf32>
    %193 = math.exp %192 : vector<8x32xf32>
    %cst_46 = arith.constant 1.000000e+00 : f32
    %194 = vector.broadcast %cst_46 : f32 to vector<8x32xf32>
    %195 = arith.addf %194, %193 : vector<8x32xf32>
    %196 = arith.divf %194, %195 : vector<8x32xf32>
    %197 = vector.extract_strided_slice %185 {offsets = [0, 32], sizes = [8, 32], strides = [1, 1]} : vector<8x96xf32> to vector<8x32xf32>
    %198 = vector.extract_strided_slice %188 {offsets = [0, 32], sizes = [8, 32], strides = [1, 1]} : vector<8x96xf32> to vector<8x32xf32>
    %199 = arith.addf %197, %198 : vector<8x32xf32>
    %200 = arith.negf %199 : vector<8x32xf32>
    %201 = math.exp %200 : vector<8x32xf32>
    %cst_47 = arith.constant 1.000000e+00 : f32
    %202 = vector.broadcast %cst_47 : f32 to vector<8x32xf32>
    %203 = arith.addf %202, %201 : vector<8x32xf32>
    %204 = arith.divf %202, %203 : vector<8x32xf32>
    %205 = vector.extract_strided_slice %185 {offsets = [0, 64], sizes = [8, 32], strides = [1, 1]} : vector<8x96xf32> to vector<8x32xf32>
    %206 = vector.extract_strided_slice %188 {offsets = [0, 64], sizes = [8, 32], strides = [1, 1]} : vector<8x96xf32> to vector<8x32xf32>
    %207 = arith.mulf %196, %206 : vector<8x32xf32>
    %208 = arith.addf %205, %207 : vector<8x32xf32>
    %209 = math.tanh %208 : vector<8x32xf32>
    %cst_48 = arith.constant 1.000000e+00 : f32
    %210 = vector.broadcast %cst_48 : f32 to vector<8x32xf32>
    %211 = arith.subf %210, %204 : vector<8x32xf32>
    %212 = arith.mulf %211, %209 : vector<8x32xf32>
    %213 = arith.mulf %204, %179 : vector<8x32xf32>
    %214 = arith.addf %212, %213 : vector<8x32xf32>
    %c6_i32 = arith.constant 6 : i32
    %215 = arith.index_cast %c6_i32 : i32 to index
    %c0_49 = arith.constant 0 : index
    %c0_50 = arith.constant 0 : index
    %216 = vector.load %arg0[%215, %c0_49, %c0_50] : memref<10x8x16xf32, #tpu.memory_space<vmem>>, vector<1x8x16xf32>
    %217 = vector.shape_cast %216 : vector<1x8x16xf32> to vector<8x16xf32>
    %cst_51 = arith.constant dense<0.000000e+00> : vector<8x96xf32>
    %218 = tpu.matmul %217, %0, %cst_51 {dimension_numbers = #tpu.dot_dimension_numbers<[1], [0], [0], [1], [0, 0, 1, 1], [], []>} : vector<8x16xf32>, vector<16x96xf32>, vector<8x96xf32> -> vector<8x96xf32>
    %219 = vector.broadcast %2 : vector<1x96xf32> to vector<8x96xf32>
    %220 = arith.addf %218, %219 : vector<8x96xf32>
    %cst_52 = arith.constant dense<0.000000e+00> : vector<8x96xf32>
    %221 = tpu.matmul %214, %1, %cst_52 {dimension_numbers = #tpu.dot_dimension_numbers<[1], [0], [0], [1], [0, 0, 1, 1], [], []>} : vector<8x32xf32>, vector<32x96xf32>, vector<8x96xf32> -> vector<8x96xf32>
    %222 = vector.broadcast %3 : vector<1x96xf32> to vector<8x96xf32>
    %223 = arith.addf %221, %222 : vector<8x96xf32>
    %224 = vector.extract_strided_slice %220 {offsets = [0, 0], sizes = [8, 32], strides = [1, 1]} : vector<8x96xf32> to vector<8x32xf32>
    %225 = vector.extract_strided_slice %223 {offsets = [0, 0], sizes = [8, 32], strides = [1, 1]} : vector<8x96xf32> to vector<8x32xf32>
    %226 = arith.addf %224, %225 : vector<8x32xf32>
    %227 = arith.negf %226 : vector<8x32xf32>
    %228 = math.exp %227 : vector<8x32xf32>
    %cst_53 = arith.constant 1.000000e+00 : f32
    %229 = vector.broadcast %cst_53 : f32 to vector<8x32xf32>
    %230 = arith.addf %229, %228 : vector<8x32xf32>
    %231 = arith.divf %229, %230 : vector<8x32xf32>
    %232 = vector.extract_strided_slice %220 {offsets = [0, 32], sizes = [8, 32], strides = [1, 1]} : vector<8x96xf32> to vector<8x32xf32>
    %233 = vector.extract_strided_slice %223 {offsets = [0, 32], sizes = [8, 32], strides = [1, 1]} : vector<8x96xf32> to vector<8x32xf32>
    %234 = arith.addf %232, %233 : vector<8x32xf32>
    %235 = arith.negf %234 : vector<8x32xf32>
    %236 = math.exp %235 : vector<8x32xf32>
    %cst_54 = arith.constant 1.000000e+00 : f32
    %237 = vector.broadcast %cst_54 : f32 to vector<8x32xf32>
    %238 = arith.addf %237, %236 : vector<8x32xf32>
    %239 = arith.divf %237, %238 : vector<8x32xf32>
    %240 = vector.extract_strided_slice %220 {offsets = [0, 64], sizes = [8, 32], strides = [1, 1]} : vector<8x96xf32> to vector<8x32xf32>
    %241 = vector.extract_strided_slice %223 {offsets = [0, 64], sizes = [8, 32], strides = [1, 1]} : vector<8x96xf32> to vector<8x32xf32>
    %242 = arith.mulf %231, %241 : vector<8x32xf32>
    %243 = arith.addf %240, %242 : vector<8x32xf32>
    %244 = math.tanh %243 : vector<8x32xf32>
    %cst_55 = arith.constant 1.000000e+00 : f32
    %245 = vector.broadcast %cst_55 : f32 to vector<8x32xf32>
    %246 = arith.subf %245, %239 : vector<8x32xf32>
    %247 = arith.mulf %246, %244 : vector<8x32xf32>
    %248 = arith.mulf %239, %214 : vector<8x32xf32>
    %249 = arith.addf %247, %248 : vector<8x32xf32>
    %c7_i32 = arith.constant 7 : i32
    %250 = arith.index_cast %c7_i32 : i32 to index
    %c0_56 = arith.constant 0 : index
    %c0_57 = arith.constant 0 : index
    %251 = vector.load %arg0[%250, %c0_56, %c0_57] : memref<10x8x16xf32, #tpu.memory_space<vmem>>, vector<1x8x16xf32>
    %252 = vector.shape_cast %251 : vector<1x8x16xf32> to vector<8x16xf32>
    %cst_58 = arith.constant dense<0.000000e+00> : vector<8x96xf32>
    %253 = tpu.matmul %252, %0, %cst_58 {dimension_numbers = #tpu.dot_dimension_numbers<[1], [0], [0], [1], [0, 0, 1, 1], [], []>} : vector<8x16xf32>, vector<16x96xf32>, vector<8x96xf32> -> vector<8x96xf32>
    %254 = vector.broadcast %2 : vector<1x96xf32> to vector<8x96xf32>
    %255 = arith.addf %253, %254 : vector<8x96xf32>
    %cst_59 = arith.constant dense<0.000000e+00> : vector<8x96xf32>
    %256 = tpu.matmul %249, %1, %cst_59 {dimension_numbers = #tpu.dot_dimension_numbers<[1], [0], [0], [1], [0, 0, 1, 1], [], []>} : vector<8x32xf32>, vector<32x96xf32>, vector<8x96xf32> -> vector<8x96xf32>
    %257 = vector.broadcast %3 : vector<1x96xf32> to vector<8x96xf32>
    %258 = arith.addf %256, %257 : vector<8x96xf32>
    %259 = vector.extract_strided_slice %255 {offsets = [0, 0], sizes = [8, 32], strides = [1, 1]} : vector<8x96xf32> to vector<8x32xf32>
    %260 = vector.extract_strided_slice %258 {offsets = [0, 0], sizes = [8, 32], strides = [1, 1]} : vector<8x96xf32> to vector<8x32xf32>
    %261 = arith.addf %259, %260 : vector<8x32xf32>
    %262 = arith.negf %261 : vector<8x32xf32>
    %263 = math.exp %262 : vector<8x32xf32>
    %cst_60 = arith.constant 1.000000e+00 : f32
    %264 = vector.broadcast %cst_60 : f32 to vector<8x32xf32>
    %265 = arith.addf %264, %263 : vector<8x32xf32>
    %266 = arith.divf %264, %265 : vector<8x32xf32>
    %267 = vector.extract_strided_slice %255 {offsets = [0, 32], sizes = [8, 32], strides = [1, 1]} : vector<8x96xf32> to vector<8x32xf32>
    %268 = vector.extract_strided_slice %258 {offsets = [0, 32], sizes = [8, 32], strides = [1, 1]} : vector<8x96xf32> to vector<8x32xf32>
    %269 = arith.addf %267, %268 : vector<8x32xf32>
    %270 = arith.negf %269 : vector<8x32xf32>
    %271 = math.exp %270 : vector<8x32xf32>
    %cst_61 = arith.constant 1.000000e+00 : f32
    %272 = vector.broadcast %cst_61 : f32 to vector<8x32xf32>
    %273 = arith.addf %272, %271 : vector<8x32xf32>
    %274 = arith.divf %272, %273 : vector<8x32xf32>
    %275 = vector.extract_strided_slice %255 {offsets = [0, 64], sizes = [8, 32], strides = [1, 1]} : vector<8x96xf32> to vector<8x32xf32>
    %276 = vector.extract_strided_slice %258 {offsets = [0, 64], sizes = [8, 32], strides = [1, 1]} : vector<8x96xf32> to vector<8x32xf32>
    %277 = arith.mulf %266, %276 : vector<8x32xf32>
    %278 = arith.addf %275, %277 : vector<8x32xf32>
    %279 = math.tanh %278 : vector<8x32xf32>
    %cst_62 = arith.constant 1.000000e+00 : f32
    %280 = vector.broadcast %cst_62 : f32 to vector<8x32xf32>
    %281 = arith.subf %280, %274 : vector<8x32xf32>
    %282 = arith.mulf %281, %279 : vector<8x32xf32>
    %283 = arith.mulf %274, %249 : vector<8x32xf32>
    %284 = arith.addf %282, %283 : vector<8x32xf32>
    %c8_i32 = arith.constant 8 : i32
    %285 = arith.index_cast %c8_i32 : i32 to index
    %c0_63 = arith.constant 0 : index
    %c0_64 = arith.constant 0 : index
    %286 = vector.load %arg0[%285, %c0_63, %c0_64] : memref<10x8x16xf32, #tpu.memory_space<vmem>>, vector<1x8x16xf32>
    %287 = vector.shape_cast %286 : vector<1x8x16xf32> to vector<8x16xf32>
    %cst_65 = arith.constant dense<0.000000e+00> : vector<8x96xf32>
    %288 = tpu.matmul %287, %0, %cst_65 {dimension_numbers = #tpu.dot_dimension_numbers<[1], [0], [0], [1], [0, 0, 1, 1], [], []>} : vector<8x16xf32>, vector<16x96xf32>, vector<8x96xf32> -> vector<8x96xf32>
    %289 = vector.broadcast %2 : vector<1x96xf32> to vector<8x96xf32>
    %290 = arith.addf %288, %289 : vector<8x96xf32>
    %cst_66 = arith.constant dense<0.000000e+00> : vector<8x96xf32>
    %291 = tpu.matmul %284, %1, %cst_66 {dimension_numbers = #tpu.dot_dimension_numbers<[1], [0], [0], [1], [0, 0, 1, 1], [], []>} : vector<8x32xf32>, vector<32x96xf32>, vector<8x96xf32> -> vector<8x96xf32>
    %292 = vector.broadcast %3 : vector<1x96xf32> to vector<8x96xf32>
    %293 = arith.addf %291, %292 : vector<8x96xf32>
    %294 = vector.extract_strided_slice %290 {offsets = [0, 0], sizes = [8, 32], strides = [1, 1]} : vector<8x96xf32> to vector<8x32xf32>
    %295 = vector.extract_strided_slice %293 {offsets = [0, 0], sizes = [8, 32], strides = [1, 1]} : vector<8x96xf32> to vector<8x32xf32>
    %296 = arith.addf %294, %295 : vector<8x32xf32>
    %297 = arith.negf %296 : vector<8x32xf32>
    %298 = math.exp %297 : vector<8x32xf32>
    %cst_67 = arith.constant 1.000000e+00 : f32
    %299 = vector.broadcast %cst_67 : f32 to vector<8x32xf32>
    %300 = arith.addf %299, %298 : vector<8x32xf32>
    %301 = arith.divf %299, %300 : vector<8x32xf32>
    %302 = vector.extract_strided_slice %290 {offsets = [0, 32], sizes = [8, 32], strides = [1, 1]} : vector<8x96xf32> to vector<8x32xf32>
    %303 = vector.extract_strided_slice %293 {offsets = [0, 32], sizes = [8, 32], strides = [1, 1]} : vector<8x96xf32> to vector<8x32xf32>
    %304 = arith.addf %302, %303 : vector<8x32xf32>
    %305 = arith.negf %304 : vector<8x32xf32>
    %306 = math.exp %305 : vector<8x32xf32>
    %cst_68 = arith.constant 1.000000e+00 : f32
    %307 = vector.broadcast %cst_68 : f32 to vector<8x32xf32>
    %308 = arith.addf %307, %306 : vector<8x32xf32>
    %309 = arith.divf %307, %308 : vector<8x32xf32>
    %310 = vector.extract_strided_slice %290 {offsets = [0, 64], sizes = [8, 32], strides = [1, 1]} : vector<8x96xf32> to vector<8x32xf32>
    %311 = vector.extract_strided_slice %293 {offsets = [0, 64], sizes = [8, 32], strides = [1, 1]} : vector<8x96xf32> to vector<8x32xf32>
    %312 = arith.mulf %301, %311 : vector<8x32xf32>
    %313 = arith.addf %310, %312 : vector<8x32xf32>
    %314 = math.tanh %313 : vector<8x32xf32>
    %cst_69 = arith.constant 1.000000e+00 : f32
    %315 = vector.broadcast %cst_69 : f32 to vector<8x32xf32>
    %316 = arith.subf %315, %309 : vector<8x32xf32>
    %317 = arith.mulf %316, %314 : vector<8x32xf32>
    %318 = arith.mulf %309, %284 : vector<8x32xf32>
    %319 = arith.addf %317, %318 : vector<8x32xf32>
    %c9_i32 = arith.constant 9 : i32
    %320 = arith.index_cast %c9_i32 : i32 to index
    %c0_70 = arith.constant 0 : index
    %c0_71 = arith.constant 0 : index
    %321 = vector.load %arg0[%320, %c0_70, %c0_71] : memref<10x8x16xf32, #tpu.memory_space<vmem>>, vector<1x8x16xf32>
    %322 = vector.shape_cast %321 : vector<1x8x16xf32> to vector<8x16xf32>
    %cst_72 = arith.constant dense<0.000000e+00> : vector<8x96xf32>
    %323 = tpu.matmul %322, %0, %cst_72 {dimension_numbers = #tpu.dot_dimension_numbers<[1], [0], [0], [1], [0, 0, 1, 1], [], []>} : vector<8x16xf32>, vector<16x96xf32>, vector<8x96xf32> -> vector<8x96xf32>
    %324 = vector.broadcast %2 : vector<1x96xf32> to vector<8x96xf32>
    %325 = arith.addf %323, %324 : vector<8x96xf32>
    %cst_73 = arith.constant dense<0.000000e+00> : vector<8x96xf32>
    %326 = tpu.matmul %319, %1, %cst_73 {dimension_numbers = #tpu.dot_dimension_numbers<[1], [0], [0], [1], [0, 0, 1, 1], [], []>} : vector<8x32xf32>, vector<32x96xf32>, vector<8x96xf32> -> vector<8x96xf32>
    %327 = vector.broadcast %3 : vector<1x96xf32> to vector<8x96xf32>
    %328 = arith.addf %326, %327 : vector<8x96xf32>
    %329 = vector.extract_strided_slice %325 {offsets = [0, 0], sizes = [8, 32], strides = [1, 1]} : vector<8x96xf32> to vector<8x32xf32>
    %330 = vector.extract_strided_slice %328 {offsets = [0, 0], sizes = [8, 32], strides = [1, 1]} : vector<8x96xf32> to vector<8x32xf32>
    %331 = arith.addf %329, %330 : vector<8x32xf32>
    %332 = arith.negf %331 : vector<8x32xf32>
    %333 = math.exp %332 : vector<8x32xf32>
    %cst_74 = arith.constant 1.000000e+00 : f32
    %334 = vector.broadcast %cst_74 : f32 to vector<8x32xf32>
    %335 = arith.addf %334, %333 : vector<8x32xf32>
    %336 = arith.divf %334, %335 : vector<8x32xf32>
    %337 = vector.extract_strided_slice %325 {offsets = [0, 32], sizes = [8, 32], strides = [1, 1]} : vector<8x96xf32> to vector<8x32xf32>
    %338 = vector.extract_strided_slice %328 {offsets = [0, 32], sizes = [8, 32], strides = [1, 1]} : vector<8x96xf32> to vector<8x32xf32>
    %339 = arith.addf %337, %338 : vector<8x32xf32>
    %340 = arith.negf %339 : vector<8x32xf32>
    %341 = math.exp %340 : vector<8x32xf32>
    %cst_75 = arith.constant 1.000000e+00 : f32
    %342 = vector.broadcast %cst_75 : f32 to vector<8x32xf32>
    %343 = arith.addf %342, %341 : vector<8x32xf32>
    %344 = arith.divf %342, %343 : vector<8x32xf32>
    %345 = vector.extract_strided_slice %325 {offsets = [0, 64], sizes = [8, 32], strides = [1, 1]} : vector<8x96xf32> to vector<8x32xf32>
    %346 = vector.extract_strided_slice %328 {offsets = [0, 64], sizes = [8, 32], strides = [1, 1]} : vector<8x96xf32> to vector<8x32xf32>
    %347 = arith.mulf %336, %346 : vector<8x32xf32>
    %348 = arith.addf %345, %347 : vector<8x32xf32>
    %349 = math.tanh %348 : vector<8x32xf32>
    %cst_76 = arith.constant 1.000000e+00 : f32
    %350 = vector.broadcast %cst_76 : f32 to vector<8x32xf32>
    %351 = arith.subf %350, %344 : vector<8x32xf32>
    %352 = arith.mulf %351, %349 : vector<8x32xf32>
    %353 = arith.mulf %344, %319 : vector<8x32xf32>
    %354 = arith.addf %352, %353 : vector<8x32xf32>
    %c10_i32 = arith.constant 10 : i32
    %c0_77 = arith.constant 0 : index
    %c0_78 = arith.constant 0 : index
    %355 = vector.load %arg7[%c0_77, %c0_78] : memref<16x96xf32, #tpu.memory_space<vmem>>, vector<16x96xf32>
    %c0_79 = arith.constant 0 : index
    %c0_80 = arith.constant 0 : index
    %356 = vector.load %arg9[%c0_79, %c0_80] : memref<32x96xf32, #tpu.memory_space<vmem>>, vector<32x96xf32>
    %c0_81 = arith.constant 0 : index
    %c0_82 = arith.constant 0 : index
    %357 = vector.load %arg11[%c0_81, %c0_82] : memref<1x96xf32, #tpu.memory_space<vmem>>, vector<1x96xf32>
    %c0_83 = arith.constant 0 : index
    %c0_84 = arith.constant 0 : index
    %358 = vector.load %arg12[%c0_83, %c0_84] : memref<16x128xf32, #tpu.memory_space<vmem>>, vector<16x128xf32>
    %c0_85 = arith.constant 0 : index
    %c0_86 = arith.constant 0 : index
    %359 = vector.load %arg13[%c0_85, %c0_86] : memref<32x128xf32, #tpu.memory_space<vmem>>, vector<32x128xf32>
    %c0_87 = arith.constant 0 : index
    %c0_88 = arith.constant 0 : index
    %360 = vector.load %arg2[%c0_87, %c0_88] : memref<32x16xf32, #tpu.memory_space<vmem>>, vector<32x16xf32>
    %c0_89 = arith.constant 0 : index
    %c0_90 = arith.constant 0 : index
    %361 = vector.load %arg8[%c0_89, %c0_90] : memref<32x96xf32, #tpu.memory_space<vmem>>, vector<32x96xf32>
    %cst_91 = arith.constant dense<0.000000e+00> : vector<8x96xf32>
    %362 = tpu.matmul %354, %361, %cst_91 {dimension_numbers = #tpu.dot_dimension_numbers<[1], [0], [0], [1], [0, 0, 1, 1], [], []>} : vector<8x32xf32>, vector<32x96xf32>, vector<8x96xf32> -> vector<8x96xf32>
    %c0_92 = arith.constant 0 : index
    %c0_93 = arith.constant 0 : index
    %363 = vector.load %arg10[%c0_92, %c0_93] : memref<1x96xf32, #tpu.memory_space<vmem>>, vector<1x96xf32>
    %364 = vector.broadcast %363 : vector<1x96xf32> to vector<8x96xf32>
    %365 = arith.addf %362, %364 : vector<8x96xf32>
    %c0_94 = arith.constant 0 : index
    %c0_95 = arith.constant 0 : index
    %366 = vector.load %arg14[%c0_94, %c0_95] : memref<32x128xf32, #tpu.memory_space<vmem>>, vector<32x128xf32>
    %cst_96 = arith.constant dense<0.000000e+00> : vector<8x128xf32>
    %367 = tpu.matmul %354, %366, %cst_96 {dimension_numbers = #tpu.dot_dimension_numbers<[1], [0], [0], [1], [0, 0, 1, 1], [], []>} : vector<8x32xf32>, vector<32x128xf32>, vector<8x128xf32> -> vector<8x128xf32>
    %c0_97 = arith.constant 0 : index
    %c0_98 = arith.constant 0 : index
    %368 = vector.load %arg15[%c0_97, %c0_98] : memref<1x128xf32, #tpu.memory_space<vmem>>, vector<1x128xf32>
    %369 = vector.broadcast %368 : vector<1x128xf32> to vector<8x128xf32>
    %370 = arith.addf %367, %369 : vector<8x128xf32>
    %371 = tpu.iota {dimensions = array<i32: 1>} : vector<8x128xi32>
    %c32_i32 = arith.constant 32 : i32
    %372 = vector.broadcast %c32_i32 : i32 to vector<8x128xi32>
    %373 = arith.cmpi slt, %371, %372 : vector<8x128xi32>
    %374 = tpu.iota {dimensions = array<i32: 1>} : vector<8x32xi32>
    %cst_99 = arith.constant 0.000000e+00 : f32
    %375 = vector.broadcast %cst_99 : f32 to vector<8x128xf32>
    %c0_100 = arith.constant 0 : index
    %c0_101 = arith.constant 0 : index
    %c0_102 = arith.constant 0 : index
    %376 = vector.load %arg16[%c0_100, %c0_101, %c0_102] : memref<8x8x128xf32, #tpu.memory_space<vmem>>, vector<1x8x128xf32>
    %377 = vector.shape_cast %376 : vector<1x8x128xf32> to vector<8x128xf32>
    %378 = vector.shape_cast %375 : vector<8x128xf32> to vector<1x8x128xf32>
    tpu.vector_store %arg16[%c0_100, %c0_101, %c0_102], %378 {strides = array<i32>} : memref<8x8x128xf32, #tpu.memory_space<vmem>>, vector<1x8x128xf32>,
    %c0_103 = arith.constant 0 : index
    %c0_104 = arith.constant 0 : index
    %379 = vector.load %arg1[%c0_103, %c0_104] : memref<8x16xf32, #tpu.memory_space<vmem>>, vector<8x16xf32>
    %c1_i32_105 = arith.constant 1 : i32
    %cst_106 = arith.constant dense<0.000000e+00> : vector<8x96xf32>
    %380 = tpu.matmul %379, %355, %cst_106 {dimension_numbers = #tpu.dot_dimension_numbers<[1], [0], [0], [1], [0, 0, 1, 1], [], []>} : vector<8x16xf32>, vector<16x96xf32>, vector<8x96xf32> -> vector<8x96xf32>
    %381 = arith.addf %380, %365 : vector<8x96xf32>
    %cst_107 = arith.constant dense<0.000000e+00> : vector<8x96xf32>
    %382 = tpu.matmul %354, %356, %cst_107 {dimension_numbers = #tpu.dot_dimension_numbers<[1], [0], [0], [1], [0, 0, 1, 1], [], []>} : vector<8x32xf32>, vector<32x96xf32>, vector<8x96xf32> -> vector<8x96xf32>
    %383 = vector.broadcast %357 : vector<1x96xf32> to vector<8x96xf32>
    %384 = arith.addf %382, %383 : vector<8x96xf32>
    %385 = vector.extract_strided_slice %381 {offsets = [0, 0], sizes = [8, 32], strides = [1, 1]} : vector<8x96xf32> to vector<8x32xf32>
    %386 = vector.extract_strided_slice %384 {offsets = [0, 0], sizes = [8, 32], strides = [1, 1]} : vector<8x96xf32> to vector<8x32xf32>
    %387 = arith.addf %385, %386 : vector<8x32xf32>
    %388 = arith.negf %387 : vector<8x32xf32>
    %389 = math.exp %388 : vector<8x32xf32>
    %cst_108 = arith.constant 1.000000e+00 : f32
    %390 = vector.broadcast %cst_108 : f32 to vector<8x32xf32>
    %391 = arith.addf %390, %389 : vector<8x32xf32>
    %392 = arith.divf %390, %391 : vector<8x32xf32>
    %393 = vector.extract_strided_slice %381 {offsets = [0, 32], sizes = [8, 32], strides = [1, 1]} : vector<8x96xf32> to vector<8x32xf32>
    %394 = vector.extract_strided_slice %384 {offsets = [0, 32], sizes = [8, 32], strides = [1, 1]} : vector<8x96xf32> to vector<8x32xf32>
    %395 = arith.addf %393, %394 : vector<8x32xf32>
    %396 = arith.negf %395 : vector<8x32xf32>
    %397 = math.exp %396 : vector<8x32xf32>
    %cst_109 = arith.constant 1.000000e+00 : f32
    %398 = vector.broadcast %cst_109 : f32 to vector<8x32xf32>
    %399 = arith.addf %398, %397 : vector<8x32xf32>
    %400 = arith.divf %398, %399 : vector<8x32xf32>
    %401 = vector.extract_strided_slice %381 {offsets = [0, 64], sizes = [8, 32], strides = [1, 1]} : vector<8x96xf32> to vector<8x32xf32>
    %402 = vector.extract_strided_slice %384 {offsets = [0, 64], sizes = [8, 32], strides = [1, 1]} : vector<8x96xf32> to vector<8x32xf32>
    %403 = arith.mulf %392, %402 : vector<8x32xf32>
    %404 = arith.addf %401, %403 : vector<8x32xf32>
    %405 = math.tanh %404 : vector<8x32xf32>
    %cst_110 = arith.constant 1.000000e+00 : f32
    %406 = vector.broadcast %cst_110 : f32 to vector<8x32xf32>
    %407 = arith.subf %406, %400 : vector<8x32xf32>
    %408 = arith.mulf %407, %405 : vector<8x32xf32>
    %409 = arith.mulf %400, %354 : vector<8x32xf32>
    %410 = arith.addf %408, %409 : vector<8x32xf32>
    %cst_111 = arith.constant dense<0.000000e+00> : vector<8x128xf32>
    %411 = tpu.matmul %379, %358, %cst_111 {dimension_numbers = #tpu.dot_dimension_numbers<[1], [0], [0], [1], [0, 0, 1, 1], [], []>} : vector<8x16xf32>, vector<16x128xf32>, vector<8x128xf32> -> vector<8x128xf32>
    %cst_112 = arith.constant dense<0.000000e+00> : vector<8x128xf32>
    %412 = tpu.matmul %410, %359, %cst_112 {dimension_numbers = #tpu.dot_dimension_numbers<[1], [0], [0], [1], [0, 0, 1, 1], [], []>} : vector<8x32xf32>, vector<32x128xf32>, vector<8x128xf32> -> vector<8x128xf32>
    %413 = arith.addf %411, %412 : vector<8x128xf32>
    %414 = arith.addf %413, %370 : vector<8x128xf32>
    %415 = arith.index_cast %c1_i32_105 : i32 to index
    %c0_113 = arith.constant 0 : index
    %c0_114 = arith.constant 0 : index
    %416 = vector.load %arg16[%415, %c0_113, %c0_114] : memref<8x8x128xf32, #tpu.memory_space<vmem>>, vector<1x8x128xf32>
    %417 = vector.shape_cast %416 : vector<1x8x128xf32> to vector<8x128xf32>
    %418 = vector.shape_cast %414 : vector<8x128xf32> to vector<1x8x128xf32>
    tpu.vector_store %arg16[%415, %c0_113, %c0_114], %418 {strides = array<i32>} : memref<8x8x128xf32, #tpu.memory_space<vmem>>, vector<1x8x128xf32>,
    %cst_115 = arith.constant 0xFF800000 : f32
    %419 = vector.broadcast %cst_115 : f32 to vector<8x128xf32>
    %420 = arith.select %373, %414, %419 : vector<8x128xi1>, vector<8x128xf32>
    %cst_116 = arith.constant dense<0xFF800000> : vector<8xf32>
    %421 = vector.multi_reduction <maximumf>, %420, %cst_116 [1] : vector<8x128xf32> to vector<8xf32>
    %422 = vector.shape_cast %421 : vector<8xf32> to vector<8x1xf32>
    %423 = vector.broadcast %422 : vector<8x1xf32> to vector<8x128xf32>
    %424 = arith.cmpf oeq, %420, %423 : vector<8x128xf32>
    %c128_i32 = arith.constant 128 : i32
    %425 = vector.broadcast %c128_i32 : i32 to vector<8x128xi32>
    %426 = arith.select %424, %371, %425 : vector<8x128xi1>, vector<8x128xi32>
    %cst_117 = arith.constant dense<2147483647> : vector<8xi32>
    %427 = vector.multi_reduction <minsi>, %426, %cst_117 [1] : vector<8x128xi32> to vector<8xi32>
    %428 = vector.shape_cast %427 : vector<8xi32> to vector<8x1xi32>
    %429 = vector.broadcast %428 : vector<8x1xi32> to vector<8x32xi32>
    %430 = arith.cmpi eq, %374, %429 : vector<8x32xi32>
    %431 = arith.extui %430 : vector<8x32xi1> to vector<8x32xi32>
    %432 = arith.sitofp %431 : vector<8x32xi32> to vector<8x32xf32>
    %cst_118 = arith.constant dense<0.000000e+00> : vector<8x16xf32>
    %433 = tpu.matmul %432, %360, %cst_118 {dimension_numbers = #tpu.dot_dimension_numbers<[1], [0], [0], [1], [0, 0, 1, 1], [], []>} : vector<8x32xf32>, vector<32x16xf32>, vector<8x16xf32> -> vector<8x16xf32>
    %c2_i32_119 = arith.constant 2 : i32
    %cst_120 = arith.constant dense<0.000000e+00> : vector<8x96xf32>
    %434 = tpu.matmul %433, %355, %cst_120 {dimension_numbers = #tpu.dot_dimension_numbers<[1], [0], [0], [1], [0, 0, 1, 1], [], []>} : vector<8x16xf32>, vector<16x96xf32>, vector<8x96xf32> -> vector<8x96xf32>
    %435 = arith.addf %434, %365 : vector<8x96xf32>
    %cst_121 = arith.constant dense<0.000000e+00> : vector<8x96xf32>
    %436 = tpu.matmul %410, %356, %cst_121 {dimension_numbers = #tpu.dot_dimension_numbers<[1], [0], [0], [1], [0, 0, 1, 1], [], []>} : vector<8x32xf32>, vector<32x96xf32>, vector<8x96xf32> -> vector<8x96xf32>
    %437 = vector.broadcast %357 : vector<1x96xf32> to vector<8x96xf32>
    %438 = arith.addf %436, %437 : vector<8x96xf32>
    %439 = vector.extract_strided_slice %435 {offsets = [0, 0], sizes = [8, 32], strides = [1, 1]} : vector<8x96xf32> to vector<8x32xf32>
    %440 = vector.extract_strided_slice %438 {offsets = [0, 0], sizes = [8, 32], strides = [1, 1]} : vector<8x96xf32> to vector<8x32xf32>
    %441 = arith.addf %439, %440 : vector<8x32xf32>
    %442 = arith.negf %441 : vector<8x32xf32>
    %443 = math.exp %442 : vector<8x32xf32>
    %cst_122 = arith.constant 1.000000e+00 : f32
    %444 = vector.broadcast %cst_122 : f32 to vector<8x32xf32>
    %445 = arith.addf %444, %443 : vector<8x32xf32>
    %446 = arith.divf %444, %445 : vector<8x32xf32>
    %447 = vector.extract_strided_slice %435 {offsets = [0, 32], sizes = [8, 32], strides = [1, 1]} : vector<8x96xf32> to vector<8x32xf32>
    %448 = vector.extract_strided_slice %438 {offsets = [0, 32], sizes = [8, 32], strides = [1, 1]} : vector<8x96xf32> to vector<8x32xf32>
    %449 = arith.addf %447, %448 : vector<8x32xf32>
    %450 = arith.negf %449 : vector<8x32xf32>
    %451 = math.exp %450 : vector<8x32xf32>
    %cst_123 = arith.constant 1.000000e+00 : f32
    %452 = vector.broadcast %cst_123 : f32 to vector<8x32xf32>
    %453 = arith.addf %452, %451 : vector<8x32xf32>
    %454 = arith.divf %452, %453 : vector<8x32xf32>
    %455 = vector.extract_strided_slice %435 {offsets = [0, 64], sizes = [8, 32], strides = [1, 1]} : vector<8x96xf32> to vector<8x32xf32>
    %456 = vector.extract_strided_slice %438 {offsets = [0, 64], sizes = [8, 32], strides = [1, 1]} : vector<8x96xf32> to vector<8x32xf32>
    %457 = arith.mulf %446, %456 : vector<8x32xf32>
    %458 = arith.addf %455, %457 : vector<8x32xf32>
    %459 = math.tanh %458 : vector<8x32xf32>
    %cst_124 = arith.constant 1.000000e+00 : f32
    %460 = vector.broadcast %cst_124 : f32 to vector<8x32xf32>
    %461 = arith.subf %460, %454 : vector<8x32xf32>
    %462 = arith.mulf %461, %459 : vector<8x32xf32>
    %463 = arith.mulf %454, %410 : vector<8x32xf32>
    %464 = arith.addf %462, %463 : vector<8x32xf32>
    %cst_125 = arith.constant dense<0.000000e+00> : vector<8x128xf32>
    %465 = tpu.matmul %433, %358, %cst_125 {dimension_numbers = #tpu.dot_dimension_numbers<[1], [0], [0], [1], [0, 0, 1, 1], [], []>} : vector<8x16xf32>, vector<16x128xf32>, vector<8x128xf32> -> vector<8x128xf32>
    %cst_126 = arith.constant dense<0.000000e+00> : vector<8x128xf32>
    %466 = tpu.matmul %464, %359, %cst_126 {dimension_numbers = #tpu.dot_dimension_numbers<[1], [0], [0], [1], [0, 0, 1, 1], [], []>} : vector<8x32xf32>, vector<32x128xf32>, vector<8x128xf32> -> vector<8x128xf32>
    %467 = arith.addf %465, %466 : vector<8x128xf32>
    %468 = arith.addf %467, %370 : vector<8x128xf32>
    %469 = arith.index_cast %c2_i32_119 : i32 to index
    %c0_127 = arith.constant 0 : index
    %c0_128 = arith.constant 0 : index
    %470 = vector.load %arg16[%469, %c0_127, %c0_128] : memref<8x8x128xf32, #tpu.memory_space<vmem>>, vector<1x8x128xf32>
    %471 = vector.shape_cast %470 : vector<1x8x128xf32> to vector<8x128xf32>
    %472 = vector.shape_cast %468 : vector<8x128xf32> to vector<1x8x128xf32>
    tpu.vector_store %arg16[%469, %c0_127, %c0_128], %472 {strides = array<i32>} : memref<8x8x128xf32, #tpu.memory_space<vmem>>, vector<1x8x128xf32>,
    %cst_129 = arith.constant 0xFF800000 : f32
    %473 = vector.broadcast %cst_129 : f32 to vector<8x128xf32>
    %474 = arith.select %373, %468, %473 : vector<8x128xi1>, vector<8x128xf32>
    %cst_130 = arith.constant dense<0xFF800000> : vector<8xf32>
    %475 = vector.multi_reduction <maximumf>, %474, %cst_130 [1] : vector<8x128xf32> to vector<8xf32>
    %476 = vector.shape_cast %475 : vector<8xf32> to vector<8x1xf32>
    %477 = vector.broadcast %476 : vector<8x1xf32> to vector<8x128xf32>
    %478 = arith.cmpf oeq, %474, %477 : vector<8x128xf32>
    %c128_i32_131 = arith.constant 128 : i32
    %479 = vector.broadcast %c128_i32_131 : i32 to vector<8x128xi32>
    %480 = arith.select %478, %371, %479 : vector<8x128xi1>, vector<8x128xi32>
    %cst_132 = arith.constant dense<2147483647> : vector<8xi32>
    %481 = vector.multi_reduction <minsi>, %480, %cst_132 [1] : vector<8x128xi32> to vector<8xi32>
    %482 = vector.shape_cast %481 : vector<8xi32> to vector<8x1xi32>
    %483 = vector.broadcast %482 : vector<8x1xi32> to vector<8x32xi32>
    %484 = arith.cmpi eq, %374, %483 : vector<8x32xi32>
    %485 = arith.extui %484 : vector<8x32xi1> to vector<8x32xi32>
    %486 = arith.sitofp %485 : vector<8x32xi32> to vector<8x32xf32>
    %cst_133 = arith.constant dense<0.000000e+00> : vector<8x16xf32>
    %487 = tpu.matmul %486, %360, %cst_133 {dimension_numbers = #tpu.dot_dimension_numbers<[1], [0], [0], [1], [0, 0, 1, 1], [], []>} : vector<8x32xf32>, vector<32x16xf32>, vector<8x16xf32> -> vector<8x16xf32>
    %c3_i32_134 = arith.constant 3 : i32
    %cst_135 = arith.constant dense<0.000000e+00> : vector<8x96xf32>
    %488 = tpu.matmul %487, %355, %cst_135 {dimension_numbers = #tpu.dot_dimension_numbers<[1], [0], [0], [1], [0, 0, 1, 1], [], []>} : vector<8x16xf32>, vector<16x96xf32>, vector<8x96xf32> -> vector<8x96xf32>
    %489 = arith.addf %488, %365 : vector<8x96xf32>
    %cst_136 = arith.constant dense<0.000000e+00> : vector<8x96xf32>
    %490 = tpu.matmul %464, %356, %cst_136 {dimension_numbers = #tpu.dot_dimension_numbers<[1], [0], [0], [1], [0, 0, 1, 1], [], []>} : vector<8x32xf32>, vector<32x96xf32>, vector<8x96xf32> -> vector<8x96xf32>
    %491 = vector.broadcast %357 : vector<1x96xf32> to vector<8x96xf32>
    %492 = arith.addf %490, %491 : vector<8x96xf32>
    %493 = vector.extract_strided_slice %489 {offsets = [0, 0], sizes = [8, 32], strides = [1, 1]} : vector<8x96xf32> to vector<8x32xf32>
    %494 = vector.extract_strided_slice %492 {offsets = [0, 0], sizes = [8, 32], strides = [1, 1]} : vector<8x96xf32> to vector<8x32xf32>
    %495 = arith.addf %493, %494 : vector<8x32xf32>
    %496 = arith.negf %495 : vector<8x32xf32>
    %497 = math.exp %496 : vector<8x32xf32>
    %cst_137 = arith.constant 1.000000e+00 : f32
    %498 = vector.broadcast %cst_137 : f32 to vector<8x32xf32>
    %499 = arith.addf %498, %497 : vector<8x32xf32>
    %500 = arith.divf %498, %499 : vector<8x32xf32>
    %501 = vector.extract_strided_slice %489 {offsets = [0, 32], sizes = [8, 32], strides = [1, 1]} : vector<8x96xf32> to vector<8x32xf32>
    %502 = vector.extract_strided_slice %492 {offsets = [0, 32], sizes = [8, 32], strides = [1, 1]} : vector<8x96xf32> to vector<8x32xf32>
    %503 = arith.addf %501, %502 : vector<8x32xf32>
    %504 = arith.negf %503 : vector<8x32xf32>
    %505 = math.exp %504 : vector<8x32xf32>
    %cst_138 = arith.constant 1.000000e+00 : f32
    %506 = vector.broadcast %cst_138 : f32 to vector<8x32xf32>
    %507 = arith.addf %506, %505 : vector<8x32xf32>
    %508 = arith.divf %506, %507 : vector<8x32xf32>
    %509 = vector.extract_strided_slice %489 {offsets = [0, 64], sizes = [8, 32], strides = [1, 1]} : vector<8x96xf32> to vector<8x32xf32>
    %510 = vector.extract_strided_slice %492 {offsets = [0, 64], sizes = [8, 32], strides = [1, 1]} : vector<8x96xf32> to vector<8x32xf32>
    %511 = arith.mulf %500, %510 : vector<8x32xf32>
    %512 = arith.addf %509, %511 : vector<8x32xf32>
    %513 = math.tanh %512 : vector<8x32xf32>
    %cst_139 = arith.constant 1.000000e+00 : f32
    %514 = vector.broadcast %cst_139 : f32 to vector<8x32xf32>
    %515 = arith.subf %514, %508 : vector<8x32xf32>
    %516 = arith.mulf %515, %513 : vector<8x32xf32>
    %517 = arith.mulf %508, %464 : vector<8x32xf32>
    %518 = arith.addf %516, %517 : vector<8x32xf32>
    %cst_140 = arith.constant dense<0.000000e+00> : vector<8x128xf32>
    %519 = tpu.matmul %487, %358, %cst_140 {dimension_numbers = #tpu.dot_dimension_numbers<[1], [0], [0], [1], [0, 0, 1, 1], [], []>} : vector<8x16xf32>, vector<16x128xf32>, vector<8x128xf32> -> vector<8x128xf32>
    %cst_141 = arith.constant dense<0.000000e+00> : vector<8x128xf32>
    %520 = tpu.matmul %518, %359, %cst_141 {dimension_numbers = #tpu.dot_dimension_numbers<[1], [0], [0], [1], [0, 0, 1, 1], [], []>} : vector<8x32xf32>, vector<32x128xf32>, vector<8x128xf32> -> vector<8x128xf32>
    %521 = arith.addf %519, %520 : vector<8x128xf32>
    %522 = arith.addf %521, %370 : vector<8x128xf32>
    %523 = arith.index_cast %c3_i32_134 : i32 to index
    %c0_142 = arith.constant 0 : index
    %c0_143 = arith.constant 0 : index
    %524 = vector.load %arg16[%523, %c0_142, %c0_143] : memref<8x8x128xf32, #tpu.memory_space<vmem>>, vector<1x8x128xf32>
    %525 = vector.shape_cast %524 : vector<1x8x128xf32> to vector<8x128xf32>
    %526 = vector.shape_cast %522 : vector<8x128xf32> to vector<1x8x128xf32>
    tpu.vector_store %arg16[%523, %c0_142, %c0_143], %526 {strides = array<i32>} : memref<8x8x128xf32, #tpu.memory_space<vmem>>, vector<1x8x128xf32>,
    %cst_144 = arith.constant 0xFF800000 : f32
    %527 = vector.broadcast %cst_144 : f32 to vector<8x128xf32>
    %528 = arith.select %373, %522, %527 : vector<8x128xi1>, vector<8x128xf32>
    %cst_145 = arith.constant dense<0xFF800000> : vector<8xf32>
    %529 = vector.multi_reduction <maximumf>, %528, %cst_145 [1] : vector<8x128xf32> to vector<8xf32>
    %530 = vector.shape_cast %529 : vector<8xf32> to vector<8x1xf32>
    %531 = vector.broadcast %530 : vector<8x1xf32> to vector<8x128xf32>
    %532 = arith.cmpf oeq, %528, %531 : vector<8x128xf32>
    %c128_i32_146 = arith.constant 128 : i32
    %533 = vector.broadcast %c128_i32_146 : i32 to vector<8x128xi32>
    %534 = arith.select %532, %371, %533 : vector<8x128xi1>, vector<8x128xi32>
    %cst_147 = arith.constant dense<2147483647> : vector<8xi32>
    %535 = vector.multi_reduction <minsi>, %534, %cst_147 [1] : vector<8x128xi32> to vector<8xi32>
    %536 = vector.shape_cast %535 : vector<8xi32> to vector<8x1xi32>
    %537 = vector.broadcast %536 : vector<8x1xi32> to vector<8x32xi32>
    %538 = arith.cmpi eq, %374, %537 : vector<8x32xi32>
    %539 = arith.extui %538 : vector<8x32xi1> to vector<8x32xi32>
    %540 = arith.sitofp %539 : vector<8x32xi32> to vector<8x32xf32>
    %cst_148 = arith.constant dense<0.000000e+00> : vector<8x16xf32>
    %541 = tpu.matmul %540, %360, %cst_148 {dimension_numbers = #tpu.dot_dimension_numbers<[1], [0], [0], [1], [0, 0, 1, 1], [], []>} : vector<8x32xf32>, vector<32x16xf32>, vector<8x16xf32> -> vector<8x16xf32>
    %c4_i32_149 = arith.constant 4 : i32
    %cst_150 = arith.constant dense<0.000000e+00> : vector<8x96xf32>
    %542 = tpu.matmul %541, %355, %cst_150 {dimension_numbers = #tpu.dot_dimension_numbers<[1], [0], [0], [1], [0, 0, 1, 1], [], []>} : vector<8x16xf32>, vector<16x96xf32>, vector<8x96xf32> -> vector<8x96xf32>
    %543 = arith.addf %542, %365 : vector<8x96xf32>
    %cst_151 = arith.constant dense<0.000000e+00> : vector<8x96xf32>
    %544 = tpu.matmul %518, %356, %cst_151 {dimension_numbers = #tpu.dot_dimension_numbers<[1], [0], [0], [1], [0, 0, 1, 1], [], []>} : vector<8x32xf32>, vector<32x96xf32>, vector<8x96xf32> -> vector<8x96xf32>
    %545 = vector.broadcast %357 : vector<1x96xf32> to vector<8x96xf32>
    %546 = arith.addf %544, %545 : vector<8x96xf32>
    %547 = vector.extract_strided_slice %543 {offsets = [0, 0], sizes = [8, 32], strides = [1, 1]} : vector<8x96xf32> to vector<8x32xf32>
    %548 = vector.extract_strided_slice %546 {offsets = [0, 0], sizes = [8, 32], strides = [1, 1]} : vector<8x96xf32> to vector<8x32xf32>
    %549 = arith.addf %547, %548 : vector<8x32xf32>
    %550 = arith.negf %549 : vector<8x32xf32>
    %551 = math.exp %550 : vector<8x32xf32>
    %cst_152 = arith.constant 1.000000e+00 : f32
    %552 = vector.broadcast %cst_152 : f32 to vector<8x32xf32>
    %553 = arith.addf %552, %551 : vector<8x32xf32>
    %554 = arith.divf %552, %553 : vector<8x32xf32>
    %555 = vector.extract_strided_slice %543 {offsets = [0, 32], sizes = [8, 32], strides = [1, 1]} : vector<8x96xf32> to vector<8x32xf32>
    %556 = vector.extract_strided_slice %546 {offsets = [0, 32], sizes = [8, 32], strides = [1, 1]} : vector<8x96xf32> to vector<8x32xf32>
    %557 = arith.addf %555, %556 : vector<8x32xf32>
    %558 = arith.negf %557 : vector<8x32xf32>
    %559 = math.exp %558 : vector<8x32xf32>
    %cst_153 = arith.constant 1.000000e+00 : f32
    %560 = vector.broadcast %cst_153 : f32 to vector<8x32xf32>
    %561 = arith.addf %560, %559 : vector<8x32xf32>
    %562 = arith.divf %560, %561 : vector<8x32xf32>
    %563 = vector.extract_strided_slice %543 {offsets = [0, 64], sizes = [8, 32], strides = [1, 1]} : vector<8x96xf32> to vector<8x32xf32>
    %564 = vector.extract_strided_slice %546 {offsets = [0, 64], sizes = [8, 32], strides = [1, 1]} : vector<8x96xf32> to vector<8x32xf32>
    %565 = arith.mulf %554, %564 : vector<8x32xf32>
    %566 = arith.addf %563, %565 : vector<8x32xf32>
    %567 = math.tanh %566 : vector<8x32xf32>
    %cst_154 = arith.constant 1.000000e+00 : f32
    %568 = vector.broadcast %cst_154 : f32 to vector<8x32xf32>
    %569 = arith.subf %568, %562 : vector<8x32xf32>
    %570 = arith.mulf %569, %567 : vector<8x32xf32>
    %571 = arith.mulf %562, %518 : vector<8x32xf32>
    %572 = arith.addf %570, %571 : vector<8x32xf32>
    %cst_155 = arith.constant dense<0.000000e+00> : vector<8x128xf32>
    %573 = tpu.matmul %541, %358, %cst_155 {dimension_numbers = #tpu.dot_dimension_numbers<[1], [0], [0], [1], [0, 0, 1, 1], [], []>} : vector<8x16xf32>, vector<16x128xf32>, vector<8x128xf32> -> vector<8x128xf32>
    %cst_156 = arith.constant dense<0.000000e+00> : vector<8x128xf32>
    %574 = tpu.matmul %572, %359, %cst_156 {dimension_numbers = #tpu.dot_dimension_numbers<[1], [0], [0], [1], [0, 0, 1, 1], [], []>} : vector<8x32xf32>, vector<32x128xf32>, vector<8x128xf32> -> vector<8x128xf32>
    %575 = arith.addf %573, %574 : vector<8x128xf32>
    %576 = arith.addf %575, %370 : vector<8x128xf32>
    %577 = arith.index_cast %c4_i32_149 : i32 to index
    %c0_157 = arith.constant 0 : index
    %c0_158 = arith.constant 0 : index
    %578 = vector.load %arg16[%577, %c0_157, %c0_158] : memref<8x8x128xf32, #tpu.memory_space<vmem>>, vector<1x8x128xf32>
    %579 = vector.shape_cast %578 : vector<1x8x128xf32> to vector<8x128xf32>
    %580 = vector.shape_cast %576 : vector<8x128xf32> to vector<1x8x128xf32>
    tpu.vector_store %arg16[%577, %c0_157, %c0_158], %580 {strides = array<i32>} : memref<8x8x128xf32, #tpu.memory_space<vmem>>, vector<1x8x128xf32>,
    %cst_159 = arith.constant 0xFF800000 : f32
    %581 = vector.broadcast %cst_159 : f32 to vector<8x128xf32>
    %582 = arith.select %373, %576, %581 : vector<8x128xi1>, vector<8x128xf32>
    %cst_160 = arith.constant dense<0xFF800000> : vector<8xf32>
    %583 = vector.multi_reduction <maximumf>, %582, %cst_160 [1] : vector<8x128xf32> to vector<8xf32>
    %584 = vector.shape_cast %583 : vector<8xf32> to vector<8x1xf32>
    %585 = vector.broadcast %584 : vector<8x1xf32> to vector<8x128xf32>
    %586 = arith.cmpf oeq, %582, %585 : vector<8x128xf32>
    %c128_i32_161 = arith.constant 128 : i32
    %587 = vector.broadcast %c128_i32_161 : i32 to vector<8x128xi32>
    %588 = arith.select %586, %371, %587 : vector<8x128xi1>, vector<8x128xi32>
    %cst_162 = arith.constant dense<2147483647> : vector<8xi32>
    %589 = vector.multi_reduction <minsi>, %588, %cst_162 [1] : vector<8x128xi32> to vector<8xi32>
    %590 = vector.shape_cast %589 : vector<8xi32> to vector<8x1xi32>
    %591 = vector.broadcast %590 : vector<8x1xi32> to vector<8x32xi32>
    %592 = arith.cmpi eq, %374, %591 : vector<8x32xi32>
    %593 = arith.extui %592 : vector<8x32xi1> to vector<8x32xi32>
    %594 = arith.sitofp %593 : vector<8x32xi32> to vector<8x32xf32>
    %cst_163 = arith.constant dense<0.000000e+00> : vector<8x16xf32>
    %595 = tpu.matmul %594, %360, %cst_163 {dimension_numbers = #tpu.dot_dimension_numbers<[1], [0], [0], [1], [0, 0, 1, 1], [], []>} : vector<8x32xf32>, vector<32x16xf32>, vector<8x16xf32> -> vector<8x16xf32>
    %c5_i32_164 = arith.constant 5 : i32
    %cst_165 = arith.constant dense<0.000000e+00> : vector<8x96xf32>
    %596 = tpu.matmul %595, %355, %cst_165 {dimension_numbers = #tpu.dot_dimension_numbers<[1], [0], [0], [1], [0, 0, 1, 1], [], []>} : vector<8x16xf32>, vector<16x96xf32>, vector<8x96xf32> -> vector<8x96xf32>
    %597 = arith.addf %596, %365 : vector<8x96xf32>
    %cst_166 = arith.constant dense<0.000000e+00> : vector<8x96xf32>
    %598 = tpu.matmul %572, %356, %cst_166 {dimension_numbers = #tpu.dot_dimension_numbers<[1], [0], [0], [1], [0, 0, 1, 1], [], []>} : vector<8x32xf32>, vector<32x96xf32>, vector<8x96xf32> -> vector<8x96xf32>
    %599 = vector.broadcast %357 : vector<1x96xf32> to vector<8x96xf32>
    %600 = arith.addf %598, %599 : vector<8x96xf32>
    %601 = vector.extract_strided_slice %597 {offsets = [0, 0], sizes = [8, 32], strides = [1, 1]} : vector<8x96xf32> to vector<8x32xf32>
    %602 = vector.extract_strided_slice %600 {offsets = [0, 0], sizes = [8, 32], strides = [1, 1]} : vector<8x96xf32> to vector<8x32xf32>
    %603 = arith.addf %601, %602 : vector<8x32xf32>
    %604 = arith.negf %603 : vector<8x32xf32>
    %605 = math.exp %604 : vector<8x32xf32>
    %cst_167 = arith.constant 1.000000e+00 : f32
    %606 = vector.broadcast %cst_167 : f32 to vector<8x32xf32>
    %607 = arith.addf %606, %605 : vector<8x32xf32>
    %608 = arith.divf %606, %607 : vector<8x32xf32>
    %609 = vector.extract_strided_slice %597 {offsets = [0, 32], sizes = [8, 32], strides = [1, 1]} : vector<8x96xf32> to vector<8x32xf32>
    %610 = vector.extract_strided_slice %600 {offsets = [0, 32], sizes = [8, 32], strides = [1, 1]} : vector<8x96xf32> to vector<8x32xf32>
    %611 = arith.addf %609, %610 : vector<8x32xf32>
    %612 = arith.negf %611 : vector<8x32xf32>
    %613 = math.exp %612 : vector<8x32xf32>
    %cst_168 = arith.constant 1.000000e+00 : f32
    %614 = vector.broadcast %cst_168 : f32 to vector<8x32xf32>
    %615 = arith.addf %614, %613 : vector<8x32xf32>
    %616 = arith.divf %614, %615 : vector<8x32xf32>
    %617 = vector.extract_strided_slice %597 {offsets = [0, 64], sizes = [8, 32], strides = [1, 1]} : vector<8x96xf32> to vector<8x32xf32>
    %618 = vector.extract_strided_slice %600 {offsets = [0, 64], sizes = [8, 32], strides = [1, 1]} : vector<8x96xf32> to vector<8x32xf32>
    %619 = arith.mulf %608, %618 : vector<8x32xf32>
    %620 = arith.addf %617, %619 : vector<8x32xf32>
    %621 = math.tanh %620 : vector<8x32xf32>
    %cst_169 = arith.constant 1.000000e+00 : f32
    %622 = vector.broadcast %cst_169 : f32 to vector<8x32xf32>
    %623 = arith.subf %622, %616 : vector<8x32xf32>
    %624 = arith.mulf %623, %621 : vector<8x32xf32>
    %625 = arith.mulf %616, %572 : vector<8x32xf32>
    %626 = arith.addf %624, %625 : vector<8x32xf32>
    %cst_170 = arith.constant dense<0.000000e+00> : vector<8x128xf32>
    %627 = tpu.matmul %595, %358, %cst_170 {dimension_numbers = #tpu.dot_dimension_numbers<[1], [0], [0], [1], [0, 0, 1, 1], [], []>} : vector<8x16xf32>, vector<16x128xf32>, vector<8x128xf32> -> vector<8x128xf32>
    %cst_171 = arith.constant dense<0.000000e+00> : vector<8x128xf32>
    %628 = tpu.matmul %626, %359, %cst_171 {dimension_numbers = #tpu.dot_dimension_numbers<[1], [0], [0], [1], [0, 0, 1, 1], [], []>} : vector<8x32xf32>, vector<32x128xf32>, vector<8x128xf32> -> vector<8x128xf32>
    %629 = arith.addf %627, %628 : vector<8x128xf32>
    %630 = arith.addf %629, %370 : vector<8x128xf32>
    %631 = arith.index_cast %c5_i32_164 : i32 to index
    %c0_172 = arith.constant 0 : index
    %c0_173 = arith.constant 0 : index
    %632 = vector.load %arg16[%631, %c0_172, %c0_173] : memref<8x8x128xf32, #tpu.memory_space<vmem>>, vector<1x8x128xf32>
    %633 = vector.shape_cast %632 : vector<1x8x128xf32> to vector<8x128xf32>
    %634 = vector.shape_cast %630 : vector<8x128xf32> to vector<1x8x128xf32>
    tpu.vector_store %arg16[%631, %c0_172, %c0_173], %634 {strides = array<i32>} : memref<8x8x128xf32, #tpu.memory_space<vmem>>, vector<1x8x128xf32>,
    %cst_174 = arith.constant 0xFF800000 : f32
    %635 = vector.broadcast %cst_174 : f32 to vector<8x128xf32>
    %636 = arith.select %373, %630, %635 : vector<8x128xi1>, vector<8x128xf32>
    %cst_175 = arith.constant dense<0xFF800000> : vector<8xf32>
    %637 = vector.multi_reduction <maximumf>, %636, %cst_175 [1] : vector<8x128xf32> to vector<8xf32>
    %638 = vector.shape_cast %637 : vector<8xf32> to vector<8x1xf32>
    %639 = vector.broadcast %638 : vector<8x1xf32> to vector<8x128xf32>
    %640 = arith.cmpf oeq, %636, %639 : vector<8x128xf32>
    %c128_i32_176 = arith.constant 128 : i32
    %641 = vector.broadcast %c128_i32_176 : i32 to vector<8x128xi32>
    %642 = arith.select %640, %371, %641 : vector<8x128xi1>, vector<8x128xi32>
    %cst_177 = arith.constant dense<2147483647> : vector<8xi32>
    %643 = vector.multi_reduction <minsi>, %642, %cst_177 [1] : vector<8x128xi32> to vector<8xi32>
    %644 = vector.shape_cast %643 : vector<8xi32> to vector<8x1xi32>
    %645 = vector.broadcast %644 : vector<8x1xi32> to vector<8x32xi32>
    %646 = arith.cmpi eq, %374, %645 : vector<8x32xi32>
    %647 = arith.extui %646 : vector<8x32xi1> to vector<8x32xi32>
    %648 = arith.sitofp %647 : vector<8x32xi32> to vector<8x32xf32>
    %cst_178 = arith.constant dense<0.000000e+00> : vector<8x16xf32>
    %649 = tpu.matmul %648, %360, %cst_178 {dimension_numbers = #tpu.dot_dimension_numbers<[1], [0], [0], [1], [0, 0, 1, 1], [], []>} : vector<8x32xf32>, vector<32x16xf32>, vector<8x16xf32> -> vector<8x16xf32>
    %c6_i32_179 = arith.constant 6 : i32
    %cst_180 = arith.constant dense<0.000000e+00> : vector<8x96xf32>
    %650 = tpu.matmul %649, %355, %cst_180 {dimension_numbers = #tpu.dot_dimension_numbers<[1], [0], [0], [1], [0, 0, 1, 1], [], []>} : vector<8x16xf32>, vector<16x96xf32>, vector<8x96xf32> -> vector<8x96xf32>
    %651 = arith.addf %650, %365 : vector<8x96xf32>
    %cst_181 = arith.constant dense<0.000000e+00> : vector<8x96xf32>
    %652 = tpu.matmul %626, %356, %cst_181 {dimension_numbers = #tpu.dot_dimension_numbers<[1], [0], [0], [1], [0, 0, 1, 1], [], []>} : vector<8x32xf32>, vector<32x96xf32>, vector<8x96xf32> -> vector<8x96xf32>
    %653 = vector.broadcast %357 : vector<1x96xf32> to vector<8x96xf32>
    %654 = arith.addf %652, %653 : vector<8x96xf32>
    %655 = vector.extract_strided_slice %651 {offsets = [0, 0], sizes = [8, 32], strides = [1, 1]} : vector<8x96xf32> to vector<8x32xf32>
    %656 = vector.extract_strided_slice %654 {offsets = [0, 0], sizes = [8, 32], strides = [1, 1]} : vector<8x96xf32> to vector<8x32xf32>
    %657 = arith.addf %655, %656 : vector<8x32xf32>
    %658 = arith.negf %657 : vector<8x32xf32>
    %659 = math.exp %658 : vector<8x32xf32>
    %cst_182 = arith.constant 1.000000e+00 : f32
    %660 = vector.broadcast %cst_182 : f32 to vector<8x32xf32>
    %661 = arith.addf %660, %659 : vector<8x32xf32>
    %662 = arith.divf %660, %661 : vector<8x32xf32>
    %663 = vector.extract_strided_slice %651 {offsets = [0, 32], sizes = [8, 32], strides = [1, 1]} : vector<8x96xf32> to vector<8x32xf32>
    %664 = vector.extract_strided_slice %654 {offsets = [0, 32], sizes = [8, 32], strides = [1, 1]} : vector<8x96xf32> to vector<8x32xf32>
    %665 = arith.addf %663, %664 : vector<8x32xf32>
    %666 = arith.negf %665 : vector<8x32xf32>
    %667 = math.exp %666 : vector<8x32xf32>
    %cst_183 = arith.constant 1.000000e+00 : f32
    %668 = vector.broadcast %cst_183 : f32 to vector<8x32xf32>
    %669 = arith.addf %668, %667 : vector<8x32xf32>
    %670 = arith.divf %668, %669 : vector<8x32xf32>
    %671 = vector.extract_strided_slice %651 {offsets = [0, 64], sizes = [8, 32], strides = [1, 1]} : vector<8x96xf32> to vector<8x32xf32>
    %672 = vector.extract_strided_slice %654 {offsets = [0, 64], sizes = [8, 32], strides = [1, 1]} : vector<8x96xf32> to vector<8x32xf32>
    %673 = arith.mulf %662, %672 : vector<8x32xf32>
    %674 = arith.addf %671, %673 : vector<8x32xf32>
    %675 = math.tanh %674 : vector<8x32xf32>
    %cst_184 = arith.constant 1.000000e+00 : f32
    %676 = vector.broadcast %cst_184 : f32 to vector<8x32xf32>
    %677 = arith.subf %676, %670 : vector<8x32xf32>
    %678 = arith.mulf %677, %675 : vector<8x32xf32>
    %679 = arith.mulf %670, %626 : vector<8x32xf32>
    %680 = arith.addf %678, %679 : vector<8x32xf32>
    %cst_185 = arith.constant dense<0.000000e+00> : vector<8x128xf32>
    %681 = tpu.matmul %649, %358, %cst_185 {dimension_numbers = #tpu.dot_dimension_numbers<[1], [0], [0], [1], [0, 0, 1, 1], [], []>} : vector<8x16xf32>, vector<16x128xf32>, vector<8x128xf32> -> vector<8x128xf32>
    %cst_186 = arith.constant dense<0.000000e+00> : vector<8x128xf32>
    %682 = tpu.matmul %680, %359, %cst_186 {dimension_numbers = #tpu.dot_dimension_numbers<[1], [0], [0], [1], [0, 0, 1, 1], [], []>} : vector<8x32xf32>, vector<32x128xf32>, vector<8x128xf32> -> vector<8x128xf32>
    %683 = arith.addf %681, %682 : vector<8x128xf32>
    %684 = arith.addf %683, %370 : vector<8x128xf32>
    %685 = arith.index_cast %c6_i32_179 : i32 to index
    %c0_187 = arith.constant 0 : index
    %c0_188 = arith.constant 0 : index
    %686 = vector.load %arg16[%685, %c0_187, %c0_188] : memref<8x8x128xf32, #tpu.memory_space<vmem>>, vector<1x8x128xf32>
    %687 = vector.shape_cast %686 : vector<1x8x128xf32> to vector<8x128xf32>
    %688 = vector.shape_cast %684 : vector<8x128xf32> to vector<1x8x128xf32>
    tpu.vector_store %arg16[%685, %c0_187, %c0_188], %688 {strides = array<i32>} : memref<8x8x128xf32, #tpu.memory_space<vmem>>, vector<1x8x128xf32>,
    %cst_189 = arith.constant 0xFF800000 : f32
    %689 = vector.broadcast %cst_189 : f32 to vector<8x128xf32>
    %690 = arith.select %373, %684, %689 : vector<8x128xi1>, vector<8x128xf32>
    %cst_190 = arith.constant dense<0xFF800000> : vector<8xf32>
    %691 = vector.multi_reduction <maximumf>, %690, %cst_190 [1] : vector<8x128xf32> to vector<8xf32>
    %692 = vector.shape_cast %691 : vector<8xf32> to vector<8x1xf32>
    %693 = vector.broadcast %692 : vector<8x1xf32> to vector<8x128xf32>
    %694 = arith.cmpf oeq, %690, %693 : vector<8x128xf32>
    %c128_i32_191 = arith.constant 128 : i32
    %695 = vector.broadcast %c128_i32_191 : i32 to vector<8x128xi32>
    %696 = arith.select %694, %371, %695 : vector<8x128xi1>, vector<8x128xi32>
    %cst_192 = arith.constant dense<2147483647> : vector<8xi32>
    %697 = vector.multi_reduction <minsi>, %696, %cst_192 [1] : vector<8x128xi32> to vector<8xi32>
    %698 = vector.shape_cast %697 : vector<8xi32> to vector<8x1xi32>
    %699 = vector.broadcast %698 : vector<8x1xi32> to vector<8x32xi32>
    %700 = arith.cmpi eq, %374, %699 : vector<8x32xi32>
    %701 = arith.extui %700 : vector<8x32xi1> to vector<8x32xi32>
    %702 = arith.sitofp %701 : vector<8x32xi32> to vector<8x32xf32>
    %cst_193 = arith.constant dense<0.000000e+00> : vector<8x16xf32>
    %703 = tpu.matmul %702, %360, %cst_193 {dimension_numbers = #tpu.dot_dimension_numbers<[1], [0], [0], [1], [0, 0, 1, 1], [], []>} : vector<8x32xf32>, vector<32x16xf32>, vector<8x16xf32> -> vector<8x16xf32>
    %c7_i32_194 = arith.constant 7 : i32
    %cst_195 = arith.constant dense<0.000000e+00> : vector<8x96xf32>
    %704 = tpu.matmul %703, %355, %cst_195 {dimension_numbers = #tpu.dot_dimension_numbers<[1], [0], [0], [1], [0, 0, 1, 1], [], []>} : vector<8x16xf32>, vector<16x96xf32>, vector<8x96xf32> -> vector<8x96xf32>
    %705 = arith.addf %704, %365 : vector<8x96xf32>
    %cst_196 = arith.constant dense<0.000000e+00> : vector<8x96xf32>
    %706 = tpu.matmul %680, %356, %cst_196 {dimension_numbers = #tpu.dot_dimension_numbers<[1], [0], [0], [1], [0, 0, 1, 1], [], []>} : vector<8x32xf32>, vector<32x96xf32>, vector<8x96xf32> -> vector<8x96xf32>
    %707 = vector.broadcast %357 : vector<1x96xf32> to vector<8x96xf32>
    %708 = arith.addf %706, %707 : vector<8x96xf32>
    %709 = vector.extract_strided_slice %705 {offsets = [0, 0], sizes = [8, 32], strides = [1, 1]} : vector<8x96xf32> to vector<8x32xf32>
    %710 = vector.extract_strided_slice %708 {offsets = [0, 0], sizes = [8, 32], strides = [1, 1]} : vector<8x96xf32> to vector<8x32xf32>
    %711 = arith.addf %709, %710 : vector<8x32xf32>
    %712 = arith.negf %711 : vector<8x32xf32>
    %713 = math.exp %712 : vector<8x32xf32>
    %cst_197 = arith.constant 1.000000e+00 : f32
    %714 = vector.broadcast %cst_197 : f32 to vector<8x32xf32>
    %715 = arith.addf %714, %713 : vector<8x32xf32>
    %716 = arith.divf %714, %715 : vector<8x32xf32>
    %717 = vector.extract_strided_slice %705 {offsets = [0, 32], sizes = [8, 32], strides = [1, 1]} : vector<8x96xf32> to vector<8x32xf32>
    %718 = vector.extract_strided_slice %708 {offsets = [0, 32], sizes = [8, 32], strides = [1, 1]} : vector<8x96xf32> to vector<8x32xf32>
    %719 = arith.addf %717, %718 : vector<8x32xf32>
    %720 = arith.negf %719 : vector<8x32xf32>
    %721 = math.exp %720 : vector<8x32xf32>
    %cst_198 = arith.constant 1.000000e+00 : f32
    %722 = vector.broadcast %cst_198 : f32 to vector<8x32xf32>
    %723 = arith.addf %722, %721 : vector<8x32xf32>
    %724 = arith.divf %722, %723 : vector<8x32xf32>
    %725 = vector.extract_strided_slice %705 {offsets = [0, 64], sizes = [8, 32], strides = [1, 1]} : vector<8x96xf32> to vector<8x32xf32>
    %726 = vector.extract_strided_slice %708 {offsets = [0, 64], sizes = [8, 32], strides = [1, 1]} : vector<8x96xf32> to vector<8x32xf32>
    %727 = arith.mulf %716, %726 : vector<8x32xf32>
    %728 = arith.addf %725, %727 : vector<8x32xf32>
    %729 = math.tanh %728 : vector<8x32xf32>
    %cst_199 = arith.constant 1.000000e+00 : f32
    %730 = vector.broadcast %cst_199 : f32 to vector<8x32xf32>
    %731 = arith.subf %730, %724 : vector<8x32xf32>
    %732 = arith.mulf %731, %729 : vector<8x32xf32>
    %733 = arith.mulf %724, %680 : vector<8x32xf32>
    %734 = arith.addf %732, %733 : vector<8x32xf32>
    %cst_200 = arith.constant dense<0.000000e+00> : vector<8x128xf32>
    %735 = tpu.matmul %703, %358, %cst_200 {dimension_numbers = #tpu.dot_dimension_numbers<[1], [0], [0], [1], [0, 0, 1, 1], [], []>} : vector<8x16xf32>, vector<16x128xf32>, vector<8x128xf32> -> vector<8x128xf32>
    %cst_201 = arith.constant dense<0.000000e+00> : vector<8x128xf32>
    %736 = tpu.matmul %734, %359, %cst_201 {dimension_numbers = #tpu.dot_dimension_numbers<[1], [0], [0], [1], [0, 0, 1, 1], [], []>} : vector<8x32xf32>, vector<32x128xf32>, vector<8x128xf32> -> vector<8x128xf32>
    %737 = arith.addf %735, %736 : vector<8x128xf32>
    %738 = arith.addf %737, %370 : vector<8x128xf32>
    %739 = arith.index_cast %c7_i32_194 : i32 to index
    %c0_202 = arith.constant 0 : index
    %c0_203 = arith.constant 0 : index
    %740 = vector.load %arg16[%739, %c0_202, %c0_203] : memref<8x8x128xf32, #tpu.memory_space<vmem>>, vector<1x8x128xf32>
    %741 = vector.shape_cast %740 : vector<1x8x128xf32> to vector<8x128xf32>
    %742 = vector.shape_cast %738 : vector<8x128xf32> to vector<1x8x128xf32>
    tpu.vector_store %arg16[%739, %c0_202, %c0_203], %742 {strides = array<i32>} : memref<8x8x128xf32, #tpu.memory_space<vmem>>, vector<1x8x128xf32>,
    %cst_204 = arith.constant 0xFF800000 : f32
    %743 = vector.broadcast %cst_204 : f32 to vector<8x128xf32>
    %744 = arith.select %373, %738, %743 : vector<8x128xi1>, vector<8x128xf32>
    %cst_205 = arith.constant dense<0xFF800000> : vector<8xf32>
    %745 = vector.multi_reduction <maximumf>, %744, %cst_205 [1] : vector<8x128xf32> to vector<8xf32>
    %746 = vector.shape_cast %745 : vector<8xf32> to vector<8x1xf32>
    %747 = vector.broadcast %746 : vector<8x1xf32> to vector<8x128xf32>
    %748 = arith.cmpf oeq, %744, %747 : vector<8x128xf32>
    %c128_i32_206 = arith.constant 128 : i32
    %749 = vector.broadcast %c128_i32_206 : i32 to vector<8x128xi32>
    %750 = arith.select %748, %371, %749 : vector<8x128xi1>, vector<8x128xi32>
    %cst_207 = arith.constant dense<2147483647> : vector<8xi32>
    %751 = vector.multi_reduction <minsi>, %750, %cst_207 [1] : vector<8x128xi32> to vector<8xi32>
    %752 = vector.shape_cast %751 : vector<8xi32> to vector<8x1xi32>
    %753 = vector.broadcast %752 : vector<8x1xi32> to vector<8x32xi32>
    %754 = arith.cmpi eq, %374, %753 : vector<8x32xi32>
    %755 = arith.extui %754 : vector<8x32xi1> to vector<8x32xi32>
    %756 = arith.sitofp %755 : vector<8x32xi32> to vector<8x32xf32>
    %cst_208 = arith.constant dense<0.000000e+00> : vector<8x16xf32>
    %757 = tpu.matmul %756, %360, %cst_208 {dimension_numbers = #tpu.dot_dimension_numbers<[1], [0], [0], [1], [0, 0, 1, 1], [], []>} : vector<8x32xf32>, vector<32x16xf32>, vector<8x16xf32> -> vector<8x16xf32>
    %c7_i32_209 = arith.constant 7 : i32
    return
  }
}

</mosaic_0001>

<llo_original>
// kernel: naive_model_forward.1
$region0: #{naive_model_forward.1}
  #allocation0 [shape = 'u32[]', space=smem, size = 0x4, offset = 0x4, fixed_abs, tag = 'smem constant byte address 0x4 - core index']
  #allocation1 [shape = 'u32[72,128]{1,0:T(1,128)}', space=vmem, size = 0x9000, scoped, tag = 'internal scratch']
  %s0 = inlined_call_operand.vmem [shape: f32[10,8,16], index: 0, kind: input, shape index: {}]
  %s1 = inlined_call_operand.vmem [shape: f32[8,16], index: 1, kind: input, shape index: {}]
  %s2 = inlined_call_operand.vmem [shape: f32[32,16], index: 2, kind: input, shape index: {}]
  %s3 = inlined_call_operand.vmem [shape: f32[16,96], index: 3, kind: input, shape index: {}]
  %s4 = inlined_call_operand.vmem [shape: f32[32,96], index: 4, kind: input, shape index: {}]
  %s5 = inlined_call_operand.vmem [shape: f32[1,96], index: 5, kind: input, shape index: {}]
  %s6 = inlined_call_operand.vmem [shape: f32[1,96], index: 6, kind: input, shape index: {}]
  %s7 = inlined_call_operand.vmem [shape: f32[16,96], index: 7, kind: input, shape index: {}]
  %s8 = inlined_call_operand.vmem [shape: f32[32,96], index: 8, kind: input, shape index: {}]
  %s9 = inlined_call_operand.vmem [shape: f32[32,96], index: 9, kind: input, shape index: {}]
  %s10 = inlined_call_operand.vmem [shape: f32[1,96], index: 10, kind: input, shape index: {}]
  %s11 = inlined_call_operand.vmem [shape: f32[1,96], index: 11, kind: input, shape index: {}]
  %s12 = inlined_call_operand.vmem [shape: f32[16,128], index: 12, kind: input, shape index: {}]
  %s13 = inlined_call_operand.vmem [shape: f32[32,128], index: 13, kind: input, shape index: {}]
  %s14 = inlined_call_operand.vmem [shape: f32[32,128], index: 14, kind: input, shape index: {}]
  %s15 = inlined_call_operand.vmem [shape: f32[1,128], index: 15, kind: input, shape index: {}]
  %s16 = inlined_call_operand.vmem [shape: f32[8,8,128], index: 16, kind: output, shape index: {}]
  %s17 = sld [smem:[#allocation0]]
  $region74: #{naive_model_forward.1} parent=0
    _
  %s19 = ssub.s32 1, %s17
  %s20 = scalar_select 0, %s19, %s17
  // Predicated region
  $region2: #{naive_model_forward.1} parent=0 // pred_check
    _
  $region3: #{naive_model_forward.1} parent=0 // pred_check_branch
    %22 = sbr.rel (0) target = $region5
  $region4: #{naive_model_forward.1} parent=0 // pred_region
    _
  $region5: #{naive_model_forward.1} parent=0 // pred_fallthru
    _
  // Predicated region
  $region6: #{naive_model_forward.1} parent=0 // pred_check
    _
  $region7: #{naive_model_forward.1} parent=0 // pred_check_branch
    %24 = sbr.rel (0) target = $region9
  $region8: #{naive_model_forward.1} parent=0 // pred_region
    _
  $region9: #{naive_model_forward.1} parent=0 // pred_fallthru
    _
  // Predicated region
  $region10: #{naive_model_forward.1} parent=0 // pred_check
    _
  $region11: #{naive_model_forward.1} parent=0 // pred_check_branch
    %26 = sbr.rel (0) target = $region13
  $region12: #{naive_model_forward.1} parent=0 // pred_region
    _
  $region13: #{naive_model_forward.1} parent=0 // pred_fallthru
    _
  // Predicated region
  $region14: #{naive_model_forward.1} parent=0 // pred_check
    _
  $region15: #{naive_model_forward.1} parent=0 // pred_check_branch
    %28 = sbr.rel (0) target = $region17
  $region16: #{naive_model_forward.1} parent=0 // pred_region
    _
  $region17: #{naive_model_forward.1} parent=0 // pred_fallthru
    _
  // Predicated region
  $region18: #{naive_model_forward.1} parent=0 // pred_check
    _
  $region19: #{naive_model_forward.1} parent=0 // pred_check_branch
    %30 = sbr.rel (0) target = $region21
  $region20: #{naive_model_forward.1} parent=0 // pred_region
    _
  $region21: #{naive_model_forward.1} parent=0 // pred_fallthru
    _
  // Predicated region
  $region22: #{naive_model_forward.1} parent=0 // pred_check
    _
  $region23: #{naive_model_forward.1} parent=0 // pred_check_branch
    %32 = sbr.rel (0) target = $region25
  $region24: #{naive_model_forward.1} parent=0 // pred_region
    _
  $region25: #{naive_model_forward.1} parent=0 // pred_fallthru
    _
  // Predicated region
  $region26: #{naive_model_forward.1} parent=0 // pred_check
    _
  $region27: #{naive_model_forward.1} parent=0 // pred_check_branch
    %34 = sbr.rel (0) target = $region29
  $region28: #{naive_model_forward.1} parent=0 // pred_region
    _
  $region29: #{naive_model_forward.1} parent=0 // pred_fallthru
    _
  // Predicated region
  $region30: #{naive_model_forward.1} parent=0 // pred_check
    _
  $region31: #{naive_model_forward.1} parent=0 // pred_check_branch
    %36 = sbr.rel (0) target = $region33
  $region32: #{naive_model_forward.1} parent=0 // pred_region
    _
  $region33: #{naive_model_forward.1} parent=0 // pred_fallthru
    _
  // Predicated region
  $region34: #{naive_model_forward.1} parent=0 // pred_check
    _
  $region35: #{naive_model_forward.1} parent=0 // pred_check_branch
    %38 = sbr.rel (0) target = $region37
  $region36: #{naive_model_forward.1} parent=0 // pred_region
    _
  $region37: #{naive_model_forward.1} parent=0 // pred_fallthru
    _
  // Predicated region
  $region38: #{naive_model_forward.1} parent=0 // pred_check
    _
  $region39: #{naive_model_forward.1} parent=0 // pred_check_branch
    %40 = sbr.rel (0) target = $region41
  $region40: #{naive_model_forward.1} parent=0 // pred_region
    _
  $region41: #{naive_model_forward.1} parent=0 // pred_fallthru
    _
  // Predicated region
  $region42: #{naive_model_forward.1} parent=0 // pred_check
    _
  $region43: #{naive_model_forward.1} parent=0 // pred_check_branch
    %42 = sbr.rel (0) target = $region45
  $region44: #{naive_model_forward.1} parent=0 // pred_region
    _
  $region45: #{naive_model_forward.1} parent=0 // pred_fallthru
    _
  // Predicated region
  $region46: #{naive_model_forward.1} parent=0 // pred_check
    _
  $region47: #{naive_model_forward.1} parent=0 // pred_check_branch
    %44 = sbr.rel (0) target = $region49
  $region48: #{naive_model_forward.1} parent=0 // pred_region
    _
  $region49: #{naive_model_forward.1} parent=0 // pred_fallthru
    _
  // Predicated region
  $region50: #{naive_model_forward.1} parent=0 // pred_check
    _
  $region51: #{naive_model_forward.1} parent=0 // pred_check_branch
    %46 = sbr.rel (0) target = $region53
  $region52: #{naive_model_forward.1} parent=0 // pred_region
    _
  $region53: #{naive_model_forward.1} parent=0 // pred_fallthru
    _
  // Predicated region
  $region54: #{naive_model_forward.1} parent=0 // pred_check
    _
  $region55: #{naive_model_forward.1} parent=0 // pred_check_branch
    %48 = sbr.rel (0) target = $region57
  $region56: #{naive_model_forward.1} parent=0 // pred_region
    _
  $region57: #{naive_model_forward.1} parent=0 // pred_fallthru
    _
  // Predicated region
  $region58: #{naive_model_forward.1} parent=0 // pred_check
    _
  $region59: #{naive_model_forward.1} parent=0 // pred_check_branch
    %50 = sbr.rel (0) target = $region61
  $region60: #{naive_model_forward.1} parent=0 // pred_region
    _
  $region61: #{naive_model_forward.1} parent=0 // pred_fallthru
    _
  // Predicated region
  $region62: #{naive_model_forward.1} parent=0 // pred_check
    _
  $region63: #{naive_model_forward.1} parent=0 // pred_check_branch
    %52 = sbr.rel (0) target = $region65
  $region64: #{naive_model_forward.1} parent=0 // pred_region
    _
  $region65: #{naive_model_forward.1} parent=0 // pred_fallthru
    _
  %v53 = vld [vmem:[%s3] sm:$0xff]
  %v54 = vld [vmem:[%s3 + $0x8] sm:$0xff]
  %v55 = vld [vmem:[%s4] sm:$0xff]
  %v56 = vld [vmem:[%s4 + $0x8] sm:$0xff]
  %v57 = vld [vmem:[%s4 + $0x10] sm:$0xff]
  %v58 = vld [vmem:[%s4 + $0x18] sm:$0xff]
  %v59 = vld [vmem:[%s5] sm:$0x1]
  %v60 = vld [vmem:[%s6] sm:$0x1]
  %v61 = vld [vmem:[%s0] sm:$0xff]
  %v63 = vperm.slane %v59, 0
  %vm65 = vcmask 130048
  %v67 = vsel %vm65, %v61, 0
  %69 = vmatpush.msra.mxu0 0.0
  %70 = vmatpush.msra.mxu0 0.0
  %71 = vmatpush.msra.mxu0 0.0
  %72 = vmatpush.msra.mxu0 0.0
  %73 = vmatpush.msra.mxu0 0.0
  %74 = vmatpush.msra.mxu0 0.0
  %75 = vmatpush.msra.mxu0 0.0
  %76 = vmatpush.msra.mxu0 0.0
  %77 = vmatpush.msra.mxu0 0.0
  %78 = vmatpush.msra.mxu0 0.0
  %79 = vmatpush.msra.mxu0 0.0
  %80 = vmatpush.msra.mxu0 0.0
  %81 = vmatpush.msra.mxu0 0.0
  %82 = vmatpush.msra.mxu0 0.0
  %83 = vmatpush.msra.mxu0 %v54
  %84 = vmatpush.msra.mxu0 %v53
  %85 = vmatmul.f32.gmra.mxu0 %v67
  %v86 = vpop.f32.mrf.mxu0
  %v87 = vadd.f32 %v63, %v86
  %88 = vdwg.mxu0
  %v90 = vperm.slane %v60, 0
  %vm92 = vcmask 261120
  %v94 = vsel %vm92, 0.0, 0
  %96 = vmatpush.msra.mxu0 0.0
  %97 = vmatpush.msra.mxu0 0.0
  %98 = vmatpush.msra.mxu0 0.0
  %99 = vmatpush.msra.mxu0 0.0
  %100 = vmatpush.msra.mxu0 0.0
  %101 = vmatpush.msra.mxu0 0.0
  %102 = vmatpush.msra.mxu0 0.0
  %103 = vmatpush.msra.mxu0 0.0
  %104 = vmatpush.msra.mxu0 0.0
  %105 = vmatpush.msra.mxu0 0.0
  %106 = vmatpush.msra.mxu0 0.0
  %107 = vmatpush.msra.mxu0 0.0
  %108 = vmatpush.msra.mxu0 %v58
  %109 = vmatpush.msra.mxu0 %v57
  %110 = vmatpush.msra.mxu0 %v56
  %111 = vmatpush.msra.mxu0 %v55
  %112 = vmatmul.f32.gmra.mxu0 %v94
  %v113 = vpop.f32.mrf.mxu0
  %v114 = vadd.f32 %v90, %v113
  %115 = vdwg.mxu0
  %v116 = vadd.f32 %v87, %v114
  %v117 = vxor.u32 %v116, 2147483648
  %v118 = vmul.f32 %v117, 1.442695
  %v119 = vpow.pop %v118
  %v120 = vadd.f32 %v119, 1.0
  %v121 = vrcp.pop %v120
  %v122 = vmul.f32 %v120, %v121
  %v123 = vsub.f32 1.0, %v122
  %v124 = vmul.f32 %v121, %v123
  %v125 = vadd.f32 %v121, %v124
  %vm126 = vweird.f32 %v120
  %vm127 = vweird.f32 %v121
  %vm128 = vmor %vm126, %vm127
  %v129 = vsel %vm128, %v121, %v125
  %v130 = vand.u32 2147483647, %v120
  %vm131 = vcmp.eq.f32.partialorder %v130, 8.507059e+37
  %v132 = vand.u32 %v120, 2147483648
  %v133 = vor.u32 1.1754944e-38, %v132
  %v134 = vsel %vm131, %v133, %v129
  %v135 = vmul.f32 1.0, %v134
  %137 = vrot.lane.b32.xlu0 %v114, 64
  %v138 = vpop.permute.xlu0 %137
  %v140 = vmul.f32 %v135, %v138
  %142 = vrot.lane.b32.xlu0 %v140, 64
  %v143 = vpop.permute.xlu0 %142
  %v145 = vadd.f32 %v87, %v143
  %v146 = vtanh.pop %v145
  %v147 = vsub.f32 1.0, %v135
  %149 = vrot.lane.b32.xlu0 %v146, 96
  %v150 = vpop.permute.xlu0 %149
  %v152 = vmul.f32 %v147, %v150
  %v153 = vmul.f32 %v135, 0.0
  %v154 = vadd.f32 %v152, %v153
  %s155 = scalar_lea.vmem %s0, 8
  %v156 = vld [vmem:[%s155] sm:$0xff]
  %v158 = vsel %vm65, %v156, 0
  %160 = vmatpush.msra.mxu0 0.0
  %161 = vmatpush.msra.mxu0 0.0
  %162 = vmatpush.msra.mxu0 0.0
  %163 = vmatpush.msra.mxu0 0.0
  %164 = vmatpush.msra.mxu0 0.0
  %165 = vmatpush.msra.mxu0 0.0
  %166 = vmatpush.msra.mxu0 0.0
  %167 = vmatpush.msra.mxu0 0.0
  %168 = vmatpush.msra.mxu0 0.0
  %169 = vmatpush.msra.mxu0 0.0
  %170 = vmatpush.msra.mxu0 0.0
  %171 = vmatpush.msra.mxu0 0.0
  %172 = vmatpush.msra.mxu0 0.0
  %173 = vmatpush.msra.mxu0 0.0
  %174 = vmatpush.msra.mxu0 %v54
  %175 = vmatpush.msra.mxu0 %v53
  %176 = vmatmul.f32.gmra.mxu0 %v158
  %v177 = vpop.f32.mrf.mxu0
  %v178 = vadd.f32 %v63, %v177
  %179 = vdwg.mxu0
  %181 = vrot.lane.b32.xlu0 %v154, 96
  %v182 = vpop.permute.xlu0 %181
  %v183 = vsel %vm92, %v182, 0
  %185 = vmatpush.msra.mxu0 0.0
  %186 = vmatpush.msra.mxu0 0.0
  %187 = vmatpush.msra.mxu0 0.0
  %188 = vmatpush.msra.mxu0 0.0
  %189 = vmatpush.msra.mxu0 0.0
  %190 = vmatpush.msra.mxu0 0.0
  %191 = vmatpush.msra.mxu0 0.0
  %192 = vmatpush.msra.mxu0 0.0
  %193 = vmatpush.msra.mxu0 0.0
  %194 = vmatpush.msra.mxu0 0.0
  %195 = vmatpush.msra.mxu0 0.0
  %196 = vmatpush.msra.mxu0 0.0
  %197 = vmatpush.msra.mxu0 %v58
  %198 = vmatpush.msra.mxu0 %v57
  %199 = vmatpush.msra.mxu0 %v56
  %200 = vmatpush.msra.mxu0 %v55
  %201 = vmatmul.f32.gmra.mxu0 %v183
  %v202 = vpop.f32.mrf.mxu0
  %v203 = vadd.f32 %v90, %v202
  %204 = vdwg.mxu0
  %v205 = vadd.f32 %v178, %v203
  %v206 = vxor.u32 %v205, 2147483648
  %v207 = vmul.f32 %v206, 1.442695
  %v208 = vpow.pop %v207
  %v209 = vadd.f32 %v208, 1.0
  %v210 = vrcp.pop %v209
  %v211 = vmul.f32 %v209, %v210
  %v212 = vsub.f32 1.0, %v211
  %v213 = vmul.f32 %v210, %v212
  %v214 = vadd.f32 %v210, %v213
  %vm215 = vweird.f32 %v209
  %vm216 = vweird.f32 %v210
  %vm217 = vmor %vm215, %vm216
  %v218 = vsel %vm217, %v210, %v214
  %v219 = vand.u32 2147483647, %v209
  %vm220 = vcmp.eq.f32.partialorder %v219, 8.507059e+37
  %v221 = vand.u32 %v209, 2147483648
  %v222 = vor.u32 1.1754944e-38, %v221
  %v223 = vsel %vm220, %v222, %v218
  %v224 = vmul.f32 1.0, %v223
  %226 = vrot.lane.b32.xlu0 %v203, 64
  %v227 = vpop.permute.xlu0 %226
  %v229 = vmul.f32 %v224, %v227
  %231 = vrot.lane.b32.xlu0 %v229, 64
  %v232 = vpop.permute.xlu0 %231
  %v234 = vadd.f32 %v178, %v232
  %v235 = vtanh.pop %v234
  %v236 = vsub.f32 1.0, %v224
  %238 = vrot.lane.b32.xlu0 %v235, 96
  %v239 = vpop.permute.xlu0 %238
  %v241 = vmul.f32 %v236, %v239
  %v242 = vmul.f32 %v224, %v154
  %v243 = vadd.f32 %v241, %v242
  %s244 = scalar_lea.vmem %s0, 16
  %v245 = vld [vmem:[%s244] sm:$0xff]
  %v247 = vsel %vm65, %v245, 0
  %249 = vmatpush.msra.mxu0 0.0
  %250 = vmatpush.msra.mxu0 0.0
  %251 = vmatpush.msra.mxu0 0.0
  %252 = vmatpush.msra.mxu0 0.0
  %253 = vmatpush.msra.mxu0 0.0
  %254 = vmatpush.msra.mxu0 0.0
  %255 = vmatpush.msra.mxu0 0.0
  %256 = vmatpush.msra.mxu0 0.0
  %257 = vmatpush.msra.mxu0 0.0
  %258 = vmatpush.msra.mxu0 0.0
  %259 = vmatpush.msra.mxu0 0.0
  %260 = vmatpush.msra.mxu0 0.0
  %261 = vmatpush.msra.mxu0 0.0
  %262 = vmatpush.msra.mxu0 0.0
  %263 = vmatpush.msra.mxu0 %v54
  %264 = vmatpush.msra.mxu0 %v53
  %265 = vmatmul.f32.gmra.mxu0 %v247
  %v266 = vpop.f32.mrf.mxu0
  %v267 = vadd.f32 %v63, %v266
  %268 = vdwg.mxu0
  %270 = vrot.lane.b32.xlu0 %v243, 96
  %v271 = vpop.permute.xlu0 %270
  %v272 = vsel %vm92, %v271, 0
  %274 = vmatpush.msra.mxu0 0.0
  %275 = vmatpush.msra.mxu0 0.0
  %276 = vmatpush.msra.mxu0 0.0
  %277 = vmatpush.msra.mxu0 0.0
  %278 = vmatpush.msra.mxu0 0.0
  %279 = vmatpush.msra.mxu0 0.0
  %280 = vmatpush.msra.mxu0 0.0
  %281 = vmatpush.msra.mxu0 0.0
  %282 = vmatpush.msra.mxu0 0.0
  %283 = vmatpush.msra.mxu0 0.0
  %284 = vmatpush.msra.mxu0 0.0
  %285 = vmatpush.msra.mxu0 0.0
  %286 = vmatpush.msra.mxu0 %v58
  %287 = vmatpush.msra.mxu0 %v57
  %288 = vmatpush.msra.mxu0 %v56
  %289 = vmatpush.msra.mxu0 %v55
  %290 = vmatmul.f32.gmra.mxu0 %v272
  %v291 = vpop.f32.mrf.mxu0
  %v292 = vadd.f32 %v90, %v291
  %293 = vdwg.mxu0
  %v294 = vadd.f32 %v267, %v292
  %v295 = vxor.u32 %v294, 2147483648
  %v296 = vmul.f32 %v295, 1.442695
  %v297 = vpow.pop %v296
  %v298 = vadd.f32 %v297, 1.0
  %v299 = vrcp.pop %v298
  %v300 = vmul.f32 %v298, %v299
  %v301 = vsub.f32 1.0, %v300
  %v302 = vmul.f32 %v299, %v301
  %v303 = vadd.f32 %v299, %v302
  %vm304 = vweird.f32 %v298
  %vm305 = vweird.f32 %v299
  %vm306 = vmor %vm304, %vm305
  %v307 = vsel %vm306, %v299, %v303
  %v308 = vand.u32 2147483647, %v298
  %vm309 = vcmp.eq.f32.partialorder %v308, 8.507059e+37
  %v310 = vand.u32 %v298, 2147483648
  %v311 = vor.u32 1.1754944e-38, %v310
  %v312 = vsel %vm309, %v311, %v307
  %v313 = vmul.f32 1.0, %v312
  %315 = vrot.lane.b32.xlu0 %v292, 64
  %v316 = vpop.permute.xlu0 %315
  %v318 = vmul.f32 %v313, %v316
  %320 = vrot.lane.b32.xlu0 %v318, 64
  %v321 = vpop.permute.xlu0 %320
  %v323 = vadd.f32 %v267, %v321
  %v324 = vtanh.pop %v323
  %v325 = vsub.f32 1.0, %v313
  %327 = vrot.lane.b32.xlu0 %v324, 96
  %v328 = vpop.permute.xlu0 %327
  %v330 = vmul.f32 %v325, %v328
  %v331 = vmul.f32 %v313, %v243
  %v332 = vadd.f32 %v330, %v331
  %s333 = scalar_lea.vmem %s0, 24
  %v334 = vld [vmem:[%s333] sm:$0xff]
  %v336 = vsel %vm65, %v334, 0
  %338 = vmatpush.msra.mxu0 0.0
  %339 = vmatpush.msra.mxu0 0.0
  %340 = vmatpush.msra.mxu0 0.0
  %341 = vmatpush.msra.mxu0 0.0
  %342 = vmatpush.msra.mxu0 0.0
  %343 = vmatpush.msra.mxu0 0.0
  %344 = vmatpush.msra.mxu0 0.0
  %345 = vmatpush.msra.mxu0 0.0
  %346 = vmatpush.msra.mxu0 0.0
  %347 = vmatpush.msra.mxu0 0.0
  %348 = vmatpush.msra.mxu0 0.0
  %349 = vmatpush.msra.mxu0 0.0
  %350 = vmatpush.msra.mxu0 0.0
  %351 = vmatpush.msra.mxu0 0.0
  %352 = vmatpush.msra.mxu0 %v54
  %353 = vmatpush.msra.mxu0 %v53
  %354 = vmatmul.f32.gmra.mxu0 %v336
  %v355 = vpop.f32.mrf.mxu0
  %v356 = vadd.f32 %v63, %v355
  %357 = vdwg.mxu0
  %359 = vrot.lane.b32.xlu0 %v332, 96
  %v360 = vpop.permute.xlu0 %359
  %v361 = vsel %vm92, %v360, 0
  %363 = vmatpush.msra.mxu0 0.0
  %364 = vmatpush.msra.mxu0 0.0
  %365 = vmatpush.msra.mxu0 0.0
  %366 = vmatpush.msra.mxu0 0.0
  %367 = vmatpush.msra.mxu0 0.0
  %368 = vmatpush.msra.mxu0 0.0
  %369 = vmatpush.msra.mxu0 0.0
  %370 = vmatpush.msra.mxu0 0.0
  %371 = vmatpush.msra.mxu0 0.0
  %372 = vmatpush.msra.mxu0 0.0
  %373 = vmatpush.msra.mxu0 0.0
  %374 = vmatpush.msra.mxu0 0.0
  %375 = vmatpush.msra.mxu0 %v58
  %376 = vmatpush.msra.mxu0 %v57
  %377 = vmatpush.msra.mxu0 %v56
  %378 = vmatpush.msra.mxu0 %v55
  %379 = vmatmul.f32.gmra.mxu0 %v361
  %v380 = vpop.f32.mrf.mxu0
  %v381 = vadd.f32 %v90, %v380
  %382 = vdwg.mxu0
  %v383 = vadd.f32 %v356, %v381
  %v384 = vxor.u32 %v383, 2147483648
  %v385 = vmul.f32 %v384, 1.442695
  %v386 = vpow.pop %v385
  %v387 = vadd.f32 %v386, 1.0
  %v388 = vrcp.pop %v387
  %v389 = vmul.f32 %v387, %v388
  %v390 = vsub.f32 1.0, %v389
  %v391 = vmul.f32 %v388, %v390
  %v392 = vadd.f32 %v388, %v391
  %vm393 = vweird.f32 %v387
  %vm394 = vweird.f32 %v388
  %vm395 = vmor %vm393, %vm394
  %v396 = vsel %vm395, %v388, %v392
  %v397 = vand.u32 2147483647, %v387
  %vm398 = vcmp.eq.f32.partialorder %v397, 8.507059e+37
  %v399 = vand.u32 %v387, 2147483648
  %v400 = vor.u32 1.1754944e-38, %v399
  %v401 = vsel %vm398, %v400, %v396
  %v402 = vmul.f32 1.0, %v401
  %404 = vrot.lane.b32.xlu0 %v381, 64
  %v405 = vpop.permute.xlu0 %404
  %v407 = vmul.f32 %v402, %v405
  %409 = vrot.lane.b32.xlu0 %v407, 64
  %v410 = vpop.permute.xlu0 %409
  %v412 = vadd.f32 %v356, %v410
  %v413 = vtanh.pop %v412
  %v414 = vsub.f32 1.0, %v402
  %416 = vrot.lane.b32.xlu0 %v413, 96
  %v417 = vpop.permute.xlu0 %416
  %v419 = vmul.f32 %v414, %v417
  %v420 = vmul.f32 %v402, %v332
  %v421 = vadd.f32 %v419, %v420
  %s422 = scalar_lea.vmem %s0, 32
  %v423 = vld [vmem:[%s422] sm:$0xff]
  %v425 = vsel %vm65, %v423, 0
  %427 = vmatpush.msra.mxu0 0.0
  %428 = vmatpush.msra.mxu0 0.0
  %429 = vmatpush.msra.mxu0 0.0
  %430 = vmatpush.msra.mxu0 0.0
  %431 = vmatpush.msra.mxu0 0.0
  %432 = vmatpush.msra.mxu0 0.0
  %433 = vmatpush.msra.mxu0 0.0
  %434 = vmatpush.msra.mxu0 0.0
  %435 = vmatpush.msra.mxu0 0.0
  %436 = vmatpush.msra.mxu0 0.0
  %437 = vmatpush.msra.mxu0 0.0
  %438 = vmatpush.msra.mxu0 0.0
  %439 = vmatpush.msra.mxu0 0.0
  %440 = vmatpush.msra.mxu0 0.0
  %441 = vmatpush.msra.mxu0 %v54
  %442 = vmatpush.msra.mxu0 %v53
  %443 = vmatmul.f32.gmra.mxu0 %v425
  %v444 = vpop.f32.mrf.mxu0
  %v445 = vadd.f32 %v63, %v444
  %446 = vdwg.mxu0
  %448 = vrot.lane.b32.xlu0 %v421, 96
  %v449 = vpop.permute.xlu0 %448
  %v450 = vsel %vm92, %v449, 0
  %452 = vmatpush.msra.mxu0 0.0
  %453 = vmatpush.msra.mxu0 0.0
  %454 = vmatpush.msra.mxu0 0.0
  %455 = vmatpush.msra.mxu0 0.0
  %456 = vmatpush.msra.mxu0 0.0
  %457 = vmatpush.msra.mxu0 0.0
  %458 = vmatpush.msra.mxu0 0.0
  %459 = vmatpush.msra.mxu0 0.0
  %460 = vmatpush.msra.mxu0 0.0
  %461 = vmatpush.msra.mxu0 0.0
  %462 = vmatpush.msra.mxu0 0.0
  %463 = vmatpush.msra.mxu0 0.0
  %464 = vmatpush.msra.mxu0 %v58
  %465 = vmatpush.msra.mxu0 %v57
  %466 = vmatpush.msra.mxu0 %v56
  %467 = vmatpush.msra.mxu0 %v55
  %468 = vmatmul.f32.gmra.mxu0 %v450
  %v469 = vpop.f32.mrf.mxu0
  %v470 = vadd.f32 %v90, %v469
  %471 = vdwg.mxu0
  %v472 = vadd.f32 %v445, %v470
  %v473 = vxor.u32 %v472, 2147483648
  %v474 = vmul.f32 %v473, 1.442695
  %v475 = vpow.pop %v474
  %v476 = vadd.f32 %v475, 1.0
  %v477 = vrcp.pop %v476
  %v478 = vmul.f32 %v476, %v477
  %v479 = vsub.f32 1.0, %v478
  %v480 = vmul.f32 %v477, %v479
  %v481 = vadd.f32 %v477, %v480
  %vm482 = vweird.f32 %v476
  %vm483 = vweird.f32 %v477
  %vm484 = vmor %vm482, %vm483
  %v485 = vsel %vm484, %v477, %v481
  %v486 = vand.u32 2147483647, %v476
  %vm487 = vcmp.eq.f32.partialorder %v486, 8.507059e+37
  %v488 = vand.u32 %v476, 2147483648
  %v489 = vor.u32 1.1754944e-38, %v488
  %v490 = vsel %vm487, %v489, %v485
  %v491 = vmul.f32 1.0, %v490
  %493 = vrot.lane.b32.xlu0 %v470, 64
  %v494 = vpop.permute.xlu0 %493
  %v496 = vmul.f32 %v491, %v494
  %498 = vrot.lane.b32.xlu0 %v496, 64
  %v499 = vpop.permute.xlu0 %498
  %v501 = vadd.f32 %v445, %v499
  %v502 = vtanh.pop %v501
  %v503 = vsub.f32 1.0, %v491
  %505 = vrot.lane.b32.xlu0 %v502, 96
  %v506 = vpop.permute.xlu0 %505
  %v508 = vmul.f32 %v503, %v506
  %v509 = vmul.f32 %v491, %v421
  %v510 = vadd.f32 %v508, %v509
  %s511 = scalar_lea.vmem %s0, 40
  %v512 = vld [vmem:[%s511] sm:$0xff]
  %v514 = vsel %vm65, %v512, 0
  %516 = vmatpush.msra.mxu0 0.0
  %517 = vmatpush.msra.mxu0 0.0
  %518 = vmatpush.msra.mxu0 0.0
  %519 = vmatpush.msra.mxu0 0.0
  %520 = vmatpush.msra.mxu0 0.0
  %521 = vmatpush.msra.mxu0 0.0
  %522 = vmatpush.msra.mxu0 0.0
  %523 = vmatpush.msra.mxu0 0.0
  %524 = vmatpush.msra.mxu0 0.0
  %525 = vmatpush.msra.mxu0 0.0
  %526 = vmatpush.msra.mxu0 0.0
  %527 = vmatpush.msra.mxu0 0.0
  %528 = vmatpush.msra.mxu0 0.0
  %529 = vmatpush.msra.mxu0 0.0
  %530 = vmatpush.msra.mxu0 %v54
  %531 = vmatpush.msra.mxu0 %v53
  %532 = vmatmul.f32.gmra.mxu0 %v514
  %v533 = vpop.f32.mrf.mxu0
  %v534 = vadd.f32 %v63, %v533
  %535 = vdwg.mxu0
  %537 = vrot.lane.b32.xlu0 %v510, 96
  %v538 = vpop.permute.xlu0 %537
  %v539 = vsel %vm92, %v538, 0
  %541 = vmatpush.msra.mxu0 0.0
  %542 = vmatpush.msra.mxu0 0.0
  %543 = vmatpush.msra.mxu0 0.0
  %544 = vmatpush.msra.mxu0 0.0
  %545 = vmatpush.msra.mxu0 0.0
  %546 = vmatpush.msra.mxu0 0.0
  %547 = vmatpush.msra.mxu0 0.0
  %548 = vmatpush.msra.mxu0 0.0
  %549 = vmatpush.msra.mxu0 0.0
  %550 = vmatpush.msra.mxu0 0.0
  %551 = vmatpush.msra.mxu0 0.0
  %552 = vmatpush.msra.mxu0 0.0
  %553 = vmatpush.msra.mxu0 %v58
  %554 = vmatpush.msra.mxu0 %v57
  %555 = vmatpush.msra.mxu0 %v56
  %556 = vmatpush.msra.mxu0 %v55
  %557 = vmatmul.f32.gmra.mxu0 %v539
  %v558 = vpop.f32.mrf.mxu0
  %v559 = vadd.f32 %v90, %v558
  %560 = vdwg.mxu0
  %v561 = vadd.f32 %v534, %v559
  %v562 = vxor.u32 %v561, 2147483648
  %v563 = vmul.f32 %v562, 1.442695
  %v564 = vpow.pop %v563
  %v565 = vadd.f32 %v564, 1.0
  %v566 = vrcp.pop %v565
  %v567 = vmul.f32 %v565, %v566
  %v568 = vsub.f32 1.0, %v567
  %v569 = vmul.f32 %v566, %v568
  %v570 = vadd.f32 %v566, %v569
  %vm571 = vweird.f32 %v565
  %vm572 = vweird.f32 %v566
  %vm573 = vmor %vm571, %vm572
  %v574 = vsel %vm573, %v566, %v570
  %v575 = vand.u32 2147483647, %v565
  %vm576 = vcmp.eq.f32.partialorder %v575, 8.507059e+37
  %v577 = vand.u32 %v565, 2147483648
  %v578 = vor.u32 1.1754944e-38, %v577
  %v579 = vsel %vm576, %v578, %v574
  %v580 = vmul.f32 1.0, %v579
  %582 = vrot.lane.b32.xlu0 %v559, 64
  %v583 = vpop.permute.xlu0 %582
  %v585 = vmul.f32 %v580, %v583
  %587 = vrot.lane.b32.xlu0 %v585, 64
  %v588 = vpop.permute.xlu0 %587
  %v590 = vadd.f32 %v534, %v588
  %v591 = vtanh.pop %v590
  %v592 = vsub.f32 1.0, %v580
  %594 = vrot.lane.b32.xlu0 %v591, 96
  %v595 = vpop.permute.xlu0 %594
  %v597 = vmul.f32 %v592, %v595
  %v598 = vmul.f32 %v580, %v510
  %v599 = vadd.f32 %v597, %v598
  %s600 = scalar_lea.vmem %s0, 48
  %v601 = vld [vmem:[%s600] sm:$0xff]
  %v603 = vsel %vm65, %v601, 0
  %605 = vmatpush.msra.mxu0 0.0
  %606 = vmatpush.msra.mxu0 0.0
  %607 = vmatpush.msra.mxu0 0.0
  %608 = vmatpush.msra.mxu0 0.0
  %609 = vmatpush.msra.mxu0 0.0
  %610 = vmatpush.msra.mxu0 0.0
  %611 = vmatpush.msra.mxu0 0.0
  %612 = vmatpush.msra.mxu0 0.0
  %613 = vmatpush.msra.mxu0 0.0
  %614 = vmatpush.msra.mxu0 0.0
  %615 = vmatpush.msra.mxu0 0.0
  %616 = vmatpush.msra.mxu0 0.0
  %617 = vmatpush.msra.mxu0 0.0
  %618 = vmatpush.msra.mxu0 0.0
  %619 = vmatpush.msra.mxu0 %v54
  %620 = vmatpush.msra.mxu0 %v53
  %621 = vmatmul.f32.gmra.mxu0 %v603
  %v622 = vpop.f32.mrf.mxu0
  %v623 = vadd.f32 %v63, %v622
  %624 = vdwg.mxu0
  %626 = vrot.lane.b32.xlu0 %v599, 96
  %v627 = vpop.permute.xlu0 %626
  %v628 = vsel %vm92, %v627, 0
  %630 = vmatpush.msra.mxu0 0.0
  %631 = vmatpush.msra.mxu0 0.0
  %632 = vmatpush.msra.mxu0 0.0
  %633 = vmatpush.msra.mxu0 0.0
  %634 = vmatpush.msra.mxu0 0.0
  %635 = vmatpush.msra.mxu0 0.0
  %636 = vmatpush.msra.mxu0 0.0
  %637 = vmatpush.msra.mxu0 0.0
  %638 = vmatpush.msra.mxu0 0.0
  %639 = vmatpush.msra.mxu0 0.0
  %640 = vmatpush.msra.mxu0 0.0
  %641 = vmatpush.msra.mxu0 0.0
  %642 = vmatpush.msra.mxu0 %v58
  %643 = vmatpush.msra.mxu0 %v57
  %644 = vmatpush.msra.mxu0 %v56
  %645 = vmatpush.msra.mxu0 %v55
  %646 = vmatmul.f32.gmra.mxu0 %v628
  %v647 = vpop.f32.mrf.mxu0
  %v648 = vadd.f32 %v90, %v647
  %649 = vdwg.mxu0
  %v650 = vadd.f32 %v623, %v648
  %v651 = vxor.u32 %v650, 2147483648
  %v652 = vmul.f32 %v651, 1.442695
  %v653 = vpow.pop %v652
  %v654 = vadd.f32 %v653, 1.0
  %v655 = vrcp.pop %v654
  %v656 = vmul.f32 %v654, %v655
  %v657 = vsub.f32 1.0, %v656
  %v658 = vmul.f32 %v655, %v657
  %v659 = vadd.f32 %v655, %v658
  %vm660 = vweird.f32 %v654
  %vm661 = vweird.f32 %v655
  %vm662 = vmor %vm660, %vm661
  %v663 = vsel %vm662, %v655, %v659
  %v664 = vand.u32 2147483647, %v654
  %vm665 = vcmp.eq.f32.partialorder %v664, 8.507059e+37
  %v666 = vand.u32 %v654, 2147483648
  %v667 = vor.u32 1.1754944e-38, %v666
  %v668 = vsel %vm665, %v667, %v663
  %v669 = vmul.f32 1.0, %v668
  %671 = vrot.lane.b32.xlu0 %v648, 64
  %v672 = vpop.permute.xlu0 %671
  %v674 = vmul.f32 %v669, %v672
  %676 = vrot.lane.b32.xlu0 %v674, 64
  %v677 = vpop.permute.xlu0 %676
  %v679 = vadd.f32 %v623, %v677
  %v680 = vtanh.pop %v679
  %v681 = vsub.f32 1.0, %v669
  %683 = vrot.lane.b32.xlu0 %v680, 96
  %v684 = vpop.permute.xlu0 %683
  %v686 = vmul.f32 %v681, %v684
  %v687 = vmul.f32 %v669, %v599
  %v688 = vadd.f32 %v686, %v687
  %s689 = scalar_lea.vmem %s0, 56
  %v690 = vld [vmem:[%s689] sm:$0xff]
  %v692 = vsel %vm65, %v690, 0
  %694 = vmatpush.msra.mxu0 0.0
  %695 = vmatpush.msra.mxu0 0.0
  %696 = vmatpush.msra.mxu0 0.0
  %697 = vmatpush.msra.mxu0 0.0
  %698 = vmatpush.msra.mxu0 0.0
  %699 = vmatpush.msra.mxu0 0.0
  %700 = vmatpush.msra.mxu0 0.0
  %701 = vmatpush.msra.mxu0 0.0
  %702 = vmatpush.msra.mxu0 0.0
  %703 = vmatpush.msra.mxu0 0.0
  %704 = vmatpush.msra.mxu0 0.0
  %705 = vmatpush.msra.mxu0 0.0
  %706 = vmatpush.msra.mxu0 0.0
  %707 = vmatpush.msra.mxu0 0.0
  %708 = vmatpush.msra.mxu0 %v54
  %709 = vmatpush.msra.mxu0 %v53
  %710 = vmatmul.f32.gmra.mxu0 %v692
  %v711 = vpop.f32.mrf.mxu0
  %v712 = vadd.f32 %v63, %v711
  %713 = vdwg.mxu0
  %715 = vrot.lane.b32.xlu0 %v688, 96
  %v716 = vpop.permute.xlu0 %715
  %v717 = vsel %vm92, %v716, 0
  %719 = vmatpush.msra.mxu0 0.0
  %720 = vmatpush.msra.mxu0 0.0
  %721 = vmatpush.msra.mxu0 0.0
  %722 = vmatpush.msra.mxu0 0.0
  %723 = vmatpush.msra.mxu0 0.0
  %724 = vmatpush.msra.mxu0 0.0
  %725 = vmatpush.msra.mxu0 0.0
  %726 = vmatpush.msra.mxu0 0.0
  %727 = vmatpush.msra.mxu0 0.0
  %728 = vmatpush.msra.mxu0 0.0
  %729 = vmatpush.msra.mxu0 0.0
  %730 = vmatpush.msra.mxu0 0.0
  %731 = vmatpush.msra.mxu0 %v58
  %732 = vmatpush.msra.mxu0 %v57
  %733 = vmatpush.msra.mxu0 %v56
  %734 = vmatpush.msra.mxu0 %v55
  %735 = vmatmul.f32.gmra.mxu0 %v717
  %v736 = vpop.f32.mrf.mxu0
  %v737 = vadd.f32 %v90, %v736
  %738 = vdwg.mxu0
  %v739 = vadd.f32 %v712, %v737
  %v740 = vxor.u32 %v739, 2147483648
  %v741 = vmul.f32 %v740, 1.442695
  %v742 = vpow.pop %v741
  %v743 = vadd.f32 %v742, 1.0
  %v744 = vrcp.pop %v743
  %v745 = vmul.f32 %v743, %v744
  %v746 = vsub.f32 1.0, %v745
  %v747 = vmul.f32 %v744, %v746
  %v748 = vadd.f32 %v744, %v747
  %vm749 = vweird.f32 %v743
  %vm750 = vweird.f32 %v744
  %vm751 = vmor %vm749, %vm750
  %v752 = vsel %vm751, %v744, %v748
  %v753 = vand.u32 2147483647, %v743
  %vm754 = vcmp.eq.f32.partialorder %v753, 8.507059e+37
  %v755 = vand.u32 %v743, 2147483648
  %v756 = vor.u32 1.1754944e-38, %v755
  %v757 = vsel %vm754, %v756, %v752
  %v758 = vmul.f32 1.0, %v757
  %760 = vrot.lane.b32.xlu0 %v737, 64
  %v761 = vpop.permute.xlu0 %760
  %v763 = vmul.f32 %v758, %v761
  %765 = vrot.lane.b32.xlu0 %v763, 64
  %v766 = vpop.permute.xlu0 %765
  %v768 = vadd.f32 %v712, %v766
  %v769 = vtanh.pop %v768
  %v770 = vsub.f32 1.0, %v758
  %772 = vrot.lane.b32.xlu0 %v769, 96
  %v773 = vpop.permute.xlu0 %772
  %v775 = vmul.f32 %v770, %v773
  %v776 = vmul.f32 %v758, %v688
  %v777 = vadd.f32 %v775, %v776
  %s778 = scalar_lea.vmem %s0, 64
  %v779 = vld [vmem:[%s778] sm:$0xff]
  %v781 = vsel %vm65, %v779, 0
  %783 = vmatpush.msra.mxu0 0.0
  %784 = vmatpush.msra.mxu0 0.0
  %785 = vmatpush.msra.mxu0 0.0
  %786 = vmatpush.msra.mxu0 0.0
  %787 = vmatpush.msra.mxu0 0.0
  %788 = vmatpush.msra.mxu0 0.0
  %789 = vmatpush.msra.mxu0 0.0
  %790 = vmatpush.msra.mxu0 0.0
  %791 = vmatpush.msra.mxu0 0.0
  %792 = vmatpush.msra.mxu0 0.0
  %793 = vmatpush.msra.mxu0 0.0
  %794 = vmatpush.msra.mxu0 0.0
  %795 = vmatpush.msra.mxu0 0.0
  %796 = vmatpush.msra.mxu0 0.0
  %797 = vmatpush.msra.mxu0 %v54
  %798 = vmatpush.msra.mxu0 %v53
  %799 = vmatmul.f32.gmra.mxu0 %v781
  %v800 = vpop.f32.mrf.mxu0
  %v801 = vadd.f32 %v63, %v800
  %802 = vdwg.mxu0
  %804 = vrot.lane.b32.xlu0 %v777, 96
  %v805 = vpop.permute.xlu0 %804
  %v806 = vsel %vm92, %v805, 0
  %808 = vmatpush.msra.mxu0 0.0
  %809 = vmatpush.msra.mxu0 0.0
  %810 = vmatpush.msra.mxu0 0.0
  %811 = vmatpush.msra.mxu0 0.0
  %812 = vmatpush.msra.mxu0 0.0
  %813 = vmatpush.msra.mxu0 0.0
  %814 = vmatpush.msra.mxu0 0.0
  %815 = vmatpush.msra.mxu0 0.0
  %816 = vmatpush.msra.mxu0 0.0
  %817 = vmatpush.msra.mxu0 0.0
  %818 = vmatpush.msra.mxu0 0.0
  %819 = vmatpush.msra.mxu0 0.0
  %820 = vmatpush.msra.mxu0 %v58
  %821 = vmatpush.msra.mxu0 %v57
  %822 = vmatpush.msra.mxu0 %v56
  %823 = vmatpush.msra.mxu0 %v55
  %824 = vmatmul.f32.gmra.mxu0 %v806
  %v825 = vpop.f32.mrf.mxu0
  %v826 = vadd.f32 %v90, %v825
  %827 = vdwg.mxu0
  %v828 = vadd.f32 %v801, %v826
  %v829 = vxor.u32 %v828, 2147483648
  %v830 = vmul.f32 %v829, 1.442695
  %v831 = vpow.pop %v830
  %v832 = vadd.f32 %v831, 1.0
  %v833 = vrcp.pop %v832
  %v834 = vmul.f32 %v832, %v833
  %v835 = vsub.f32 1.0, %v834
  %v836 = vmul.f32 %v833, %v835
  %v837 = vadd.f32 %v833, %v836
  %vm838 = vweird.f32 %v832
  %vm839 = vweird.f32 %v833
  %vm840 = vmor %vm838, %vm839
  %v841 = vsel %vm840, %v833, %v837
  %v842 = vand.u32 2147483647, %v832
  %vm843 = vcmp.eq.f32.partialorder %v842, 8.507059e+37
  %v844 = vand.u32 %v832, 2147483648
  %v845 = vor.u32 1.1754944e-38, %v844
  %v846 = vsel %vm843, %v845, %v841
  %v847 = vmul.f32 1.0, %v846
  %849 = vrot.lane.b32.xlu0 %v826, 64
  %v850 = vpop.permute.xlu0 %849
  %v852 = vmul.f32 %v847, %v850
  %854 = vrot.lane.b32.xlu0 %v852, 64
  %v855 = vpop.permute.xlu0 %854
  %v857 = vadd.f32 %v801, %v855
  %v858 = vtanh.pop %v857
  %v859 = vsub.f32 1.0, %v847
  %861 = vrot.lane.b32.xlu0 %v858, 96
  %v862 = vpop.permute.xlu0 %861
  %v864 = vmul.f32 %v859, %v862
  %v865 = vmul.f32 %v847, %v777
  %v866 = vadd.f32 %v864, %v865
  %s867 = scalar_lea.vmem %s0, 72
  %v868 = vld [vmem:[%s867] sm:$0xff]
  %v870 = vsel %vm65, %v868, 0
  %872 = vmatpush.msra.mxu0 0.0
  %873 = vmatpush.msra.mxu0 0.0
  %874 = vmatpush.msra.mxu0 0.0
  %875 = vmatpush.msra.mxu0 0.0
  %876 = vmatpush.msra.mxu0 0.0
  %877 = vmatpush.msra.mxu0 0.0
  %878 = vmatpush.msra.mxu0 0.0
  %879 = vmatpush.msra.mxu0 0.0
  %880 = vmatpush.msra.mxu0 0.0
  %881 = vmatpush.msra.mxu0 0.0
  %882 = vmatpush.msra.mxu0 0.0
  %883 = vmatpush.msra.mxu0 0.0
  %884 = vmatpush.msra.mxu0 0.0
  %885 = vmatpush.msra.mxu0 0.0
  %886 = vmatpush.msra.mxu0 %v54
  %887 = vmatpush.msra.mxu0 %v53
  %888 = vmatmul.f32.gmra.mxu0 %v870
  %v889 = vpop.f32.mrf.mxu0
  %v890 = vadd.f32 %v63, %v889
  %891 = vdwg.mxu0
  %893 = vrot.lane.b32.xlu0 %v866, 96
  %v894 = vpop.permute.xlu0 %893
  %v895 = vsel %vm92, %v894, 0
  %897 = vmatpush.msra.mxu0 0.0
  %898 = vmatpush.msra.mxu0 0.0
  %899 = vmatpush.msra.mxu0 0.0
  %900 = vmatpush.msra.mxu0 0.0
  %901 = vmatpush.msra.mxu0 0.0
  %902 = vmatpush.msra.mxu0 0.0
  %903 = vmatpush.msra.mxu0 0.0
  %904 = vmatpush.msra.mxu0 0.0
  %905 = vmatpush.msra.mxu0 0.0
  %906 = vmatpush.msra.mxu0 0.0
  %907 = vmatpush.msra.mxu0 0.0
  %908 = vmatpush.msra.mxu0 0.0
  %909 = vmatpush.msra.mxu0 %v58
  %910 = vmatpush.msra.mxu0 %v57
  %911 = vmatpush.msra.mxu0 %v56
  %912 = vmatpush.msra.mxu0 %v55
  %913 = vmatmul.f32.gmra.mxu0 %v895
  %v914 = vpop.f32.mrf.mxu0
  %v915 = vadd.f32 %v90, %v914
  %916 = vdwg.mxu0
  %v917 = vadd.f32 %v890, %v915
  %v918 = vxor.u32 %v917, 2147483648
  %v919 = vmul.f32 %v918, 1.442695
  %v920 = vpow.pop %v919
  %v921 = vadd.f32 %v920, 1.0
  %v922 = vrcp.pop %v921
  %v923 = vmul.f32 %v921, %v922
  %v924 = vsub.f32 1.0, %v923
  %v925 = vmul.f32 %v922, %v924
  %v926 = vadd.f32 %v922, %v925
  %vm927 = vweird.f32 %v921
  %vm928 = vweird.f32 %v922
  %vm929 = vmor %vm927, %vm928
  %v930 = vsel %vm929, %v922, %v926
  %v931 = vand.u32 2147483647, %v921
  %vm932 = vcmp.eq.f32.partialorder %v931, 8.507059e+37
  %v933 = vand.u32 %v921, 2147483648
  %v934 = vor.u32 1.1754944e-38, %v933
  %v935 = vsel %vm932, %v934, %v930
  %v936 = vmul.f32 1.0, %v935
  %938 = vrot.lane.b32.xlu0 %v915, 64
  %v939 = vpop.permute.xlu0 %938
  %v941 = vmul.f32 %v936, %v939
  %943 = vrot.lane.b32.xlu0 %v941, 64
  %v944 = vpop.permute.xlu0 %943
  %v946 = vadd.f32 %v890, %v944
  %v947 = vtanh.pop %v946
  %v948 = vsub.f32 1.0, %v936
  %950 = vrot.lane.b32.xlu0 %v947, 96
  %v951 = vpop.permute.xlu0 %950
  %v953 = vmul.f32 %v948, %v951
  %v954 = vmul.f32 %v936, %v866
  %v955 = vadd.f32 %v953, %v954
  %v956 = vld [vmem:[%s7] sm:$0xff]
  %v957 = vld [vmem:[%s7 + $0x8] sm:$0xff]
  %v958 = vld [vmem:[%s9] sm:$0xff]
  %v959 = vld [vmem:[%s9 + $0x8] sm:$0xff]
  %v960 = vld [vmem:[%s9 + $0x10] sm:$0xff]
  %v961 = vld [vmem:[%s9 + $0x18] sm:$0xff]
  %v962 = vld [vmem:[%s11] sm:$0x1]
  %v963 = vld [vmem:[%s12] sm:$0xff]
  %v964 = vld [vmem:[%s12 + $0x8] sm:$0xff]
  %v965 = vld [vmem:[%s13] sm:$0xff]
  %v966 = vld [vmem:[%s13 + $0x8] sm:$0xff]
  %v967 = vld [vmem:[%s13 + $0x10] sm:$0xff]
  %v968 = vld [vmem:[%s13 + $0x18] sm:$0xff]
  %v969 = vld [vmem:[%s2] sm:$0xff]
  %v970 = vld [vmem:[%s2 + $0x8] sm:$0xff]
  %v971 = vld [vmem:[%s2 + $0x10] sm:$0xff]
  %v972 = vld [vmem:[%s2 + $0x18] sm:$0xff]
  %v973 = vld [vmem:[%s8] sm:$0xff]
  %v974 = vld [vmem:[%s8 + $0x8] sm:$0xff]
  %v975 = vld [vmem:[%s8 + $0x10] sm:$0xff]
  %v976 = vld [vmem:[%s8 + $0x18] sm:$0xff]
  %v977 = vld [vmem:[%s10] sm:$0x1]
  %v979 = vperm.slane %v977, 0
  %982 = vrot.lane.b32.xlu0 %v955, 96
  %v983 = vpop.permute.xlu0 %982
  %v984 = vsel %vm92, %v983, 0
  %986 = vmatpush.msra.mxu0 0.0
  %987 = vmatpush.msra.mxu0 0.0
  %988 = vmatpush.msra.mxu0 0.0
  %989 = vmatpush.msra.mxu0 0.0
  %990 = vmatpush.msra.mxu0 0.0
  %991 = vmatpush.msra.mxu0 0.0
  %992 = vmatpush.msra.mxu0 0.0
  %993 = vmatpush.msra.mxu0 0.0
  %994 = vmatpush.msra.mxu0 0.0
  %995 = vmatpush.msra.mxu0 0.0
  %996 = vmatpush.msra.mxu0 0.0
  %997 = vmatpush.msra.mxu0 0.0
  %998 = vmatpush.msra.mxu0 %v976
  %999 = vmatpush.msra.mxu0 %v975
  %1000 = vmatpush.msra.mxu0 %v974
  %1001 = vmatpush.msra.mxu0 %v973
  %1002 = vmatmul.f32.gmra.mxu0 %v984
  %v1003 = vpop.f32.mrf.mxu0
  %v1004 = vadd.f32 %v979, %v1003
  %1005 = vdwg.mxu0
  %v1006 = vld [vmem:[%s14] sm:$0xff]
  %v1007 = vld [vmem:[%s14 + $0x8] sm:$0xff]
  %v1008 = vld [vmem:[%s14 + $0x10] sm:$0xff]
  %v1009 = vld [vmem:[%s14 + $0x18] sm:$0xff]
  %v1010 = vld [vmem:[%s15] sm:$0x1]
  %v1012 = vperm.slane %v1010, 0
  %1014 = vmatpush.msra.mxu0 0.0
  %1015 = vmatpush.msra.mxu0 0.0
  %1016 = vmatpush.msra.mxu0 0.0
  %1017 = vmatpush.msra.mxu0 0.0
  %1018 = vmatpush.msra.mxu0 0.0
  %1019 = vmatpush.msra.mxu0 0.0
  %1020 = vmatpush.msra.mxu0 0.0
  %1021 = vmatpush.msra.mxu0 0.0
  %1022 = vmatpush.msra.mxu0 0.0
  %1023 = vmatpush.msra.mxu0 0.0
  %1024 = vmatpush.msra.mxu0 0.0
  %1025 = vmatpush.msra.mxu0 0.0
  %1026 = vmatpush.msra.mxu0 %v1009
  %1027 = vmatpush.msra.mxu0 %v1008
  %1028 = vmatpush.msra.mxu0 %v1007
  %1029 = vmatpush.msra.mxu0 %v1006
  %1030 = vmatmul.f32.gmra.mxu0 %v984
  %v1031 = vpop.f32.mrf.mxu0
  %v1032 = vadd.f32 %v1012, %v1031
  %1033 = vdwg.mxu0
  %v1034 = vlaneseq
  %v1035 = vand.u32 %v1034, 127
  %vm1036 = vcmp.lt.s32.totalorder %v1035, 32
  %1037 = vst [vmem:[%s16] sm:$0xff] 0.0
  %v1038 = vld [vmem:[%s1] sm:$0xff]
  %v1040 = vsel %vm65, %v1038, 0
  %1042 = vmatpush.msra.mxu0 0.0
  %1043 = vmatpush.msra.mxu0 0.0
  %1044 = vmatpush.msra.mxu0 0.0
  %1045 = vmatpush.msra.mxu0 0.0
  %1046 = vmatpush.msra.mxu0 0.0
  %1047 = vmatpush.msra.mxu0 0.0
  %1048 = vmatpush.msra.mxu0 0.0
  %1049 = vmatpush.msra.mxu0 0.0
  %1050 = vmatpush.msra.mxu0 0.0
  %1051 = vmatpush.msra.mxu0 0.0
  %1052 = vmatpush.msra.mxu0 0.0
  %1053 = vmatpush.msra.mxu0 0.0
  %1054 = vmatpush.msra.mxu0 0.0
  %1055 = vmatpush.msra.mxu0 0.0
  %1056 = vmatpush.msra.mxu0 %v957
  %1057 = vmatpush.msra.mxu0 %v956
  %1058 = vmatmul.f32.gmra.mxu0 %v1040
  %v1059 = vpop.f32.mrf.mxu0
  %v1060 = vadd.f32 %v1004, %v1059
  %1061 = vdwg.mxu0
  %v1063 = vperm.slane %v962, 0
  %1065 = vmatpush.msra.mxu0 0.0
  %1066 = vmatpush.msra.mxu0 0.0
  %1067 = vmatpush.msra.mxu0 0.0
  %1068 = vmatpush.msra.mxu0 0.0
  %1069 = vmatpush.msra.mxu0 0.0
  %1070 = vmatpush.msra.mxu0 0.0
  %1071 = vmatpush.msra.mxu0 0.0
  %1072 = vmatpush.msra.mxu0 0.0
  %1073 = vmatpush.msra.mxu0 0.0
  %1074 = vmatpush.msra.mxu0 0.0
  %1075 = vmatpush.msra.mxu0 0.0
  %1076 = vmatpush.msra.mxu0 0.0
  %1077 = vmatpush.msra.mxu0 %v961
  %1078 = vmatpush.msra.mxu0 %v960
  %1079 = vmatpush.msra.mxu0 %v959
  %1080 = vmatpush.msra.mxu0 %v958
  %1081 = vmatmul.f32.gmra.mxu0 %v984
  %v1082 = vpop.f32.mrf.mxu0
  %v1083 = vadd.f32 %v1063, %v1082
  %1084 = vdwg.mxu0
  %v1085 = vadd.f32 %v1060, %v1083
  %v1086 = vxor.u32 %v1085, 2147483648
  %v1087 = vmul.f32 %v1086, 1.442695
  %v1088 = vpow.pop %v1087
  %v1089 = vadd.f32 %v1088, 1.0
  %v1090 = vrcp.pop %v1089
  %v1091 = vmul.f32 %v1089, %v1090
  %v1092 = vsub.f32 1.0, %v1091
  %v1093 = vmul.f32 %v1090, %v1092
  %v1094 = vadd.f32 %v1090, %v1093
  %vm1095 = vweird.f32 %v1089
  %vm1096 = vweird.f32 %v1090
  %vm1097 = vmor %vm1095, %vm1096
  %v1098 = vsel %vm1097, %v1090, %v1094
  %v1099 = vand.u32 2147483647, %v1089
  %vm1100 = vcmp.eq.f32.partialorder %v1099, 8.507059e+37
  %v1101 = vand.u32 %v1089, 2147483648
  %v1102 = vor.u32 1.1754944e-38, %v1101
  %v1103 = vsel %vm1100, %v1102, %v1098
  %v1104 = vmul.f32 1.0, %v1103
  %1106 = vrot.lane.b32.xlu0 %v1083, 64
  %v1107 = vpop.permute.xlu0 %1106
  %v1109 = vmul.f32 %v1104, %v1107
  %1111 = vrot.lane.b32.xlu0 %v1109, 64
  %v1112 = vpop.permute.xlu0 %1111
  %v1114 = vadd.f32 %v1060, %v1112
  %v1115 = vtanh.pop %v1114
  %v1116 = vsub.f32 1.0, %v1104
  %1118 = vrot.lane.b32.xlu0 %v1115, 96
  %v1119 = vpop.permute.xlu0 %1118
  %v1121 = vmul.f32 %v1116, %v1119
  %v1122 = vmul.f32 %v1104, %v955
  %v1123 = vadd.f32 %v1121, %v1122
  %1125 = vrot.lane.b32.xlu0 %v1123, 96
  %v1126 = vpop.permute.xlu0 %1125
  %v1127 = vsel %vm92, %v1126, 0
  %1129 = vmatpush.msra.mxu0 0.0
  %1130 = vmatpush.msra.mxu0 0.0
  %1131 = vmatpush.msra.mxu0 0.0
  %1132 = vmatpush.msra.mxu0 0.0
  %1133 = vmatpush.msra.mxu0 0.0
  %1134 = vmatpush.msra.mxu0 0.0
  %1135 = vmatpush.msra.mxu0 0.0
  %1136 = vmatpush.msra.mxu0 0.0
  %1137 = vmatpush.msra.mxu0 0.0
  %1138 = vmatpush.msra.mxu0 0.0
  %1139 = vmatpush.msra.mxu0 0.0
  %1140 = vmatpush.msra.mxu0 0.0
  %1141 = vmatpush.msra.mxu0 %v968
  %1142 = vmatpush.msra.mxu0 %v967
  %1143 = vmatpush.msra.mxu0 %v966
  %1144 = vmatpush.msra.mxu0 %v965
  %1145 = vmatmul.f32.gmra.mxu0 %v1127
  %v1146 = vpop.f32.mrf.mxu0
  %v1147 = vadd.f32 0.0, %v1146
  %1148 = vdwg.mxu0
  %1149 = vmatpush.msra.mxu0 0.0
  %1150 = vmatpush.msra.mxu0 0.0
  %1151 = vmatpush.msra.mxu0 0.0
  %1152 = vmatpush.msra.mxu0 0.0
  %1153 = vmatpush.msra.mxu0 0.0
  %1154 = vmatpush.msra.mxu0 0.0
  %1155 = vmatpush.msra.mxu0 0.0
  %1156 = vmatpush.msra.mxu0 0.0
  %1157 = vmatpush.msra.mxu0 0.0
  %1158 = vmatpush.msra.mxu0 0.0
  %1159 = vmatpush.msra.mxu0 0.0
  %1160 = vmatpush.msra.mxu0 0.0
  %1161 = vmatpush.msra.mxu0 0.0
  %1162 = vmatpush.msra.mxu0 0.0
  %1163 = vmatpush.msra.mxu0 %v964
  %1164 = vmatpush.msra.mxu0 %v963
  %1165 = vmatmul.f32.gmra.mxu0 %v1040
  %v1166 = vpop.f32.mrf.mxu0
  %v1167 = vadd.f32 %v1147, %v1166
  %1168 = vdwg.mxu0
  %v1169 = vadd.f32 %v1167, %v1032
  %s1170 = scalar_lea.vmem %s16, 8
  %1171 = vst [vmem:[%s1170] sm:$0xff] %v1169
  %v1172 = vsel %vm1036, %v1169, -inf
  %1173 = vmax.xlane.f32.xlu0 %v1172
  %v1174 = vpop.xlane.xlu0 %1173
  %vm1175 = vcmp.eq.f32.partialorder %v1172, %v1174
  %v1176 = vsel %vm1175, %v1035, 128
  %v1177 = vand.u32 %v1176, 65535
  %v1178 = vshra.s32 %v1176, 16
  %v1179 = vcvt.s32.f32 %v1177
  %v1180 = vcvt.s32.f32 %v1178
  %1181 = vmin.xlane.f32.xlu0 %v1180
  %v1182 = vpop.xlane.xlu0 %1181
  %vm1183 = vcmp.eq.f32.partialorder %v1180, %v1182
  %v1184 = vsel %vm1183, %v1179, inf
  %1185 = vmin.xlane.f32.xlu0 %v1184
  %v1186 = vpop.xlane.xlu0 %1185
  %v1187 = vcvt.f32.s32 %v1186
  %v1188 = vcvt.f32.s32 %v1182
  %v1189 = vshll.u32 %v1188, 16
  %v1190 = vadd.s32 %v1189, %v1187
  %vm1191 = vcmp.eq.s32.totalorder %v1035, %v1190
  %v1192 = vsel %vm1191, 1, 0
  %v1193 = vcvt.s32.f32 %v1192
  %v1195 = vsel %vm92, %v1193, 0
  %1197 = vmatpush.msra.mxu0 0.0
  %1198 = vmatpush.msra.mxu0 0.0
  %1199 = vmatpush.msra.mxu0 0.0
  %1200 = vmatpush.msra.mxu0 0.0
  %1201 = vmatpush.msra.mxu0 0.0
  %1202 = vmatpush.msra.mxu0 0.0
  %1203 = vmatpush.msra.mxu0 0.0
  %1204 = vmatpush.msra.mxu0 0.0
  %1205 = vmatpush.msra.mxu0 0.0
  %1206 = vmatpush.msra.mxu0 0.0
  %1207 = vmatpush.msra.mxu0 0.0
  %1208 = vmatpush.msra.mxu0 0.0
  %1209 = vmatpush.msra.mxu0 %v972
  %1210 = vmatpush.msra.mxu0 %v971
  %1211 = vmatpush.msra.mxu0 %v970
  %1212 = vmatpush.msra.mxu0 %v969
  %1213 = vmatmul.f32.gmra.mxu0 %v1195
  %v1214 = vpop.f32.mrf.mxu0
  %v1215 = vadd.f32 0.0, %v1214
  %1216 = vdwg.mxu0
  %v1218 = vsel %vm65, %v1215, 0
  %1220 = vmatpush.msra.mxu0 0.0
  %1221 = vmatpush.msra.mxu0 0.0
  %1222 = vmatpush.msra.mxu0 0.0
  %1223 = vmatpush.msra.mxu0 0.0
  %1224 = vmatpush.msra.mxu0 0.0
  %1225 = vmatpush.msra.mxu0 0.0
  %1226 = vmatpush.msra.mxu0 0.0
  %1227 = vmatpush.msra.mxu0 0.0
  %1228 = vmatpush.msra.mxu0 0.0
  %1229 = vmatpush.msra.mxu0 0.0
  %1230 = vmatpush.msra.mxu0 0.0
  %1231 = vmatpush.msra.mxu0 0.0
  %1232 = vmatpush.msra.mxu0 0.0
  %1233 = vmatpush.msra.mxu0 0.0
  %1234 = vmatpush.msra.mxu0 %v957
  %1235 = vmatpush.msra.mxu0 %v956
  %1236 = vmatmul.f32.gmra.mxu0 %v1218
  %v1237 = vpop.f32.mrf.mxu0
  %v1238 = vadd.f32 %v1004, %v1237
  %1239 = vdwg.mxu0
  %1240 = vmatpush.msra.mxu0 0.0
  %1241 = vmatpush.msra.mxu0 0.0
  %1242 = vmatpush.msra.mxu0 0.0
  %1243 = vmatpush.msra.mxu0 0.0
  %1244 = vmatpush.msra.mxu0 0.0
  %1245 = vmatpush.msra.mxu0 0.0
  %1246 = vmatpush.msra.mxu0 0.0
  %1247 = vmatpush.msra.mxu0 0.0
  %1248 = vmatpush.msra.mxu0 0.0
  %1249 = vmatpush.msra.mxu0 0.0
  %1250 = vmatpush.msra.mxu0 0.0
  %1251 = vmatpush.msra.mxu0 0.0
  %1252 = vmatpush.msra.mxu0 %v961
  %1253 = vmatpush.msra.mxu0 %v960
  %1254 = vmatpush.msra.mxu0 %v959
  %1255 = vmatpush.msra.mxu0 %v958
  %1256 = vmatmul.f32.gmra.mxu0 %v1127
  %v1257 = vpop.f32.mrf.mxu0
  %v1258 = vadd.f32 %v1063, %v1257
  %1259 = vdwg.mxu0
  %v1260 = vadd.f32 %v1238, %v1258
  %v1261 = vxor.u32 %v1260, 2147483648
  %v1262 = vmul.f32 %v1261, 1.442695
  %v1263 = vpow.pop %v1262
  %v1264 = vadd.f32 %v1263, 1.0
  %v1265 = vrcp.pop %v1264
  %v1266 = vmul.f32 %v1264, %v1265
  %v1267 = vsub.f32 1.0, %v1266
  %v1268 = vmul.f32 %v1265, %v1267
  %v1269 = vadd.f32 %v1265, %v1268
  %vm1270 = vweird.f32 %v1264
  %vm1271 = vweird.f32 %v1265
  %vm1272 = vmor %vm1270, %vm1271
  %v1273 = vsel %vm1272, %v1265, %v1269
  %v1274 = vand.u32 2147483647, %v1264
  %vm1275 = vcmp.eq.f32.partialorder %v1274, 8.507059e+37
  %v1276 = vand.u32 %v1264, 2147483648
  %v1277 = vor.u32 1.1754944e-38, %v1276
  %v1278 = vsel %vm1275, %v1277, %v1273
  %v1279 = vmul.f32 1.0, %v1278
  %1281 = vrot.lane.b32.xlu0 %v1258, 64
  %v1282 = vpop.permute.xlu0 %1281
  %v1284 = vmul.f32 %v1279, %v1282
  %1286 = vrot.lane.b32.xlu0 %v1284, 64
  %v1287 = vpop.permute.xlu0 %1286
  %v1289 = vadd.f32 %v1238, %v1287
  %v1290 = vtanh.pop %v1289
  %v1291 = vsub.f32 1.0, %v1279
  %1293 = vrot.lane.b32.xlu0 %v1290, 96
  %v1294 = vpop.permute.xlu0 %1293
  %v1296 = vmul.f32 %v1291, %v1294
  %v1297 = vmul.f32 %v1279, %v1123
  %v1298 = vadd.f32 %v1296, %v1297
  %1300 = vrot.lane.b32.xlu0 %v1298, 96
  %v1301 = vpop.permute.xlu0 %1300
  %v1302 = vsel %vm92, %v1301, 0
  %1304 = vmatpush.msra.mxu0 0.0
  %1305 = vmatpush.msra.mxu0 0.0
  %1306 = vmatpush.msra.mxu0 0.0
  %1307 = vmatpush.msra.mxu0 0.0
  %1308 = vmatpush.msra.mxu0 0.0
  %1309 = vmatpush.msra.mxu0 0.0
  %1310 = vmatpush.msra.mxu0 0.0
  %1311 = vmatpush.msra.mxu0 0.0
  %1312 = vmatpush.msra.mxu0 0.0
  %1313 = vmatpush.msra.mxu0 0.0
  %1314 = vmatpush.msra.mxu0 0.0
  %1315 = vmatpush.msra.mxu0 0.0
  %1316 = vmatpush.msra.mxu0 %v968
  %1317 = vmatpush.msra.mxu0 %v967
  %1318 = vmatpush.msra.mxu0 %v966
  %1319 = vmatpush.msra.mxu0 %v965
  %1320 = vmatmul.f32.gmra.mxu0 %v1302
  %v1321 = vpop.f32.mrf.mxu0
  %v1322 = vadd.f32 0.0, %v1321
  %1323 = vdwg.mxu0
  %1324 = vmatpush.msra.mxu0 0.0
  %1325 = vmatpush.msra.mxu0 0.0
  %1326 = vmatpush.msra.mxu0 0.0
  %1327 = vmatpush.msra.mxu0 0.0
  %1328 = vmatpush.msra.mxu0 0.0
  %1329 = vmatpush.msra.mxu0 0.0
  %1330 = vmatpush.msra.mxu0 0.0
  %1331 = vmatpush.msra.mxu0 0.0
  %1332 = vmatpush.msra.mxu0 0.0
  %1333 = vmatpush.msra.mxu0 0.0
  %1334 = vmatpush.msra.mxu0 0.0
  %1335 = vmatpush.msra.mxu0 0.0
  %1336 = vmatpush.msra.mxu0 0.0
  %1337 = vmatpush.msra.mxu0 0.0
  %1338 = vmatpush.msra.mxu0 %v964
  %1339 = vmatpush.msra.mxu0 %v963
  %1340 = vmatmul.f32.gmra.mxu0 %v1218
  %v1341 = vpop.f32.mrf.mxu0
  %v1342 = vadd.f32 %v1322, %v1341
  %1343 = vdwg.mxu0
  %v1344 = vadd.f32 %v1342, %v1032
  %s1345 = scalar_lea.vmem %s16, 16
  %1346 = vst [vmem:[%s1345] sm:$0xff] %v1344
  %v1347 = vsel %vm1036, %v1344, -inf
  %1348 = vmax.xlane.f32.xlu0 %v1347
  %v1349 = vpop.xlane.xlu0 %1348
  %vm1350 = vcmp.eq.f32.partialorder %v1347, %v1349
  %v1351 = vsel %vm1350, %v1035, 128
  %v1352 = vand.u32 %v1351, 65535
  %v1353 = vshra.s32 %v1351, 16
  %v1354 = vcvt.s32.f32 %v1352
  %v1355 = vcvt.s32.f32 %v1353
  %1356 = vmin.xlane.f32.xlu0 %v1355
  %v1357 = vpop.xlane.xlu0 %1356
  %vm1358 = vcmp.eq.f32.partialorder %v1355, %v1357
  %v1359 = vsel %vm1358, %v1354, inf
  %1360 = vmin.xlane.f32.xlu0 %v1359
  %v1361 = vpop.xlane.xlu0 %1360
  %v1362 = vcvt.f32.s32 %v1361
  %v1363 = vcvt.f32.s32 %v1357
  %v1364 = vshll.u32 %v1363, 16
  %v1365 = vadd.s32 %v1364, %v1362
  %vm1366 = vcmp.eq.s32.totalorder %v1035, %v1365
  %v1367 = vsel %vm1366, 1, 0
  %v1368 = vcvt.s32.f32 %v1367
  %v1370 = vsel %vm92, %v1368, 0
  %1372 = vmatpush.msra.mxu0 0.0
  %1373 = vmatpush.msra.mxu0 0.0
  %1374 = vmatpush.msra.mxu0 0.0
  %1375 = vmatpush.msra.mxu0 0.0
  %1376 = vmatpush.msra.mxu0 0.0
  %1377 = vmatpush.msra.mxu0 0.0
  %1378 = vmatpush.msra.mxu0 0.0
  %1379 = vmatpush.msra.mxu0 0.0
  %1380 = vmatpush.msra.mxu0 0.0
  %1381 = vmatpush.msra.mxu0 0.0
  %1382 = vmatpush.msra.mxu0 0.0
  %1383 = vmatpush.msra.mxu0 0.0
  %1384 = vmatpush.msra.mxu0 %v972
  %1385 = vmatpush.msra.mxu0 %v971
  %1386 = vmatpush.msra.mxu0 %v970
  %1387 = vmatpush.msra.mxu0 %v969
  %1388 = vmatmul.f32.gmra.mxu0 %v1370
  %v1389 = vpop.f32.mrf.mxu0
  %v1390 = vadd.f32 0.0, %v1389
  %1391 = vdwg.mxu0
  %v1393 = vsel %vm65, %v1390, 0
  %1395 = vmatpush.msra.mxu0 0.0
  %1396 = vmatpush.msra.mxu0 0.0
  %1397 = vmatpush.msra.mxu0 0.0
  %1398 = vmatpush.msra.mxu0 0.0
  %1399 = vmatpush.msra.mxu0 0.0
  %1400 = vmatpush.msra.mxu0 0.0
  %1401 = vmatpush.msra.mxu0 0.0
  %1402 = vmatpush.msra.mxu0 0.0
  %1403 = vmatpush.msra.mxu0 0.0
  %1404 = vmatpush.msra.mxu0 0.0
  %1405 = vmatpush.msra.mxu0 0.0
  %1406 = vmatpush.msra.mxu0 0.0
  %1407 = vmatpush.msra.mxu0 0.0
  %1408 = vmatpush.msra.mxu0 0.0
  %1409 = vmatpush.msra.mxu0 %v957
  %1410 = vmatpush.msra.mxu0 %v956
  %1411 = vmatmul.f32.gmra.mxu0 %v1393
  %v1412 = vpop.f32.mrf.mxu0
  %v1413 = vadd.f32 %v1004, %v1412
  %1414 = vdwg.mxu0
  %1415 = vmatpush.msra.mxu0 0.0
  %1416 = vmatpush.msra.mxu0 0.0
  %1417 = vmatpush.msra.mxu0 0.0
  %1418 = vmatpush.msra.mxu0 0.0
  %1419 = vmatpush.msra.mxu0 0.0
  %1420 = vmatpush.msra.mxu0 0.0
  %1421 = vmatpush.msra.mxu0 0.0
  %1422 = vmatpush.msra.mxu0 0.0
  %1423 = vmatpush.msra.mxu0 0.0
  %1424 = vmatpush.msra.mxu0 0.0
  %1425 = vmatpush.msra.mxu0 0.0
  %1426 = vmatpush.msra.mxu0 0.0
  %1427 = vmatpush.msra.mxu0 %v961
  %1428 = vmatpush.msra.mxu0 %v960
  %1429 = vmatpush.msra.mxu0 %v959
  %1430 = vmatpush.msra.mxu0 %v958
  %1431 = vmatmul.f32.gmra.mxu0 %v1302
  %v1432 = vpop.f32.mrf.mxu0
  %v1433 = vadd.f32 %v1063, %v1432
  %1434 = vdwg.mxu0
  %v1435 = vadd.f32 %v1413, %v1433
  %v1436 = vxor.u32 %v1435, 2147483648
  %v1437 = vmul.f32 %v1436, 1.442695
  %v1438 = vpow.pop %v1437
  %v1439 = vadd.f32 %v1438, 1.0
  %v1440 = vrcp.pop %v1439
  %v1441 = vmul.f32 %v1439, %v1440
  %v1442 = vsub.f32 1.0, %v1441
  %v1443 = vmul.f32 %v1440, %v1442
  %v1444 = vadd.f32 %v1440, %v1443
  %vm1445 = vweird.f32 %v1439
  %vm1446 = vweird.f32 %v1440
  %vm1447 = vmor %vm1445, %vm1446
  %v1448 = vsel %vm1447, %v1440, %v1444
  %v1449 = vand.u32 2147483647, %v1439
  %vm1450 = vcmp.eq.f32.partialorder %v1449, 8.507059e+37
  %v1451 = vand.u32 %v1439, 2147483648
  %v1452 = vor.u32 1.1754944e-38, %v1451
  %v1453 = vsel %vm1450, %v1452, %v1448
  %v1454 = vmul.f32 1.0, %v1453
  %1456 = vrot.lane.b32.xlu0 %v1433, 64
  %v1457 = vpop.permute.xlu0 %1456
  %v1459 = vmul.f32 %v1454, %v1457
  %1461 = vrot.lane.b32.xlu0 %v1459, 64
  %v1462 = vpop.permute.xlu0 %1461
  %v1464 = vadd.f32 %v1413, %v1462
  %v1465 = vtanh.pop %v1464
  %v1466 = vsub.f32 1.0, %v1454
  %1468 = vrot.lane.b32.xlu0 %v1465, 96
  %v1469 = vpop.permute.xlu0 %1468
  %v1471 = vmul.f32 %v1466, %v1469
  %v1472 = vmul.f32 %v1454, %v1298
  %v1473 = vadd.f32 %v1471, %v1472
  %1475 = vrot.lane.b32.xlu0 %v1473, 96
  %v1476 = vpop.permute.xlu0 %1475
  %v1477 = vsel %vm92, %v1476, 0
  %1479 = vmatpush.msra.mxu0 0.0
  %1480 = vmatpush.msra.mxu0 0.0
  %1481 = vmatpush.msra.mxu0 0.0
  %1482 = vmatpush.msra.mxu0 0.0
  %1483 = vmatpush.msra.mxu0 0.0
  %1484 = vmatpush.msra.mxu0 0.0
  %1485 = vmatpush.msra.mxu0 0.0
  %1486 = vmatpush.msra.mxu0 0.0
  %1487 = vmatpush.msra.mxu0 0.0
  %1488 = vmatpush.msra.mxu0 0.0
  %1489 = vmatpush.msra.mxu0 0.0
  %1490 = vmatpush.msra.mxu0 0.0
  %1491 = vmatpush.msra.mxu0 %v968
  %1492 = vmatpush.msra.mxu0 %v967
  %1493 = vmatpush.msra.mxu0 %v966
  %1494 = vmatpush.msra.mxu0 %v965
  %1495 = vmatmul.f32.gmra.mxu0 %v1477
  %v1496 = vpop.f32.mrf.mxu0
  %v1497 = vadd.f32 0.0, %v1496
  %1498 = vdwg.mxu0
  %1499 = vmatpush.msra.mxu0 0.0
  %1500 = vmatpush.msra.mxu0 0.0
  %1501 = vmatpush.msra.mxu0 0.0
  %1502 = vmatpush.msra.mxu0 0.0
  %1503 = vmatpush.msra.mxu0 0.0
  %1504 = vmatpush.msra.mxu0 0.0
  %1505 = vmatpush.msra.mxu0 0.0
  %1506 = vmatpush.msra.mxu0 0.0
  %1507 = vmatpush.msra.mxu0 0.0
  %1508 = vmatpush.msra.mxu0 0.0
  %1509 = vmatpush.msra.mxu0 0.0
  %1510 = vmatpush.msra.mxu0 0.0
  %1511 = vmatpush.msra.mxu0 0.0
  %1512 = vmatpush.msra.mxu0 0.0
  %1513 = vmatpush.msra.mxu0 %v964
  %1514 = vmatpush.msra.mxu0 %v963
  %1515 = vmatmul.f32.gmra.mxu0 %v1393
  %v1516 = vpop.f32.mrf.mxu0
  %v1517 = vadd.f32 %v1497, %v1516
  %1518 = vdwg.mxu0
  %v1519 = vadd.f32 %v1517, %v1032
  %s1520 = scalar_lea.vmem %s16, 24
  %1521 = vst [vmem:[%s1520] sm:$0xff] %v1519
  %v1522 = vsel %vm1036, %v1519, -inf
  %1523 = vmax.xlane.f32.xlu0 %v1522
  %v1524 = vpop.xlane.xlu0 %1523
  %vm1525 = vcmp.eq.f32.partialorder %v1522, %v1524
  %v1526 = vsel %vm1525, %v1035, 128
  %v1527 = vand.u32 %v1526, 65535
  %v1528 = vshra.s32 %v1526, 16
  %v1529 = vcvt.s32.f32 %v1527
  %v1530 = vcvt.s32.f32 %v1528
  %1531 = vmin.xlane.f32.xlu0 %v1530
  %v1532 = vpop.xlane.xlu0 %1531
  %vm1533 = vcmp.eq.f32.partialorder %v1530, %v1532
  %v1534 = vsel %vm1533, %v1529, inf
  %1535 = vmin.xlane.f32.xlu0 %v1534
  %v1536 = vpop.xlane.xlu0 %1535
  %v1537 = vcvt.f32.s32 %v1536
  %v1538 = vcvt.f32.s32 %v1532
  %v1539 = vshll.u32 %v1538, 16
  %v1540 = vadd.s32 %v1539, %v1537
  %vm1541 = vcmp.eq.s32.totalorder %v1035, %v1540
  %v1542 = vsel %vm1541, 1, 0
  %v1543 = vcvt.s32.f32 %v1542
  %v1545 = vsel %vm92, %v1543, 0
  %1547 = vmatpush.msra.mxu0 0.0
  %1548 = vmatpush.msra.mxu0 0.0
  %1549 = vmatpush.msra.mxu0 0.0
  %1550 = vmatpush.msra.mxu0 0.0
  %1551 = vmatpush.msra.mxu0 0.0
  %1552 = vmatpush.msra.mxu0 0.0
  %1553 = vmatpush.msra.mxu0 0.0
  %1554 = vmatpush.msra.mxu0 0.0
  %1555 = vmatpush.msra.mxu0 0.0
  %1556 = vmatpush.msra.mxu0 0.0
  %1557 = vmatpush.msra.mxu0 0.0
  %1558 = vmatpush.msra.mxu0 0.0
  %1559 = vmatpush.msra.mxu0 %v972
  %1560 = vmatpush.msra.mxu0 %v971
  %1561 = vmatpush.msra.mxu0 %v970
  %1562 = vmatpush.msra.mxu0 %v969
  %1563 = vmatmul.f32.gmra.mxu0 %v1545
  %v1564 = vpop.f32.mrf.mxu0
  %v1565 = vadd.f32 0.0, %v1564
  %1566 = vdwg.mxu0
  %v1568 = vsel %vm65, %v1565, 0
  %1570 = vmatpush.msra.mxu0 0.0
  %1571 = vmatpush.msra.mxu0 0.0
  %1572 = vmatpush.msra.mxu0 0.0
  %1573 = vmatpush.msra.mxu0 0.0
  %1574 = vmatpush.msra.mxu0 0.0
  %1575 = vmatpush.msra.mxu0 0.0
  %1576 = vmatpush.msra.mxu0 0.0
  %1577 = vmatpush.msra.mxu0 0.0
  %1578 = vmatpush.msra.mxu0 0.0
  %1579 = vmatpush.msra.mxu0 0.0
  %1580 = vmatpush.msra.mxu0 0.0
  %1581 = vmatpush.msra.mxu0 0.0
  %1582 = vmatpush.msra.mxu0 0.0
  %1583 = vmatpush.msra.mxu0 0.0
  %1584 = vmatpush.msra.mxu0 %v957
  %1585 = vmatpush.msra.mxu0 %v956
  %1586 = vmatmul.f32.gmra.mxu0 %v1568
  %v1587 = vpop.f32.mrf.mxu0
  %v1588 = vadd.f32 %v1004, %v1587
  %1589 = vdwg.mxu0
  %1590 = vmatpush.msra.mxu0 0.0
  %1591 = vmatpush.msra.mxu0 0.0
  %1592 = vmatpush.msra.mxu0 0.0
  %1593 = vmatpush.msra.mxu0 0.0
  %1594 = vmatpush.msra.mxu0 0.0
  %1595 = vmatpush.msra.mxu0 0.0
  %1596 = vmatpush.msra.mxu0 0.0
  %1597 = vmatpush.msra.mxu0 0.0
  %1598 = vmatpush.msra.mxu0 0.0
  %1599 = vmatpush.msra.mxu0 0.0
  %1600 = vmatpush.msra.mxu0 0.0
  %1601 = vmatpush.msra.mxu0 0.0
  %1602 = vmatpush.msra.mxu0 %v961
  %1603 = vmatpush.msra.mxu0 %v960
  %1604 = vmatpush.msra.mxu0 %v959
  %1605 = vmatpush.msra.mxu0 %v958
  %1606 = vmatmul.f32.gmra.mxu0 %v1477
  %v1607 = vpop.f32.mrf.mxu0
  %v1608 = vadd.f32 %v1063, %v1607
  %1609 = vdwg.mxu0
  %v1610 = vadd.f32 %v1588, %v1608
  %v1611 = vxor.u32 %v1610, 2147483648
  %v1612 = vmul.f32 %v1611, 1.442695
  %v1613 = vpow.pop %v1612
  %v1614 = vadd.f32 %v1613, 1.0
  %v1615 = vrcp.pop %v1614
  %v1616 = vmul.f32 %v1614, %v1615
  %v1617 = vsub.f32 1.0, %v1616
  %v1618 = vmul.f32 %v1615, %v1617
  %v1619 = vadd.f32 %v1615, %v1618
  %vm1620 = vweird.f32 %v1614
  %vm1621 = vweird.f32 %v1615
  %vm1622 = vmor %vm1620, %vm1621
  %v1623 = vsel %vm1622, %v1615, %v1619
  %v1624 = vand.u32 2147483647, %v1614
  %vm1625 = vcmp.eq.f32.partialorder %v1624, 8.507059e+37
  %v1626 = vand.u32 %v1614, 2147483648
  %v1627 = vor.u32 1.1754944e-38, %v1626
  %v1628 = vsel %vm1625, %v1627, %v1623
  %v1629 = vmul.f32 1.0, %v1628
  %1631 = vrot.lane.b32.xlu0 %v1608, 64
  %v1632 = vpop.permute.xlu0 %1631
  %v1634 = vmul.f32 %v1629, %v1632
  %1636 = vrot.lane.b32.xlu0 %v1634, 64
  %v1637 = vpop.permute.xlu0 %1636
  %v1639 = vadd.f32 %v1588, %v1637
  %v1640 = vtanh.pop %v1639
  %v1641 = vsub.f32 1.0, %v1629
  %1643 = vrot.lane.b32.xlu0 %v1640, 96
  %v1644 = vpop.permute.xlu0 %1643
  %v1646 = vmul.f32 %v1641, %v1644
  %v1647 = vmul.f32 %v1629, %v1473
  %v1648 = vadd.f32 %v1646, %v1647
  %1650 = vrot.lane.b32.xlu0 %v1648, 96
  %v1651 = vpop.permute.xlu0 %1650
  %v1652 = vsel %vm92, %v1651, 0
  %1654 = vmatpush.msra.mxu0 0.0
  %1655 = vmatpush.msra.mxu0 0.0
  %1656 = vmatpush.msra.mxu0 0.0
  %1657 = vmatpush.msra.mxu0 0.0
  %1658 = vmatpush.msra.mxu0 0.0
  %1659 = vmatpush.msra.mxu0 0.0
  %1660 = vmatpush.msra.mxu0 0.0
  %1661 = vmatpush.msra.mxu0 0.0
  %1662 = vmatpush.msra.mxu0 0.0
  %1663 = vmatpush.msra.mxu0 0.0
  %1664 = vmatpush.msra.mxu0 0.0
  %1665 = vmatpush.msra.mxu0 0.0
  %1666 = vmatpush.msra.mxu0 %v968
  %1667 = vmatpush.msra.mxu0 %v967
  %1668 = vmatpush.msra.mxu0 %v966
  %1669 = vmatpush.msra.mxu0 %v965
  %1670 = vmatmul.f32.gmra.mxu0 %v1652
  %v1671 = vpop.f32.mrf.mxu0
  %v1672 = vadd.f32 0.0, %v1671
  %1673 = vdwg.mxu0
  %1674 = vmatpush.msra.mxu0 0.0
  %1675 = vmatpush.msra.mxu0 0.0
  %1676 = vmatpush.msra.mxu0 0.0
  %1677 = vmatpush.msra.mxu0 0.0
  %1678 = vmatpush.msra.mxu0 0.0
  %1679 = vmatpush.msra.mxu0 0.0
  %1680 = vmatpush.msra.mxu0 0.0
  %1681 = vmatpush.msra.mxu0 0.0
  %1682 = vmatpush.msra.mxu0 0.0
  %1683 = vmatpush.msra.mxu0 0.0
  %1684 = vmatpush.msra.mxu0 0.0
  %1685 = vmatpush.msra.mxu0 0.0
  %1686 = vmatpush.msra.mxu0 0.0
  %1687 = vmatpush.msra.mxu0 0.0
  %1688 = vmatpush.msra.mxu0 %v964
  %1689 = vmatpush.msra.mxu0 %v963
  %1690 = vmatmul.f32.gmra.mxu0 %v1568
  %v1691 = vpop.f32.mrf.mxu0
  %v1692 = vadd.f32 %v1672, %v1691
  %1693 = vdwg.mxu0
  %v1694 = vadd.f32 %v1692, %v1032
  %s1695 = scalar_lea.vmem %s16, 32
  %1696 = vst [vmem:[%s1695] sm:$0xff] %v1694
  %v1697 = vsel %vm1036, %v1694, -inf
  %1698 = vmax.xlane.f32.xlu0 %v1697
  %v1699 = vpop.xlane.xlu0 %1698
  %vm1700 = vcmp.eq.f32.partialorder %v1697, %v1699
  %v1701 = vsel %vm1700, %v1035, 128
  %v1702 = vand.u32 %v1701, 65535
  %v1703 = vshra.s32 %v1701, 16
  %v1704 = vcvt.s32.f32 %v1702
  %v1705 = vcvt.s32.f32 %v1703
  %1706 = vmin.xlane.f32.xlu0 %v1705
  %v1707 = vpop.xlane.xlu0 %1706
  %vm1708 = vcmp.eq.f32.partialorder %v1705, %v1707
  %v1709 = vsel %vm1708, %v1704, inf
  %1710 = vmin.xlane.f32.xlu0 %v1709
  %v1711 = vpop.xlane.xlu0 %1710
  %v1712 = vcvt.f32.s32 %v1711
  %v1713 = vcvt.f32.s32 %v1707
  %v1714 = vshll.u32 %v1713, 16
  %v1715 = vadd.s32 %v1714, %v1712
  %vm1716 = vcmp.eq.s32.totalorder %v1035, %v1715
  %v1717 = vsel %vm1716, 1, 0
  %v1718 = vcvt.s32.f32 %v1717
  %v1720 = vsel %vm92, %v1718, 0
  %1722 = vmatpush.msra.mxu0 0.0
  %1723 = vmatpush.msra.mxu0 0.0
  %1724 = vmatpush.msra.mxu0 0.0
  %1725 = vmatpush.msra.mxu0 0.0
  %1726 = vmatpush.msra.mxu0 0.0
  %1727 = vmatpush.msra.mxu0 0.0
  %1728 = vmatpush.msra.mxu0 0.0
  %1729 = vmatpush.msra.mxu0 0.0
  %1730 = vmatpush.msra.mxu0 0.0
  %1731 = vmatpush.msra.mxu0 0.0
  %1732 = vmatpush.msra.mxu0 0.0
  %1733 = vmatpush.msra.mxu0 0.0
  %1734 = vmatpush.msra.mxu0 %v972
  %1735 = vmatpush.msra.mxu0 %v971
  %1736 = vmatpush.msra.mxu0 %v970
  %1737 = vmatpush.msra.mxu0 %v969
  %1738 = vmatmul.f32.gmra.mxu0 %v1720
  %v1739 = vpop.f32.mrf.mxu0
  %v1740 = vadd.f32 0.0, %v1739
  %1741 = vdwg.mxu0
  %v1743 = vsel %vm65, %v1740, 0
  %1745 = vmatpush.msra.mxu0 0.0
  %1746 = vmatpush.msra.mxu0 0.0
  %1747 = vmatpush.msra.mxu0 0.0
  %1748 = vmatpush.msra.mxu0 0.0
  %1749 = vmatpush.msra.mxu0 0.0
  %1750 = vmatpush.msra.mxu0 0.0
  %1751 = vmatpush.msra.mxu0 0.0
  %1752 = vmatpush.msra.mxu0 0.0
  %1753 = vmatpush.msra.mxu0 0.0
  %1754 = vmatpush.msra.mxu0 0.0
  %1755 = vmatpush.msra.mxu0 0.0
  %1756 = vmatpush.msra.mxu0 0.0
  %1757 = vmatpush.msra.mxu0 0.0
  %1758 = vmatpush.msra.mxu0 0.0
  %1759 = vmatpush.msra.mxu0 %v957
  %1760 = vmatpush.msra.mxu0 %v956
  %1761 = vmatmul.f32.gmra.mxu0 %v1743
  %v1762 = vpop.f32.mrf.mxu0
  %v1763 = vadd.f32 %v1004, %v1762
  %1764 = vdwg.mxu0
  %1765 = vmatpush.msra.mxu0 0.0
  %1766 = vmatpush.msra.mxu0 0.0
  %1767 = vmatpush.msra.mxu0 0.0
  %1768 = vmatpush.msra.mxu0 0.0
  %1769 = vmatpush.msra.mxu0 0.0
  %1770 = vmatpush.msra.mxu0 0.0
  %1771 = vmatpush.msra.mxu0 0.0
  %1772 = vmatpush.msra.mxu0 0.0
  %1773 = vmatpush.msra.mxu0 0.0
  %1774 = vmatpush.msra.mxu0 0.0
  %1775 = vmatpush.msra.mxu0 0.0
  %1776 = vmatpush.msra.mxu0 0.0
  %1777 = vmatpush.msra.mxu0 %v961
  %1778 = vmatpush.msra.mxu0 %v960
  %1779 = vmatpush.msra.mxu0 %v959
  %1780 = vmatpush.msra.mxu0 %v958
  %1781 = vmatmul.f32.gmra.mxu0 %v1652
  %v1782 = vpop.f32.mrf.mxu0
  %v1783 = vadd.f32 %v1063, %v1782
  %1784 = vdwg.mxu0
  %v1785 = vadd.f32 %v1763, %v1783
  %v1786 = vxor.u32 %v1785, 2147483648
  %v1787 = vmul.f32 %v1786, 1.442695
  %v1788 = vpow.pop %v1787
  %v1789 = vadd.f32 %v1788, 1.0
  %v1790 = vrcp.pop %v1789
  %v1791 = vmul.f32 %v1789, %v1790
  %v1792 = vsub.f32 1.0, %v1791
  %v1793 = vmul.f32 %v1790, %v1792
  %v1794 = vadd.f32 %v1790, %v1793
  %vm1795 = vweird.f32 %v1789
  %vm1796 = vweird.f32 %v1790
  %vm1797 = vmor %vm1795, %vm1796
  %v1798 = vsel %vm1797, %v1790, %v1794
  %v1799 = vand.u32 2147483647, %v1789
  %vm1800 = vcmp.eq.f32.partialorder %v1799, 8.507059e+37
  %v1801 = vand.u32 %v1789, 2147483648
  %v1802 = vor.u32 1.1754944e-38, %v1801
  %v1803 = vsel %vm1800, %v1802, %v1798
  %v1804 = vmul.f32 1.0, %v1803
  %1806 = vrot.lane.b32.xlu0 %v1783, 64
  %v1807 = vpop.permute.xlu0 %1806
  %v1809 = vmul.f32 %v1804, %v1807
  %1811 = vrot.lane.b32.xlu0 %v1809, 64
  %v1812 = vpop.permute.xlu0 %1811
  %v1814 = vadd.f32 %v1763, %v1812
  %v1815 = vtanh.pop %v1814
  %v1816 = vsub.f32 1.0, %v1804
  %1818 = vrot.lane.b32.xlu0 %v1815, 96
  %v1819 = vpop.permute.xlu0 %1818
  %v1821 = vmul.f32 %v1816, %v1819
  %v1822 = vmul.f32 %v1804, %v1648
  %v1823 = vadd.f32 %v1821, %v1822
  %1825 = vrot.lane.b32.xlu0 %v1823, 96
  %v1826 = vpop.permute.xlu0 %1825
  %v1827 = vsel %vm92, %v1826, 0
  %1829 = vmatpush.msra.mxu0 0.0
  %1830 = vmatpush.msra.mxu0 0.0
  %1831 = vmatpush.msra.mxu0 0.0
  %1832 = vmatpush.msra.mxu0 0.0
  %1833 = vmatpush.msra.mxu0 0.0
  %1834 = vmatpush.msra.mxu0 0.0
  %1835 = vmatpush.msra.mxu0 0.0
  %1836 = vmatpush.msra.mxu0 0.0
  %1837 = vmatpush.msra.mxu0 0.0
  %1838 = vmatpush.msra.mxu0 0.0
  %1839 = vmatpush.msra.mxu0 0.0
  %1840 = vmatpush.msra.mxu0 0.0
  %1841 = vmatpush.msra.mxu0 %v968
  %1842 = vmatpush.msra.mxu0 %v967
  %1843 = vmatpush.msra.mxu0 %v966
  %1844 = vmatpush.msra.mxu0 %v965
  %1845 = vmatmul.f32.gmra.mxu0 %v1827
  %v1846 = vpop.f32.mrf.mxu0
  %v1847 = vadd.f32 0.0, %v1846
  %1848 = vdwg.mxu0
  %1849 = vmatpush.msra.mxu0 0.0
  %1850 = vmatpush.msra.mxu0 0.0
  %1851 = vmatpush.msra.mxu0 0.0
  %1852 = vmatpush.msra.mxu0 0.0
  %1853 = vmatpush.msra.mxu0 0.0
  %1854 = vmatpush.msra.mxu0 0.0
  %1855 = vmatpush.msra.mxu0 0.0
  %1856 = vmatpush.msra.mxu0 0.0
  %1857 = vmatpush.msra.mxu0 0.0
  %1858 = vmatpush.msra.mxu0 0.0
  %1859 = vmatpush.msra.mxu0 0.0
  %1860 = vmatpush.msra.mxu0 0.0
  %1861 = vmatpush.msra.mxu0 0.0
  %1862 = vmatpush.msra.mxu0 0.0
  %1863 = vmatpush.msra.mxu0 %v964
  %1864 = vmatpush.msra.mxu0 %v963
  %1865 = vmatmul.f32.gmra.mxu0 %v1743
  %v1866 = vpop.f32.mrf.mxu0
  %v1867 = vadd.f32 %v1847, %v1866
  %1868 = vdwg.mxu0
  %v1869 = vadd.f32 %v1867, %v1032
  %s1870 = scalar_lea.vmem %s16, 40
  %1871 = vst [vmem:[%s1870] sm:$0xff] %v1869
  %v1872 = vsel %vm1036, %v1869, -inf
  %1873 = vmax.xlane.f32.xlu0 %v1872
  %v1874 = vpop.xlane.xlu0 %1873
  %vm1875 = vcmp.eq.f32.partialorder %v1872, %v1874
  %v1876 = vsel %vm1875, %v1035, 128
  %v1877 = vand.u32 %v1876, 65535
  %v1878 = vshra.s32 %v1876, 16
  %v1879 = vcvt.s32.f32 %v1877
  %v1880 = vcvt.s32.f32 %v1878
  %1881 = vmin.xlane.f32.xlu0 %v1880
  %v1882 = vpop.xlane.xlu0 %1881
  %vm1883 = vcmp.eq.f32.partialorder %v1880, %v1882
  %v1884 = vsel %vm1883, %v1879, inf
  %1885 = vmin.xlane.f32.xlu0 %v1884
  %v1886 = vpop.xlane.xlu0 %1885
  %v1887 = vcvt.f32.s32 %v1886
  %v1888 = vcvt.f32.s32 %v1882
  %v1889 = vshll.u32 %v1888, 16
  %v1890 = vadd.s32 %v1889, %v1887
  %vm1891 = vcmp.eq.s32.totalorder %v1035, %v1890
  %v1892 = vsel %vm1891, 1, 0
  %v1893 = vcvt.s32.f32 %v1892
  %v1895 = vsel %vm92, %v1893, 0
  %1897 = vmatpush.msra.mxu0 0.0
  %1898 = vmatpush.msra.mxu0 0.0
  %1899 = vmatpush.msra.mxu0 0.0
  %1900 = vmatpush.msra.mxu0 0.0
  %1901 = vmatpush.msra.mxu0 0.0
  %1902 = vmatpush.msra.mxu0 0.0
  %1903 = vmatpush.msra.mxu0 0.0
  %1904 = vmatpush.msra.mxu0 0.0
  %1905 = vmatpush.msra.mxu0 0.0
  %1906 = vmatpush.msra.mxu0 0.0
  %1907 = vmatpush.msra.mxu0 0.0
  %1908 = vmatpush.msra.mxu0 0.0
  %1909 = vmatpush.msra.mxu0 %v972
  %1910 = vmatpush.msra.mxu0 %v971
  %1911 = vmatpush.msra.mxu0 %v970
  %1912 = vmatpush.msra.mxu0 %v969
  %1913 = vmatmul.f32.gmra.mxu0 %v1895
  %v1914 = vpop.f32.mrf.mxu0
  %v1915 = vadd.f32 0.0, %v1914
  %1916 = vdwg.mxu0
  %v1918 = vsel %vm65, %v1915, 0
  %1920 = vmatpush.msra.mxu0 0.0
  %1921 = vmatpush.msra.mxu0 0.0
  %1922 = vmatpush.msra.mxu0 0.0
  %1923 = vmatpush.msra.mxu0 0.0
  %1924 = vmatpush.msra.mxu0 0.0
  %1925 = vmatpush.msra.mxu0 0.0
  %1926 = vmatpush.msra.mxu0 0.0
  %1927 = vmatpush.msra.mxu0 0.0
  %1928 = vmatpush.msra.mxu0 0.0
  %1929 = vmatpush.msra.mxu0 0.0
  %1930 = vmatpush.msra.mxu0 0.0
  %1931 = vmatpush.msra.mxu0 0.0
  %1932 = vmatpush.msra.mxu0 0.0
  %1933 = vmatpush.msra.mxu0 0.0
  %1934 = vmatpush.msra.mxu0 %v957
  %1935 = vmatpush.msra.mxu0 %v956
  %1936 = vmatmul.f32.gmra.mxu0 %v1918
  %v1937 = vpop.f32.mrf.mxu0
  %v1938 = vadd.f32 %v1004, %v1937
  %1939 = vdwg.mxu0
  %1940 = vmatpush.msra.mxu0 0.0
  %1941 = vmatpush.msra.mxu0 0.0
  %1942 = vmatpush.msra.mxu0 0.0
  %1943 = vmatpush.msra.mxu0 0.0
  %1944 = vmatpush.msra.mxu0 0.0
  %1945 = vmatpush.msra.mxu0 0.0
  %1946 = vmatpush.msra.mxu0 0.0
  %1947 = vmatpush.msra.mxu0 0.0
  %1948 = vmatpush.msra.mxu0 0.0
  %1949 = vmatpush.msra.mxu0 0.0
  %1950 = vmatpush.msra.mxu0 0.0
  %1951 = vmatpush.msra.mxu0 0.0
  %1952 = vmatpush.msra.mxu0 %v961
  %1953 = vmatpush.msra.mxu0 %v960
  %1954 = vmatpush.msra.mxu0 %v959
  %1955 = vmatpush.msra.mxu0 %v958
  %1956 = vmatmul.f32.gmra.mxu0 %v1827
  %v1957 = vpop.f32.mrf.mxu0
  %v1958 = vadd.f32 %v1063, %v1957
  %1959 = vdwg.mxu0
  %v1960 = vadd.f32 %v1938, %v1958
  %v1961 = vxor.u32 %v1960, 2147483648
  %v1962 = vmul.f32 %v1961, 1.442695
  %v1963 = vpow.pop %v1962
  %v1964 = vadd.f32 %v1963, 1.0
  %v1965 = vrcp.pop %v1964
  %v1966 = vmul.f32 %v1964, %v1965
  %v1967 = vsub.f32 1.0, %v1966
  %v1968 = vmul.f32 %v1965, %v1967
  %v1969 = vadd.f32 %v1965, %v1968
  %vm1970 = vweird.f32 %v1964
  %vm1971 = vweird.f32 %v1965
  %vm1972 = vmor %vm1970, %vm1971
  %v1973 = vsel %vm1972, %v1965, %v1969
  %v1974 = vand.u32 2147483647, %v1964
  %vm1975 = vcmp.eq.f32.partialorder %v1974, 8.507059e+37
  %v1976 = vand.u32 %v1964, 2147483648
  %v1977 = vor.u32 1.1754944e-38, %v1976
  %v1978 = vsel %vm1975, %v1977, %v1973
  %v1979 = vmul.f32 1.0, %v1978
  %1981 = vrot.lane.b32.xlu0 %v1958, 64
  %v1982 = vpop.permute.xlu0 %1981
  %v1984 = vmul.f32 %v1979, %v1982
  %1986 = vrot.lane.b32.xlu0 %v1984, 64
  %v1987 = vpop.permute.xlu0 %1986
  %v1989 = vadd.f32 %v1938, %v1987
  %v1990 = vtanh.pop %v1989
  %v1991 = vsub.f32 1.0, %v1979
  %1993 = vrot.lane.b32.xlu0 %v1990, 96
  %v1994 = vpop.permute.xlu0 %1993
  %v1996 = vmul.f32 %v1991, %v1994
  %v1997 = vmul.f32 %v1979, %v1823
  %v1998 = vadd.f32 %v1996, %v1997
  %2000 = vrot.lane.b32.xlu0 %v1998, 96
  %v2001 = vpop.permute.xlu0 %2000
  %v2002 = vsel %vm92, %v2001, 0
  %2004 = vmatpush.msra.mxu0 0.0
  %2005 = vmatpush.msra.mxu0 0.0
  %2006 = vmatpush.msra.mxu0 0.0
  %2007 = vmatpush.msra.mxu0 0.0
  %2008 = vmatpush.msra.mxu0 0.0
  %2009 = vmatpush.msra.mxu0 0.0
  %2010 = vmatpush.msra.mxu0 0.0
  %2011 = vmatpush.msra.mxu0 0.0
  %2012 = vmatpush.msra.mxu0 0.0
  %2013 = vmatpush.msra.mxu0 0.0
  %2014 = vmatpush.msra.mxu0 0.0
  %2015 = vmatpush.msra.mxu0 0.0
  %2016 = vmatpush.msra.mxu0 %v968
  %2017 = vmatpush.msra.mxu0 %v967
  %2018 = vmatpush.msra.mxu0 %v966
  %2019 = vmatpush.msra.mxu0 %v965
  %2020 = vmatmul.f32.gmra.mxu0 %v2002
  %v2021 = vpop.f32.mrf.mxu0
  %v2022 = vadd.f32 0.0, %v2021
  %2023 = vdwg.mxu0
  %2024 = vmatpush.msra.mxu0 0.0
  %2025 = vmatpush.msra.mxu0 0.0
  %2026 = vmatpush.msra.mxu0 0.0
  %2027 = vmatpush.msra.mxu0 0.0
  %2028 = vmatpush.msra.mxu0 0.0
  %2029 = vmatpush.msra.mxu0 0.0
  %2030 = vmatpush.msra.mxu0 0.0
  %2031 = vmatpush.msra.mxu0 0.0
  %2032 = vmatpush.msra.mxu0 0.0
  %2033 = vmatpush.msra.mxu0 0.0
  %2034 = vmatpush.msra.mxu0 0.0
  %2035 = vmatpush.msra.mxu0 0.0
  %2036 = vmatpush.msra.mxu0 0.0
  %2037 = vmatpush.msra.mxu0 0.0
  %2038 = vmatpush.msra.mxu0 %v964
  %2039 = vmatpush.msra.mxu0 %v963
  %2040 = vmatmul.f32.gmra.mxu0 %v1918
  %v2041 = vpop.f32.mrf.mxu0
  %v2042 = vadd.f32 %v2022, %v2041
  %2043 = vdwg.mxu0
  %v2044 = vadd.f32 %v2042, %v1032
  %s2045 = scalar_lea.vmem %s16, 48
  %2046 = vst [vmem:[%s2045] sm:$0xff] %v2044
  %v2047 = vsel %vm1036, %v2044, -inf
  %2048 = vmax.xlane.f32.xlu0 %v2047
  %v2049 = vpop.xlane.xlu0 %2048
  %vm2050 = vcmp.eq.f32.partialorder %v2047, %v2049
  %v2051 = vsel %vm2050, %v1035, 128
  %v2052 = vand.u32 %v2051, 65535
  %v2053 = vshra.s32 %v2051, 16
  %v2054 = vcvt.s32.f32 %v2052
  %v2055 = vcvt.s32.f32 %v2053
  %2056 = vmin.xlane.f32.xlu0 %v2055
  %v2057 = vpop.xlane.xlu0 %2056
  %vm2058 = vcmp.eq.f32.partialorder %v2055, %v2057
  %v2059 = vsel %vm2058, %v2054, inf
  %2060 = vmin.xlane.f32.xlu0 %v2059
  %v2061 = vpop.xlane.xlu0 %2060
  %v2062 = vcvt.f32.s32 %v2061
  %v2063 = vcvt.f32.s32 %v2057
  %v2064 = vshll.u32 %v2063, 16
  %v2065 = vadd.s32 %v2064, %v2062
  %vm2066 = vcmp.eq.s32.totalorder %v1035, %v2065
  %v2067 = vsel %vm2066, 1, 0
  %v2068 = vcvt.s32.f32 %v2067
  %v2070 = vsel %vm92, %v2068, 0
  %2072 = vmatpush.msra.mxu0 0.0
  %2073 = vmatpush.msra.mxu0 0.0
  %2074 = vmatpush.msra.mxu0 0.0
  %2075 = vmatpush.msra.mxu0 0.0
  %2076 = vmatpush.msra.mxu0 0.0
  %2077 = vmatpush.msra.mxu0 0.0
  %2078 = vmatpush.msra.mxu0 0.0
  %2079 = vmatpush.msra.mxu0 0.0
  %2080 = vmatpush.msra.mxu0 0.0
  %2081 = vmatpush.msra.mxu0 0.0
  %2082 = vmatpush.msra.mxu0 0.0
  %2083 = vmatpush.msra.mxu0 0.0
  %2084 = vmatpush.msra.mxu0 %v972
  %2085 = vmatpush.msra.mxu0 %v971
  %2086 = vmatpush.msra.mxu0 %v970
  %2087 = vmatpush.msra.mxu0 %v969
  %2088 = vmatmul.f32.gmra.mxu0 %v2070
  %v2089 = vpop.f32.mrf.mxu0
  %v2090 = vadd.f32 0.0, %v2089
  %2091 = vdwg.mxu0
  %v2093 = vsel %vm65, %v2090, 0
  %2095 = vmatpush.msra.mxu0 0.0
  %2096 = vmatpush.msra.mxu0 0.0
  %2097 = vmatpush.msra.mxu0 0.0
  %2098 = vmatpush.msra.mxu0 0.0
  %2099 = vmatpush.msra.mxu0 0.0
  %2100 = vmatpush.msra.mxu0 0.0
  %2101 = vmatpush.msra.mxu0 0.0
  %2102 = vmatpush.msra.mxu0 0.0
  %2103 = vmatpush.msra.mxu0 0.0
  %2104 = vmatpush.msra.mxu0 0.0
  %2105 = vmatpush.msra.mxu0 0.0
  %2106 = vmatpush.msra.mxu0 0.0
  %2107 = vmatpush.msra.mxu0 0.0
  %2108 = vmatpush.msra.mxu0 0.0
  %2109 = vmatpush.msra.mxu0 %v957
  %2110 = vmatpush.msra.mxu0 %v956
  %2111 = vmatmul.f32.gmra.mxu0 %v2093
  %v2112 = vpop.f32.mrf.mxu0
  %v2113 = vadd.f32 %v1004, %v2112
  %2114 = vdwg.mxu0
  %2115 = vmatpush.msra.mxu0 0.0
  %2116 = vmatpush.msra.mxu0 0.0
  %2117 = vmatpush.msra.mxu0 0.0
  %2118 = vmatpush.msra.mxu0 0.0
  %2119 = vmatpush.msra.mxu0 0.0
  %2120 = vmatpush.msra.mxu0 0.0
  %2121 = vmatpush.msra.mxu0 0.0
  %2122 = vmatpush.msra.mxu0 0.0
  %2123 = vmatpush.msra.mxu0 0.0
  %2124 = vmatpush.msra.mxu0 0.0
  %2125 = vmatpush.msra.mxu0 0.0
  %2126 = vmatpush.msra.mxu0 0.0
  %2127 = vmatpush.msra.mxu0 %v961
  %2128 = vmatpush.msra.mxu0 %v960
  %2129 = vmatpush.msra.mxu0 %v959
  %2130 = vmatpush.msra.mxu0 %v958
  %2131 = vmatmul.f32.gmra.mxu0 %v2002
  %v2132 = vpop.f32.mrf.mxu0
  %v2133 = vadd.f32 %v1063, %v2132
  %2134 = vdwg.mxu0
  %v2135 = vadd.f32 %v2113, %v2133
  %v2136 = vxor.u32 %v2135, 2147483648
  %v2137 = vmul.f32 %v2136, 1.442695
  %v2138 = vpow.pop %v2137
  %v2139 = vadd.f32 %v2138, 1.0
  %v2140 = vrcp.pop %v2139
  %v2141 = vmul.f32 %v2139, %v2140
  %v2142 = vsub.f32 1.0, %v2141
  %v2143 = vmul.f32 %v2140, %v2142
  %v2144 = vadd.f32 %v2140, %v2143
  %vm2145 = vweird.f32 %v2139
  %vm2146 = vweird.f32 %v2140
  %vm2147 = vmor %vm2145, %vm2146
  %v2148 = vsel %vm2147, %v2140, %v2144
  %v2149 = vand.u32 2147483647, %v2139
  %vm2150 = vcmp.eq.f32.partialorder %v2149, 8.507059e+37
  %v2151 = vand.u32 %v2139, 2147483648
  %v2152 = vor.u32 1.1754944e-38, %v2151
  %v2153 = vsel %vm2150, %v2152, %v2148
  %v2154 = vmul.f32 1.0, %v2153
  %2156 = vrot.lane.b32.xlu0 %v2133, 64
  %v2157 = vpop.permute.xlu0 %2156
  %v2159 = vmul.f32 %v2154, %v2157
  %2161 = vrot.lane.b32.xlu0 %v2159, 64
  %v2162 = vpop.permute.xlu0 %2161
  %v2164 = vadd.f32 %v2113, %v2162
  %v2165 = vtanh.pop %v2164
  %v2166 = vsub.f32 1.0, %v2154
  %2168 = vrot.lane.b32.xlu0 %v2165, 96
  %v2169 = vpop.permute.xlu0 %2168
  %v2171 = vmul.f32 %v2166, %v2169
  %v2172 = vmul.f32 %v2154, %v1998
  %v2173 = vadd.f32 %v2171, %v2172
  %2175 = vrot.lane.b32.xlu0 %v2173, 96
  %v2176 = vpop.permute.xlu0 %2175
  %v2177 = vsel %vm92, %v2176, 0
  %2179 = vmatpush.msra.mxu0 0.0
  %2180 = vmatpush.msra.mxu0 0.0
  %2181 = vmatpush.msra.mxu0 0.0
  %2182 = vmatpush.msra.mxu0 0.0
  %2183 = vmatpush.msra.mxu0 0.0
  %2184 = vmatpush.msra.mxu0 0.0
  %2185 = vmatpush.msra.mxu0 0.0
  %2186 = vmatpush.msra.mxu0 0.0
  %2187 = vmatpush.msra.mxu0 0.0
  %2188 = vmatpush.msra.mxu0 0.0
  %2189 = vmatpush.msra.mxu0 0.0
  %2190 = vmatpush.msra.mxu0 0.0
  %2191 = vmatpush.msra.mxu0 %v968
  %2192 = vmatpush.msra.mxu0 %v967
  %2193 = vmatpush.msra.mxu0 %v966
  %2194 = vmatpush.msra.mxu0 %v965
  %2195 = vmatmul.f32.gmra.mxu0 %v2177
  %v2196 = vpop.f32.mrf.mxu0
  %v2197 = vadd.f32 0.0, %v2196
  %2198 = vdwg.mxu0
  %2199 = vmatpush.msra.mxu0 0.0
  %2200 = vmatpush.msra.mxu0 0.0
  %2201 = vmatpush.msra.mxu0 0.0
  %2202 = vmatpush.msra.mxu0 0.0
  %2203 = vmatpush.msra.mxu0 0.0
  %2204 = vmatpush.msra.mxu0 0.0
  %2205 = vmatpush.msra.mxu0 0.0
  %2206 = vmatpush.msra.mxu0 0.0
  %2207 = vmatpush.msra.mxu0 0.0
  %2208 = vmatpush.msra.mxu0 0.0
  %2209 = vmatpush.msra.mxu0 0.0
  %2210 = vmatpush.msra.mxu0 0.0
  %2211 = vmatpush.msra.mxu0 0.0
  %2212 = vmatpush.msra.mxu0 0.0
  %2213 = vmatpush.msra.mxu0 %v964
  %2214 = vmatpush.msra.mxu0 %v963
  %2215 = vmatmul.f32.gmra.mxu0 %v2093
  %v2216 = vpop.f32.mrf.mxu0
  %v2217 = vadd.f32 %v2197, %v2216
  %2218 = vdwg.mxu0
  %v2219 = vadd.f32 %v2217, %v1032
  %s2220 = scalar_lea.vmem %s16, 56
  %2221 = vst [vmem:[%s2220] sm:$0xff] %v2219
  // Predicated region
  $region66: #{naive_model_forward.1} parent=0 // pred_check
    _
  $region67: #{naive_model_forward.1} parent=0 // pred_check_branch
    %2223 = sbr.rel (0) target = $region69
  $region68: #{naive_model_forward.1} parent=0 // pred_region
    _
  $region69: #{naive_model_forward.1} parent=0 // pred_fallthru
    _
  // Predicated region
  $region70: #{naive_model_forward.1} parent=0 // pred_check
    _
  $region71: #{naive_model_forward.1} parent=0 // pred_check_branch
    %2225 = sbr.rel (0) target = $region73
  $region72: #{naive_model_forward.1} parent=0 // pred_region
    _
  $region73: #{naive_model_forward.1} parent=0 // pred_fallthru
    _

</llo_original>
